<compile_context>
chip_gen: v5e
topology: v5e:2x2
jax: 0.10.0
libtpu: 0.0.40
codegen_flags: <defaults>
</compile_context>

<pallas_src>
import functools

import jax
import jax.numpy as jnp
from jax.experimental import pallas as pl
from jax.experimental.pallas import tpu as pltpu


# -----------------------------------------------------------------------------
# Model configuration (small synthetic stand-in for the real CLIP-ViT config,
# chosen so every matmul's lane (last) dim is a multiple of 128).
# -----------------------------------------------------------------------------
IMAGE_SIZE = 32
PATCH_SIZE = 8
WIDTH = 128          # ViT width        (stand-in for 1024)
LAYERS = 2
HEADS = 4
MLP_RATIO = 4
OUTPUT_DIM = 128     # ViT output_dim   (stand-in for 1024 feeding nn.Linear(1024, 64))
EMB_DIM = 64         # self.proj = nn.Linear(1024, 64)
NUM_CLASSES = 128    # ArcMarginProduct out_features
GRID_P = IMAGE_SIZE // PATCH_SIZE
NUM_PATCHES = GRID_P * GRID_P
SEQ = NUM_PATCHES + 1
SEQ_PAD = ((SEQ + 7) // 8) * 8          # pad sequence to a multiple of 8 sublanes
HEAD_DIM = WIDTH // HEADS
MLP_DIM = MLP_RATIO * WIDTH

ACT_DTYPE = jnp.bfloat16                # inter-kernel activation storage dtype
# Safe on v7x (64 MiB physical); on v5e/v6e (128 MiB) this could be raised to 64-96 MiB
# for larger resident blocks at real CLIP-L shapes.
VMEM_LIMIT = 32 * 1024 * 1024


# -----------------------------------------------------------------------------
# Pallas kernels
# -----------------------------------------------------------------------------
def _make_fused_linear_kernel(*, ln, act, residual, has_bias):
    """out = [LN](x) @ w [+ b] [QuickGELU] [+ residual]  — one MXU pass per row tile."""

    def kernel(*refs):
        idx = 0
        x_ref = refs[idx]; idx += 1
        if ln:
            g_ref = refs[idx]; bln_ref = refs[idx + 1]; idx += 2
        w_ref = refs[idx]; idx += 1
        if has_bias:
            b_ref = refs[idx]; idx += 1
        if residual:
            r_ref = refs[idx]; idx += 1
        o_ref = refs[idx]

        x = x_ref[...].astype(jnp.float32)
        if ln:
            mu = jnp.mean(x, axis=-1, keepdims=True)
            var = jnp.mean((x - mu) * (x - mu), axis=-1, keepdims=True)
            x = (x - mu) * jax.lax.rsqrt(var + 1e-5) * g_ref[...] + bln_ref[...]
        acc = jnp.dot(x.astype(jnp.bfloat16), w_ref[...].astype(jnp.bfloat16),
                      preferred_element_type=jnp.float32)
        if has_bias:
            acc = acc + b_ref[...]
        if act == "quickgelu":            # CLIP QuickGELU: x * sigmoid(1.702 x)  (EUP)
            acc = acc * jax.nn.sigmoid(1.702 * acc)
        if residual:
            acc = acc + r_ref[...].astype(jnp.float32)
        o_ref[...] = acc.astype(o_ref.dtype)

    return kernel


def posln_kernel(x_ref, pos_ref, g_ref, b_ref, o_ref):
    """One batch per grid step: x (cls+patch tokens, padded) + pos_emb -> ln_pre."""
    x = x_ref[0].astype(jnp.float32) + pos_ref[...]
    mu = jnp.mean(x, axis=-1, keepdims=True)
    var = jnp.mean((x - mu) * (x - mu), axis=-1, keepdims=True)
    o_ref[0] = ((x - mu) * jax.lax.rsqrt(var + 1e-5) * g_ref[...]
                + b_ref[...]).astype(o_ref.dtype)


def attention_kernel(qkv_ref, o_ref, *, s_valid):
    """One batch per grid step; all heads processed here.

    qkv block: [1, Sp, 3W] bf16  (q | k | v, per-head contiguous Dh chunks inside each W).
    Output block: lane-dense [1, Sp, W].  Softmax scale is pre-folded into the Q weights.
    """
    qkv = qkv_ref[0]                                           # [Sp, 3W] bf16
    sp = qkv.shape[0]
    kidx = jax.lax.broadcasted_iota(jnp.int32, (sp, sp), 1)
    key_mask = kidx < s_valid                                  # mask padded keys
    outs = []
    for h in range(HEADS):                                     # static unrolled loop
        q = qkv[:, h * HEAD_DIM:(h + 1) * HEAD_DIM]
        k = qkv[:, WIDTH + h * HEAD_DIM: WIDTH + (h + 1) * HEAD_DIM]
        v = qkv[:, 2 * WIDTH + h * HEAD_DIM: 2 * WIDTH + (h + 1) * HEAD_DIM]
        s = jax.lax.dot_general(q, k, (((1,), (1,)), ((), ())),
                                preferred_element_type=jnp.float32)   # [Sp, Sp] = q @ k.T
        s = jnp.where(key_mask, s, -1e30)
        m = jnp.max(s, axis=-1, keepdims=True)
        p = jnp.exp(s - m)
        p = p * pl.reciprocal(jnp.sum(p, axis=-1, keepdims=True), approx=True)
        outs.append(jnp.dot(p.astype(jnp.bfloat16), v,
                            preferred_element_type=jnp.float32))      # [Sp, Dh]
    o_ref[0] = jnp.concatenate(outs, axis=-1).astype(o_ref.dtype)     # dense [Sp, W] store


def attnout_mlp_kernel(a_ref, wo_ref, bo_ref, r_ref, g_ref, bln_ref, wf_ref, bf_ref,
                       x_out_ref, h_out_ref):
    """Fused: x_new = attn @ Wout + bout + residual ; h = QuickGELU(LN2(x_new) @ Wfc + bfc).

    Two outputs (new residual stream x_new, MLP hidden h) from a single launch.
    """
    xn = (jnp.dot(a_ref[...].astype(jnp.bfloat16), wo_ref[...],
                  preferred_element_type=jnp.float32)
          + bo_ref[...] + r_ref[...].astype(jnp.float32))
    x_out_ref[...] = xn.astype(x_out_ref.dtype)

    mu = jnp.mean(xn, axis=-1, keepdims=True)
    var = jnp.mean((xn - mu) * (xn - mu), axis=-1, keepdims=True)
    ln = (xn - mu) * jax.lax.rsqrt(var + 1e-5) * g_ref[...] + bln_ref[...]
    h = jnp.dot(ln.astype(jnp.bfloat16), wf_ref[...],
                preferred_element_type=jnp.float32) + bf_ref[...]
    h = h * jax.nn.sigmoid(1.702 * h)                          # QuickGELU
    h_out_ref[...] = h.astype(h_out_ref.dtype)


def head_kernel(x_ref, g_ref, b_ref, vproj_ref, hw_ref, hb_ref, awn_ref, o_ref):
    # ln_post(cls) @ vit_proj -> [Dropout = identity] -> Linear -> ArcFace cosine logits
    x = x_ref[...].astype(jnp.float32)
    mu = jnp.mean(x, axis=-1, keepdims=True)
    var = jnp.mean((x - mu) * (x - mu), axis=-1, keepdims=True)
    x = (x - mu) * jax.lax.rsqrt(var + 1e-5) * g_ref[...] + b_ref[...]
    feat = jnp.dot(x, vproj_ref[...], preferred_element_type=jnp.float32)
    # self.drop = nn.Dropout(0.2): identity at inference time.
    emb = jnp.dot(feat, hw_ref[...], preferred_element_type=jnp.float32) + hb_ref[...]
    emb = emb * jax.lax.rsqrt(jnp.maximum(jnp.sum(emb * emb, axis=-1, keepdims=True), 1e-24))
    # awn_ref: ArcFace weight, columns pre-L2-normalized at init.
    o_ref[...] = jnp.dot(emb, awn_ref[...], preferred_element_type=jnp.float32).astype(o_ref.dtype)


# -----------------------------------------------------------------------------
# pallas_call wrappers
# -----------------------------------------------------------------------------
def _row_tile(m):
    """Largest row tile <=256 dividing m, forced to give >=2 grid steps (2 TCs on v7x)."""
    if m % 8 != 0:
        return m
    tm = min(m, 256)
    while m % tm != 0:
        tm -= 8
    if m // tm < 2 and m >= 16:
        tm = max(8, m // 2)
        while m % tm != 0:
            tm -= 8
    return tm


def fused_linear(x, w, b=None, *, ln_params=None, act=None, residual=None,
                 out_dtype=ACT_DTYPE):
    """y = [LN](x) @ w [+ b] [QuickGELU] [+ residual].  x:[M,K], w:[K,N] (bf16)."""
    M, K = x.shape
    N = w.shape[1]
    tm = _row_tile(M)
    grid = (M // tm,)

    in_specs = [pl.BlockSpec((tm, K), lambda i: (i, 0))]
    args = [x]
    if ln_params is not None:
        g, be = ln_params
        in_specs += [pl.BlockSpec((1, K), lambda i: (0, 0)),
                     pl.BlockSpec((1, K), lambda i: (0, 0))]
        args += [g.reshape(1, K), be.reshape(1, K)]
    in_specs.append(pl.BlockSpec((K, N), lambda i: (0, 0)))
    args.append(w)
    if b is not None:
        in_specs.append(pl.BlockSpec((1, N), lambda i: (0, 0)))
        args.append(b.reshape(1, N))
    if residual is not None:
        in_specs.append(pl.BlockSpec((tm, N), lambda i: (i, 0)))
        args.append(residual)

    kern = _make_fused_linear_kernel(ln=ln_params is not None, act=act,
                                     residual=residual is not None,
                                     has_bias=b is not None)
    return pl.pallas_call(
        kern,
        out_shape=jax.ShapeDtypeStruct((M, N), out_dtype),
        grid=grid,
        in_specs=in_specs,
        out_specs=pl.BlockSpec((tm, N), lambda i: (i, 0)),
        compiler_params=pltpu.CompilerParams(
            dimension_semantics=("parallel",),
            vmem_limit_bytes=VMEM_LIMIT),
    )(*args)


def pallas_pos_ln_pre(xs, pos_pad, g, b):
    """xs: [B, Sp, W] (cls+tokens, zero-padded rows); adds pos emb and applies ln_pre."""
    B = xs.shape[0]
    return pl.pallas_call(
        posln_kernel,
        out_shape=jax.ShapeDtypeStruct((B, SEQ_PAD, WIDTH), ACT_DTYPE),
        grid=(B,),
        in_specs=[pl.BlockSpec((1, SEQ_PAD, WIDTH), lambda i: (i, 0, 0)),
                  pl.BlockSpec((SEQ_PAD, WIDTH), lambda i: (0, 0)),
                  pl.BlockSpec((1, WIDTH), lambda i: (0, 0)),
                  pl.BlockSpec((1, WIDTH), lambda i: (0, 0))],
        out_specs=pl.BlockSpec((1, SEQ_PAD, WIDTH), lambda i: (i, 0, 0)),
        compiler_params=pltpu.CompilerParams(
            dimension_semantics=("parallel",),
            vmem_limit_bytes=VMEM_LIMIT),
    )(xs, pos_pad, g.reshape(1, WIDTH), b.reshape(1, WIDTH))


def pallas_attention(qkv, s_valid):
    """qkv: [B, Sp, 3W] bf16; per-batch grid, all heads in-kernel, [B, Sp, W] bf16 out."""
    B = qkv.shape[0]
    kern = functools.partial(attention_kernel, s_valid=s_valid)
    return pl.pallas_call(
        kern,
        out_shape=jax.ShapeDtypeStruct((B, SEQ_PAD, WIDTH), ACT_DTYPE),
        grid=(B,),
        in_specs=[pl.BlockSpec((1, SEQ_PAD, 3 * WIDTH), lambda i: (i, 0, 0))],
        out_specs=pl.BlockSpec((1, SEQ_PAD, WIDTH), lambda i: (i, 0, 0)),
        compiler_params=pltpu.CompilerParams(
            dimension_semantics=("parallel",),
            vmem_limit_bytes=VMEM_LIMIT),
    )(qkv)


def fused_attnout_mlp(attn, blk, residual):
    """(new_x2d, h) = fused [out_proj + bias + residual] -> [LN2 + c_fc + QuickGELU]."""
    M = attn.shape[0]
    tm = _row_tile(M)
    grid = (M // tm,)
    row = lambda i: (i, 0)
    const = lambda i: (0, 0)
    return pl.pallas_call(
        attnout_mlp_kernel,
        out_shape=(jax.ShapeDtypeStruct((M, WIDTH), ACT_DTYPE),
                   jax.ShapeDtypeStruct((M, MLP_DIM), ACT_DTYPE)),
        grid=grid,
        in_specs=[pl.BlockSpec((tm, WIDTH), row),          # attention output
                  pl.BlockSpec((WIDTH, WIDTH), const),     # out_proj_w
                  pl.BlockSpec((1, WIDTH), const),         # out_proj_b
                  pl.BlockSpec((tm, WIDTH), row),          # residual (x2d)
                  pl.BlockSpec((1, WIDTH), const),         # ln2_g
                  pl.BlockSpec((1, WIDTH), const),         # ln2_b
                  pl.BlockSpec((WIDTH, MLP_DIM), const),   # fc_w
                  pl.BlockSpec((1, MLP_DIM), const)],      # fc_b
        out_specs=[pl.BlockSpec((tm, WIDTH), row),
                   pl.BlockSpec((tm, MLP_DIM), row)],
        compiler_params=pltpu.CompilerParams(
            dimension_semantics=("parallel",),
            vmem_limit_bytes=VMEM_LIMIT),
    )(attn, blk['out_proj_w'], blk['out_proj_b'].reshape(1, WIDTH), residual,
      blk['ln2_g'].reshape(1, WIDTH), blk['ln2_b'].reshape(1, WIDTH),
      blk['fc_w'], blk['fc_b'].reshape(1, MLP_DIM))


def pallas_head(cls_tok, params):
    B = cls_tok.shape[0]
    return pl.pallas_call(
        head_kernel,
        out_shape=jax.ShapeDtypeStruct((B, NUM_CLASSES), jnp.float32),
    )(cls_tok,
      params['ln_post_g'].reshape(1, WIDTH), params['ln_post_b'].reshape(1, WIDTH),
      params['vit_proj'], params['head_proj_w'],
      params['head_proj_b'].reshape(1, EMB_DIM), params['arc_w_n'])


# -----------------------------------------------------------------------------
# Parameters (synthetic; weights pre-transposed to [K, N]; matmul weights in bf16;
# softmax scale folded into Q projection; ArcFace weight pre-normalized).
# -----------------------------------------------------------------------------
def init_params(key):
    scale = 0.02
    att_scale = HEAD_DIM ** -0.5
    keys = iter(jax.random.split(key, 16 + 8 * LAYERS))

    def nrm(shape, dtype=jnp.float32):
        return (scale * jax.random.normal(next(keys), shape, jnp.float32)).astype(dtype)

    p = {}
    # conv1(3, width, k=P, stride=P, bias=False) flattened+transposed -> [3*P*P, W]
    p['conv_w'] = nrm((3 * PATCH_SIZE * PATCH_SIZE, WIDTH), jnp.bfloat16)
    p['cls_emb'] = nrm((WIDTH,))
    p['pos_emb'] = nrm((SEQ, WIDTH))
    p['ln_pre_g'] = jnp.ones((WIDTH,), jnp.float32)
    p['ln_pre_b'] = jnp.zeros((WIDTH,), jnp.float32)

    p['blocks'] = []
    for _ in range(LAYERS):
        in_w = scale * jax.random.normal(next(keys), (WIDTH, 3 * WIDTH), jnp.float32)
        in_b = scale * jax.random.normal(next(keys), (3 * WIDTH,), jnp.float32)
        # Fold the attention softmax scale (1/sqrt(head_dim)) into the Q projection.
        in_w = in_w.at[:, :WIDTH].multiply(att_scale)
        in_b = in_b.at[:WIDTH].multiply(att_scale)
        p['blocks'].append({
            'ln1_g': jnp.ones((WIDTH,), jnp.float32),
            'ln1_b': jnp.zeros((WIDTH,), jnp.float32),
            'in_proj_w': in_w.astype(jnp.bfloat16),                   # [K, 3W]
            'in_proj_b': in_b,
            'out_proj_w': nrm((WIDTH, WIDTH), jnp.bfloat16),
            'out_proj_b': nrm((WIDTH,)),
            'ln2_g': jnp.ones((WIDTH,), jnp.float32),
            'ln2_b': jnp.zeros((WIDTH,), jnp.float32),
            'fc_w': nrm((WIDTH, MLP_DIM), jnp.bfloat16),
            'fc_b': nrm((MLP_DIM,)),
            'cproj_w': nrm((MLP_DIM, WIDTH), jnp.bfloat16),
            'cproj_b': nrm((WIDTH,)),
        })

    p['ln_post_g'] = jnp.ones((WIDTH,), jnp.float32)
    p['ln_post_b'] = jnp.zeros((WIDTH,), jnp.float32)
    p['vit_proj'] = nrm((WIDTH, OUTPUT_DIM))                          # x @ proj
    p['head_proj_w'] = nrm((OUTPUT_DIM, EMB_DIM))                     # nn.Linear, [K, N]
    p['head_proj_b'] = nrm((EMB_DIM,))
    arc = nrm((EMB_DIM, NUM_CLASSES))                                 # ArcFace W^T
    p['arc_w_n'] = arc * jax.lax.rsqrt(
        jnp.maximum(jnp.sum(arc * arc, axis=0, keepdims=True), 1e-24))
    return p


# -----------------------------------------------------------------------------
# Forward pass
# -----------------------------------------------------------------------------
def clip_vit_forward(x, params):
    B = x.shape[0]

    # --- patch embedding: Conv2d(3, W, k=P, stride=P, bias=False) as one bf16 matmul
    patches = x.reshape(B, 3, GRID_P, PATCH_SIZE, GRID_P, PATCH_SIZE)
    patches = patches.transpose(0, 2, 4, 1, 3, 5)
    patches = patches.reshape(B * NUM_PATCHES, 3 * PATCH_SIZE * PATCH_SIZE).astype(ACT_DTYPE)
    # TODO(synk): at production image sizes (224x224) extract patches inside the
    #             pallas_call via index_map instead of this XLA 6-D transpose.
    tokens = fused_linear(patches, params['conv_w']).reshape(B, NUM_PATCHES, WIDTH)

    # --- prepend class token, pad seq to a multiple of 8, fused pos-emb add + ln_pre
    cls = jnp.broadcast_to(params['cls_emb'].astype(ACT_DTYPE)[None, None, :], (B, 1, WIDTH))
    xs = jnp.concatenate([cls, tokens], axis=1)
    xs = jnp.pad(xs, ((0, 0), (0, SEQ_PAD - SEQ), (0, 0)))
    pos_pad = jnp.pad(params['pos_emb'], ((0, SEQ_PAD - SEQ), (0, 0)))
    x2d = pallas_pos_ln_pre(xs, pos_pad, params['ln_pre_g'], params['ln_pre_b'])
    x2d = x2d.reshape(B * SEQ_PAD, WIDTH)

    for blk in params['blocks']:
        # ---- fused LN1 + QKV projection (softmax scale pre-folded into Q weights)
        qkv = fused_linear(x2d, blk['in_proj_w'], blk['in_proj_b'],
                           ln_params=(blk['ln1_g'], blk['ln1_b']))        # [B*Sp, 3W] bf16
        # ---- per-batch all-heads attention; lane-dense output; no XLA transposes
        attn = pallas_attention(qkv.reshape(B, SEQ_PAD, 3 * WIDTH), SEQ)
        attn = attn.reshape(B * SEQ_PAD, WIDTH)
        # ---- fused out_proj + bias + residual -> LN2 + c_fc + QuickGELU (dual outputs)
        x2d, h = fused_attnout_mlp(attn, blk, x2d)
        # ---- fused c_proj + bias + residual
        x2d = fused_linear(h, blk['cproj_w'], blk['cproj_b'], residual=x2d)

    # --- fused tail: ln_post(cls) -> @vit_proj -> Dropout(identity) -> Linear -> ArcFace
    cls_tok = x2d.reshape(B, SEQ_PAD, WIDTH)[:, 0, :]
    logits = pallas_head(cls_tok, params)

    # TODO(synk): training-mode Dropout(0.2) (stochastic masking) not implemented.
    # TODO(synk): for real CLIP-L shapes, tile N and add a K-accumulation grid axis
    #             (marked "arbitrary", last) with an f32 VMEM acc scratch, and use
    #             pipeline_mode=pl.Buffered(1) on the constant-index weight BlockSpecs.
    return logits


if __name__ == "__main__":
    key = jax.random.PRNGKey(0)
    kp, kx = jax.random.split(key)
    params = init_params(kp)
    x = jax.random.normal(kx, (2, 3, IMAGE_SIZE, IMAGE_SIZE), jnp.float32)

    fwd = jax.jit(clip_vit_forward)
    logits = jax.block_until_ready(fwd(x, params))

    assert logits.shape == (2, NUM_CLASSES), logits.shape
    assert bool(jnp.all(jnp.isfinite(logits)))
    # cosine logits must lie in [-1, 1]
    assert float(jnp.max(jnp.abs(logits))) <= 1.0 + 1e-5
    print("KERNEL_OK")
</pallas_src>

<mosaic_0001>
module attributes {stable_mosaic.version = 11 : i64} {
  func.func @posln_kernel(%arg0: i32, %arg1: memref<1x24x128xbf16, #tpu.memory_space<vmem>>, %arg2: memref<24x128xf32, #tpu.memory_space<vmem>>, %arg3: memref<1x128xf32, #tpu.memory_space<vmem>>, %arg4: memref<1x128xf32, #tpu.memory_space<vmem>>, %arg5: memref<1x24x128xbf16, #tpu.memory_space<vmem>>) attributes {dimension_semantics = [#tpu.dimension_semantics<parallel>], iteration_bounds = array<i64: 2>, scalar_prefetch = 0 : i64, scratch_operands = 0 : i64, tpu.core_type = #tpu.core_type<tc>, window_params = [{transform_indices = @transform_0, window_bounds = array<i64: 1, 24, 128>}, {pipeline_mode = #tpu.pipeline_mode<synchronous>, transform_indices = @transform_1, window_bounds = array<i64: 24, 128>}, {pipeline_mode = #tpu.pipeline_mode<synchronous>, transform_indices = @transform_2, window_bounds = array<i64: 1, 128>}, {pipeline_mode = #tpu.pipeline_mode<synchronous>, transform_indices = @transform_3, window_bounds = array<i64: 1, 128>}, {transform_indices = @transform_4, window_bounds = array<i64: 1, 24, 128>}]} {
    %c0 = arith.constant 0 : index
    %c0_0 = arith.constant 0 : index
    %c0_1 = arith.constant 0 : index
    %0 = vector.load %arg1[%c0, %c0_0, %c0_1] : memref<1x24x128xbf16, #tpu.memory_space<vmem>>, vector<1x24x128xbf16>
    %1 = vector.shape_cast %0 : vector<1x24x128xbf16> to vector<24x128xbf16>
    %2 = arith.extf %1 : vector<24x128xbf16> to vector<24x128xf32>
    %c0_2 = arith.constant 0 : index
    %c0_3 = arith.constant 0 : index
    %3 = vector.load %arg2[%c0_2, %c0_3] : memref<24x128xf32, #tpu.memory_space<vmem>>, vector<24x128xf32>
    %4 = arith.addf %2, %3 : vector<24x128xf32>
    %cst = arith.constant dense<0.000000e+00> : vector<24xf32>
    %5 = vector.multi_reduction <add>, %4, %cst [1] : vector<24x128xf32> to vector<24xf32>
    %6 = vector.shape_cast %5 : vector<24xf32> to vector<24x1xf32>
    %cst_4 = arith.constant 1.280000e+02 : f32
    %7 = vector.broadcast %cst_4 : f32 to vector<24x1xf32>
    %8 = arith.divf %6, %7 : vector<24x1xf32>
    %9 = vector.broadcast %8 : vector<24x1xf32> to vector<24x128xf32>
    %10 = arith.subf %4, %9 : vector<24x128xf32>
    %11 = vector.broadcast %8 : vector<24x1xf32> to vector<24x128xf32>
    %12 = arith.subf %4, %11 : vector<24x128xf32>
    %13 = arith.mulf %10, %12 : vector<24x128xf32>
    %cst_5 = arith.constant dense<0.000000e+00> : vector<24xf32>
    %14 = vector.multi_reduction <add>, %13, %cst_5 [1] : vector<24x128xf32> to vector<24xf32>
    %15 = vector.shape_cast %14 : vector<24xf32> to vector<24x1xf32>
    %cst_6 = arith.constant 1.280000e+02 : f32
    %16 = vector.broadcast %cst_6 : f32 to vector<24x1xf32>
    %17 = arith.divf %15, %16 : vector<24x1xf32>
    %18 = vector.broadcast %8 : vector<24x1xf32> to vector<24x128xf32>
    %19 = arith.subf %4, %18 : vector<24x128xf32>
    %cst_7 = arith.constant 9.99999974E-6 : f32
    %20 = vector.broadcast %cst_7 : f32 to vector<24x1xf32>
    %21 = arith.addf %17, %20 : vector<24x1xf32>
    %22 = math.rsqrt %21 : vector<24x1xf32>
    %23 = vector.broadcast %22 : vector<24x1xf32> to vector<24x128xf32>
    %24 = arith.mulf %19, %23 : vector<24x128xf32>
    %c0_8 = arith.constant 0 : index
    %c0_9 = arith.constant 0 : index
    %25 = vector.load %arg3[%c0_8, %c0_9] : memref<1x128xf32, #tpu.memory_space<vmem>>, vector<1x128xf32>
    %26 = vector.broadcast %25 : vector<1x128xf32> to vector<24x128xf32>
    %27 = arith.mulf %24, %26 : vector<24x128xf32>
    %c0_10 = arith.constant 0 : index
    %c0_11 = arith.constant 0 : index
    %28 = vector.load %arg4[%c0_10, %c0_11] : memref<1x128xf32, #tpu.memory_space<vmem>>, vector<1x128xf32>
    %29 = vector.broadcast %28 : vector<1x128xf32> to vector<24x128xf32>
    %30 = arith.addf %27, %29 : vector<24x128xf32>
    %31 = arith.truncf %30 : vector<24x128xf32> to vector<24x128xbf16>
    %c0_12 = arith.constant 0 : index
    %c0_13 = arith.constant 0 : index
    %c0_14 = arith.constant 0 : index
    %32 = vector.load %arg5[%c0_12, %c0_13, %c0_14] : memref<1x24x128xbf16, #tpu.memory_space<vmem>>, vector<1x24x128xbf16>
    %33 = vector.shape_cast %32 : vector<1x24x128xbf16> to vector<24x128xbf16>
    %34 = vector.shape_cast %31 : vector<24x128xbf16> to vector<1x24x128xbf16>
    tpu.vector_store %arg5[%c0_12, %c0_13, %c0_14], %34 {strides = array<i32>} : memref<1x24x128xbf16, #tpu.memory_space<vmem>>, vector<1x24x128xbf16>,
    return
  }
  func.func @transform_0(%arg0: i32) -> (i32, i32, i32) {
    %c0_i32 = arith.constant 0 : i32
    %c0_i32_0 = arith.constant 0 : i32
    %c0_i32_1 = arith.constant 0 : i32
    return %arg0, %c0_i32, %c0_i32_0 : i32, i32, i32
  }
  func.func @transform_1(%arg0: i32) -> (i32, i32) {
    %c0_i32 = arith.constant 0 : i32
    %c0_i32_0 = arith.constant 0 : i32
    %c0_i32_1 = arith.constant 0 : i32
    return %c0_i32, %c0_i32_0 : i32, i32
  }
  func.func @transform_2(%arg0: i32) -> (i32, i32) {
    %c0_i32 = arith.constant 0 : i32
    %c0_i32_0 = arith.constant 0 : i32
    %c0_i32_1 = arith.constant 0 : i32
    return %c0_i32, %c0_i32_0 : i32, i32
  }
  func.func @transform_3(%arg0: i32) -> (i32, i32) {
    %c0_i32 = arith.constant 0 : i32
    %c0_i32_0 = arith.constant 0 : i32
    %c0_i32_1 = arith.constant 0 : i32
    return %c0_i32, %c0_i32_0 : i32, i32
  }
  func.func @transform_4(%arg0: i32) -> (i32, i32, i32) {
    %c0_i32 = arith.constant 0 : i32
    %c0_i32_0 = arith.constant 0 : i32
    %c0_i32_1 = arith.constant 0 : i32
    return %arg0, %c0_i32, %c0_i32_0 : i32, i32, i32
  }
}

module attributes {stable_mosaic.version = 11 : i64} {
  func.func @kernel(%arg0: i32, %arg1: memref<16x192xbf16, #tpu.memory_space<vmem>>, %arg2: memref<192x128xbf16, #tpu.memory_space<vmem>>, %arg3: memref<16x128xbf16, #tpu.memory_space<vmem>>) attributes {dimension_semantics = [#tpu.dimension_semantics<parallel>], iteration_bounds = array<i64: 2>, scalar_prefetch = 0 : i64, scratch_operands = 0 : i64, tpu.core_type = #tpu.core_type<tc>, window_params = [{transform_indices = @transform_0, window_bounds = array<i64: 16, 192>}, {pipeline_mode = #tpu.pipeline_mode<synchronous>, transform_indices = @transform_1, window_bounds = array<i64: 192, 128>}, {transform_indices = @transform_2, window_bounds = array<i64: 16, 128>}]} {
    %c0 = arith.constant 0 : index
    %c0_0 = arith.constant 0 : index
    %0 = vector.load %arg1[%c0, %c0_0] : memref<16x192xbf16, #tpu.memory_space<vmem>>, vector<16x192xbf16>
    %1 = arith.extf %0 : vector<16x192xbf16> to vector<16x192xf32>
    %2 = arith.truncf %1 : vector<16x192xf32> to vector<16x192xbf16>
    %c0_1 = arith.constant 0 : index
    %c0_2 = arith.constant 0 : index
    %3 = vector.load %arg2[%c0_1, %c0_2] : memref<192x128xbf16, #tpu.memory_space<vmem>>, vector<192x128xbf16>
    %cst = arith.constant dense<0.000000e+00> : vector<16x128xf32>
    %4 = tpu.matmul %2, %3, %cst {dimension_numbers = #tpu.dot_dimension_numbers<[1], [0], [0], [1], [0, 0, 1, 1], [], []>} : vector<16x192xbf16>, vector<192x128xbf16>, vector<16x128xf32> -> vector<16x128xf32>
    %5 = arith.truncf %4 : vector<16x128xf32> to vector<16x128xbf16>
    %c0_3 = arith.constant 0 : index
    %c0_4 = arith.constant 0 : index
    %6 = vector.load %arg3[%c0_3, %c0_4] : memref<16x128xbf16, #tpu.memory_space<vmem>>, vector<16x128xbf16>
    tpu.vector_store %arg3[%c0_3, %c0_4], %5 {strides = array<i32>} : memref<16x128xbf16, #tpu.memory_space<vmem>>, vector<16x128xbf16>,
    return
  }
  func.func @transform_0(%arg0: i32) -> (i32, i32) {
    %c0_i32 = arith.constant 0 : i32
    %c0_i32_0 = arith.constant 0 : i32
    return %arg0, %c0_i32 : i32, i32
  }
  func.func @transform_1(%arg0: i32) -> (i32, i32) {
    %c0_i32 = arith.constant 0 : i32
    %c0_i32_0 = arith.constant 0 : i32
    %c0_i32_1 = arith.constant 0 : i32
    return %c0_i32, %c0_i32_0 : i32, i32
  }
  func.func @transform_2(%arg0: i32) -> (i32, i32) {
    %c0_i32 = arith.constant 0 : i32
    %c0_i32_0 = arith.constant 0 : i32
    return %arg0, %c0_i32 : i32, i32
  }
}

module attributes {stable_mosaic.version = 11 : i64} {
  func.func @kernel(%arg0: i32, %arg1: memref<24x128xbf16, #tpu.memory_space<vmem>>, %arg2: memref<1x128xf32, #tpu.memory_space<vmem>>, %arg3: memref<1x128xf32, #tpu.memory_space<vmem>>, %arg4: memref<128x384xbf16, #tpu.memory_space<vmem>>, %arg5: memref<1x384xf32, #tpu.memory_space<vmem>>, %arg6: memref<24x384xbf16, #tpu.memory_space<vmem>>) attributes {dimension_semantics = [#tpu.dimension_semantics<parallel>], iteration_bounds = array<i64: 2>, scalar_prefetch = 0 : i64, scratch_operands = 0 : i64, tpu.core_type = #tpu.core_type<tc>, window_params = [{transform_indices = @transform_0, window_bounds = array<i64: 24, 128>}, {pipeline_mode = #tpu.pipeline_mode<synchronous>, transform_indices = @transform_1, window_bounds = array<i64: 1, 128>}, {pipeline_mode = #tpu.pipeline_mode<synchronous>, transform_indices = @transform_2, window_bounds = array<i64: 1, 128>}, {pipeline_mode = #tpu.pipeline_mode<synchronous>, transform_indices = @transform_3, window_bounds = array<i64: 128, 384>}, {pipeline_mode = #tpu.pipeline_mode<synchronous>, transform_indices = @transform_4, window_bounds = array<i64: 1, 384>}, {transform_indices = @transform_5, window_bounds = array<i64: 24, 384>}]} {
    %c0 = arith.constant 0 : index
    %c0_0 = arith.constant 0 : index
    %0 = vector.load %arg1[%c0, %c0_0] : memref<24x128xbf16, #tpu.memory_space<vmem>>, vector<24x128xbf16>
    %1 = arith.extf %0 : vector<24x128xbf16> to vector<24x128xf32>
    %cst = arith.constant dense<0.000000e+00> : vector<24xf32>
    %2 = vector.multi_reduction <add>, %1, %cst [1] : vector<24x128xf32> to vector<24xf32>
    %3 = vector.shape_cast %2 : vector<24xf32> to vector<24x1xf32>
    %cst_1 = arith.constant 1.280000e+02 : f32
    %4 = vector.broadcast %cst_1 : f32 to vector<24x1xf32>
    %5 = arith.divf %3, %4 : vector<24x1xf32>
    %6 = vector.broadcast %5 : vector<24x1xf32> to vector<24x128xf32>
    %7 = arith.subf %1, %6 : vector<24x128xf32>
    %8 = vector.broadcast %5 : vector<24x1xf32> to vector<24x128xf32>
    %9 = arith.subf %1, %8 : vector<24x128xf32>
    %10 = arith.mulf %7, %9 : vector<24x128xf32>
    %cst_2 = arith.constant dense<0.000000e+00> : vector<24xf32>
    %11 = vector.multi_reduction <add>, %10, %cst_2 [1] : vector<24x128xf32> to vector<24xf32>
    %12 = vector.shape_cast %11 : vector<24xf32> to vector<24x1xf32>
    %cst_3 = arith.constant 1.280000e+02 : f32
    %13 = vector.broadcast %cst_3 : f32 to vector<24x1xf32>
    %14 = arith.divf %12, %13 : vector<24x1xf32>
    %15 = vector.broadcast %5 : vector<24x1xf32> to vector<24x128xf32>
    %16 = arith.subf %1, %15 : vector<24x128xf32>
    %cst_4 = arith.constant 9.99999974E-6 : f32
    %17 = vector.broadcast %cst_4 : f32 to vector<24x1xf32>
    %18 = arith.addf %14, %17 : vector<24x1xf32>
    %19 = math.rsqrt %18 : vector<24x1xf32>
    %20 = vector.broadcast %19 : vector<24x1xf32> to vector<24x128xf32>
    %21 = arith.mulf %16, %20 : vector<24x128xf32>
    %c0_5 = arith.constant 0 : index
    %c0_6 = arith.constant 0 : index
    %22 = vector.load %arg2[%c0_5, %c0_6] : memref<1x128xf32, #tpu.memory_space<vmem>>, vector<1x128xf32>
    %23 = vector.broadcast %22 : vector<1x128xf32> to vector<24x128xf32>
    %24 = arith.mulf %21, %23 : vector<24x128xf32>
    %c0_7 = arith.constant 0 : index
    %c0_8 = arith.constant 0 : index
    %25 = vector.load %arg3[%c0_7, %c0_8] : memref<1x128xf32, #tpu.memory_space<vmem>>, vector<1x128xf32>
    %26 = vector.broadcast %25 : vector<1x128xf32> to vector<24x128xf32>
    %27 = arith.addf %24, %26 : vector<24x128xf32>
    %28 = arith.truncf %27 : vector<24x128xf32> to vector<24x128xbf16>
    %c0_9 = arith.constant 0 : index
    %c0_10 = arith.constant 0 : index
    %29 = vector.load %arg4[%c0_9, %c0_10] : memref<128x384xbf16, #tpu.memory_space<vmem>>, vector<128x384xbf16>
    %cst_11 = arith.constant dense<0.000000e+00> : vector<24x384xf32>
    %30 = tpu.matmul %28, %29, %cst_11 {dimension_numbers = #tpu.dot_dimension_numbers<[1], [0], [0], [1], [0, 0, 1, 1], [], []>} : vector<24x128xbf16>, vector<128x384xbf16>, vector<24x384xf32> -> vector<24x384xf32>
    %c0_12 = arith.constant 0 : index
    %c0_13 = arith.constant 0 : index
    %31 = vector.load %arg5[%c0_12, %c0_13] : memref<1x384xf32, #tpu.memory_space<vmem>>, vector<1x384xf32>
    %32 = vector.broadcast %31 : vector<1x384xf32> to vector<24x384xf32>
    %33 = arith.addf %30, %32 : vector<24x384xf32>
    %34 = arith.truncf %33 : vector<24x384xf32> to vector<24x384xbf16>
    %c0_14 = arith.constant 0 : index
    %c0_15 = arith.constant 0 : index
    %35 = vector.load %arg6[%c0_14, %c0_15] : memref<24x384xbf16, #tpu.memory_space<vmem>>, vector<24x384xbf16>
    tpu.vector_store %arg6[%c0_14, %c0_15], %34 {strides = array<i32>} : memref<24x384xbf16, #tpu.memory_space<vmem>>, vector<24x384xbf16>,
    return
  }
  func.func @transform_0(%arg0: i32) -> (i32, i32) {
    %c0_i32 = arith.constant 0 : i32
    %c0_i32_0 = arith.constant 0 : i32
    return %arg0, %c0_i32 : i32, i32
  }
  func.func @transform_1(%arg0: i32) -> (i32, i32) {
    %c0_i32 = arith.constant 0 : i32
    %c0_i32_0 = arith.constant 0 : i32
    %c0_i32_1 = arith.constant 0 : i32
    return %c0_i32, %c0_i32_0 : i32, i32
  }
  func.func @transform_2(%arg0: i32) -> (i32, i32) {
    %c0_i32 = arith.constant 0 : i32
    %c0_i32_0 = arith.constant 0 : i32
    %c0_i32_1 = arith.constant 0 : i32
    return %c0_i32, %c0_i32_0 : i32, i32
  }
  func.func @transform_3(%arg0: i32) -> (i32, i32) {
    %c0_i32 = arith.constant 0 : i32
    %c0_i32_0 = arith.constant 0 : i32
    %c0_i32_1 = arith.constant 0 : i32
    return %c0_i32, %c0_i32_0 : i32, i32
  }
  func.func @transform_4(%arg0: i32) -> (i32, i32) {
    %c0_i32 = arith.constant 0 : i32
    %c0_i32_0 = arith.constant 0 : i32
    %c0_i32_1 = arith.constant 0 : i32
    return %c0_i32, %c0_i32_0 : i32, i32
  }
  func.func @transform_5(%arg0: i32) -> (i32, i32) {
    %c0_i32 = arith.constant 0 : i32
    %c0_i32_0 = arith.constant 0 : i32
    return %arg0, %c0_i32 : i32, i32
  }
}

module attributes {stable_mosaic.version = 11 : i64} {
  func.func @attention_kernel(%arg0: i32, %arg1: memref<1x24x384xbf16, #tpu.memory_space<vmem>>, %arg2: memref<1x24x128xbf16, #tpu.memory_space<vmem>>) attributes {dimension_semantics = [#tpu.dimension_semantics<parallel>], iteration_bounds = array<i64: 2>, scalar_prefetch = 0 : i64, scratch_operands = 0 : i64, tpu.core_type = #tpu.core_type<tc>, window_params = [{transform_indices = @transform_0, window_bounds = array<i64: 1, 24, 384>}, {transform_indices = @transform_1, window_bounds = array<i64: 1, 24, 128>}]} {
    %c0 = arith.constant 0 : index
    %c0_0 = arith.constant 0 : index
    %c0_1 = arith.constant 0 : index
    %0 = vector.load %arg1[%c0, %c0_0, %c0_1] : memref<1x24x384xbf16, #tpu.memory_space<vmem>>, vector<1x24x384xbf16>
    %1 = vector.shape_cast %0 : vector<1x24x384xbf16> to vector<24x384xbf16>
    %2 = tpu.iota {dimensions = array<i32: 1>} : vector<24x24xi32>
    %c17_i32 = arith.constant 17 : i32
    %3 = vector.broadcast %c17_i32 : i32 to vector<24x24xi32>
    %4 = arith.cmpi slt, %2, %3 : vector<24x24xi32>
    %5 = vector.extract_strided_slice %1 {offsets = [0, 0], sizes = [24, 32], strides = [1, 1]} : vector<24x384xbf16> to vector<24x32xbf16>
    %6 = vector.extract_strided_slice %1 {offsets = [0, 128], sizes = [24, 32], strides = [1, 1]} : vector<24x384xbf16> to vector<24x32xbf16>
    %7 = vector.extract_strided_slice %1 {offsets = [0, 256], sizes = [24, 32], strides = [1, 1]} : vector<24x384xbf16> to vector<24x32xbf16>
    %cst = arith.constant dense<0.000000e+00> : vector<24x24xf32>
    %8 = tpu.matmul %5, %6, %cst {dimension_numbers = #tpu.dot_dimension_numbers<[1], [1], [0], [0], [0, 0, 1, 0], [], []>} : vector<24x32xbf16>, vector<24x32xbf16>, vector<24x24xf32> -> vector<24x24xf32>
    %cst_2 = arith.constant -1.000000e+30 : f32
    %9 = vector.broadcast %cst_2 : f32 to vector<24x24xf32>
    %10 = arith.select %4, %8, %9 : vector<24x24xi1>, vector<24x24xf32>
    %cst_3 = arith.constant dense<0xFF800000> : vector<24xf32>
    %11 = vector.multi_reduction <maximumf>, %10, %cst_3 [1] : vector<24x24xf32> to vector<24xf32>
    %12 = vector.shape_cast %11 : vector<24xf32> to vector<24x1xf32>
    %13 = vector.broadcast %12 : vector<24x1xf32> to vector<24x24xf32>
    %14 = arith.subf %10, %13 : vector<24x24xf32>
    %15 = math.exp %14 : vector<24x24xf32>
    %cst_4 = arith.constant dense<0.000000e+00> : vector<24xf32>
    %16 = vector.multi_reduction <add>, %15, %cst_4 [1] : vector<24x24xf32> to vector<24xf32>
    %17 = vector.shape_cast %16 : vector<24xf32> to vector<24x1xf32>
    %18 = tpu.reciprocal %17 {approx = true} : vector<24x1xf32> -> vector<24x1xf32>
    %19 = vector.broadcast %18 : vector<24x1xf32> to vector<24x24xf32>
    %20 = arith.mulf %15, %19 : vector<24x24xf32>
    %21 = arith.truncf %20 : vector<24x24xf32> to vector<24x24xbf16>
    %cst_5 = arith.constant dense<0.000000e+00> : vector<24x32xf32>
    %22 = tpu.matmul %21, %7, %cst_5 {dimension_numbers = #tpu.dot_dimension_numbers<[1], [0], [0], [1], [0, 0, 1, 1], [], []>} : vector<24x24xbf16>, vector<24x32xbf16>, vector<24x32xf32> -> vector<24x32xf32>
    %23 = vector.extract_strided_slice %1 {offsets = [0, 32], sizes = [24, 32], strides = [1, 1]} : vector<24x384xbf16> to vector<24x32xbf16>
    %24 = vector.extract_strided_slice %1 {offsets = [0, 160], sizes = [24, 32], strides = [1, 1]} : vector<24x384xbf16> to vector<24x32xbf16>
    %25 = vector.extract_strided_slice %1 {offsets = [0, 288], sizes = [24, 32], strides = [1, 1]} : vector<24x384xbf16> to vector<24x32xbf16>
    %cst_6 = arith.constant dense<0.000000e+00> : vector<24x24xf32>
    %26 = tpu.matmul %23, %24, %cst_6 {dimension_numbers = #tpu.dot_dimension_numbers<[1], [1], [0], [0], [0, 0, 1, 0], [], []>} : vector<24x32xbf16>, vector<24x32xbf16>, vector<24x24xf32> -> vector<24x24xf32>
    %cst_7 = arith.constant -1.000000e+30 : f32
    %27 = vector.broadcast %cst_7 : f32 to vector<24x24xf32>
    %28 = arith.select %4, %26, %27 : vector<24x24xi1>, vector<24x24xf32>
    %cst_8 = arith.constant dense<0xFF800000> : vector<24xf32>
    %29 = vector.multi_reduction <maximumf>, %28, %cst_8 [1] : vector<24x24xf32> to vector<24xf32>
    %30 = vector.shape_cast %29 : vector<24xf32> to vector<24x1xf32>
    %31 = vector.broadcast %30 : vector<24x1xf32> to vector<24x24xf32>
    %32 = arith.subf %28, %31 : vector<24x24xf32>
    %33 = math.exp %32 : vector<24x24xf32>
    %cst_9 = arith.constant dense<0.000000e+00> : vector<24xf32>
    %34 = vector.multi_reduction <add>, %33, %cst_9 [1] : vector<24x24xf32> to vector<24xf32>
    %35 = vector.shape_cast %34 : vector<24xf32> to vector<24x1xf32>
    %36 = tpu.reciprocal %35 {approx = true} : vector<24x1xf32> -> vector<24x1xf32>
    %37 = vector.broadcast %36 : vector<24x1xf32> to vector<24x24xf32>
    %38 = arith.mulf %33, %37 : vector<24x24xf32>
    %39 = arith.truncf %38 : vector<24x24xf32> to vector<24x24xbf16>
    %cst_10 = arith.constant dense<0.000000e+00> : vector<24x32xf32>
    %40 = tpu.matmul %39, %25, %cst_10 {dimension_numbers = #tpu.dot_dimension_numbers<[1], [0], [0], [1], [0, 0, 1, 1], [], []>} : vector<24x24xbf16>, vector<24x32xbf16>, vector<24x32xf32> -> vector<24x32xf32>
    %41 = vector.extract_strided_slice %1 {offsets = [0, 64], sizes = [24, 32], strides = [1, 1]} : vector<24x384xbf16> to vector<24x32xbf16>
    %42 = vector.extract_strided_slice %1 {offsets = [0, 192], sizes = [24, 32], strides = [1, 1]} : vector<24x384xbf16> to vector<24x32xbf16>
    %43 = vector.extract_strided_slice %1 {offsets = [0, 320], sizes = [24, 32], strides = [1, 1]} : vector<24x384xbf16> to vector<24x32xbf16>
    %cst_11 = arith.constant dense<0.000000e+00> : vector<24x24xf32>
    %44 = tpu.matmul %41, %42, %cst_11 {dimension_numbers = #tpu.dot_dimension_numbers<[1], [1], [0], [0], [0, 0, 1, 0], [], []>} : vector<24x32xbf16>, vector<24x32xbf16>, vector<24x24xf32> -> vector<24x24xf32>
    %cst_12 = arith.constant -1.000000e+30 : f32
    %45 = vector.broadcast %cst_12 : f32 to vector<24x24xf32>
    %46 = arith.select %4, %44, %45 : vector<24x24xi1>, vector<24x24xf32>
    %cst_13 = arith.constant dense<0xFF800000> : vector<24xf32>
    %47 = vector.multi_reduction <maximumf>, %46, %cst_13 [1] : vector<24x24xf32> to vector<24xf32>
    %48 = vector.shape_cast %47 : vector<24xf32> to vector<24x1xf32>
    %49 = vector.broadcast %48 : vector<24x1xf32> to vector<24x24xf32>
    %50 = arith.subf %46, %49 : vector<24x24xf32>
    %51 = math.exp %50 : vector<24x24xf32>
    %cst_14 = arith.constant dense<0.000000e+00> : vector<24xf32>
    %52 = vector.multi_reduction <add>, %51, %cst_14 [1] : vector<24x24xf32> to vector<24xf32>
    %53 = vector.shape_cast %52 : vector<24xf32> to vector<24x1xf32>
    %54 = tpu.reciprocal %53 {approx = true} : vector<24x1xf32> -> vector<24x1xf32>
    %55 = vector.broadcast %54 : vector<24x1xf32> to vector<24x24xf32>
    %56 = arith.mulf %51, %55 : vector<24x24xf32>
    %57 = arith.truncf %56 : vector<24x24xf32> to vector<24x24xbf16>
    %cst_15 = arith.constant dense<0.000000e+00> : vector<24x32xf32>
    %58 = tpu.matmul %57, %43, %cst_15 {dimension_numbers = #tpu.dot_dimension_numbers<[1], [0], [0], [1], [0, 0, 1, 1], [], []>} : vector<24x24xbf16>, vector<24x32xbf16>, vector<24x32xf32> -> vector<24x32xf32>
    %59 = vector.extract_strided_slice %1 {offsets = [0, 96], sizes = [24, 32], strides = [1, 1]} : vector<24x384xbf16> to vector<24x32xbf16>
    %60 = vector.extract_strided_slice %1 {offsets = [0, 224], sizes = [24, 32], strides = [1, 1]} : vector<24x384xbf16> to vector<24x32xbf16>
    %61 = vector.extract_strided_slice %1 {offsets = [0, 352], sizes = [24, 32], strides = [1, 1]} : vector<24x384xbf16> to vector<24x32xbf16>
    %cst_16 = arith.constant dense<0.000000e+00> : vector<24x24xf32>
    %62 = tpu.matmul %59, %60, %cst_16 {dimension_numbers = #tpu.dot_dimension_numbers<[1], [1], [0], [0], [0, 0, 1, 0], [], []>} : vector<24x32xbf16>, vector<24x32xbf16>, vector<24x24xf32> -> vector<24x24xf32>
    %cst_17 = arith.constant -1.000000e+30 : f32
    %63 = vector.broadcast %cst_17 : f32 to vector<24x24xf32>
    %64 = arith.select %4, %62, %63 : vector<24x24xi1>, vector<24x24xf32>
    %cst_18 = arith.constant dense<0xFF800000> : vector<24xf32>
    %65 = vector.multi_reduction <maximumf>, %64, %cst_18 [1] : vector<24x24xf32> to vector<24xf32>
    %66 = vector.shape_cast %65 : vector<24xf32> to vector<24x1xf32>
    %67 = vector.broadcast %66 : vector<24x1xf32> to vector<24x24xf32>
    %68 = arith.subf %64, %67 : vector<24x24xf32>
    %69 = math.exp %68 : vector<24x24xf32>
    %cst_19 = arith.constant dense<0.000000e+00> : vector<24xf32>
    %70 = vector.multi_reduction <add>, %69, %cst_19 [1] : vector<24x24xf32> to vector<24xf32>
    %71 = vector.shape_cast %70 : vector<24xf32> to vector<24x1xf32>
    %72 = tpu.reciprocal %71 {approx = true} : vector<24x1xf32> -> vector<24x1xf32>
    %73 = vector.broadcast %72 : vector<24x1xf32> to vector<24x24xf32>
    %74 = arith.mulf %69, %73 : vector<24x24xf32>
    %75 = arith.truncf %74 : vector<24x24xf32> to vector<24x24xbf16>
    %cst_20 = arith.constant dense<0.000000e+00> : vector<24x32xf32>
    %76 = tpu.matmul %75, %61, %cst_20 {dimension_numbers = #tpu.dot_dimension_numbers<[1], [0], [0], [1], [0, 0, 1, 1], [], []>} : vector<24x24xbf16>, vector<24x32xbf16>, vector<24x32xf32> -> vector<24x32xf32>
    %77 = tpu.concatenate %22, %40, %58, %76 in 1 : vector<24x32xf32>, vector<24x32xf32>, vector<24x32xf32>, vector<24x32xf32> -> vector<24x128xf32>
    %78 = arith.truncf %77 : vector<24x128xf32> to vector<24x128xbf16>
    %c0_21 = arith.constant 0 : index
    %c0_22 = arith.constant 0 : index
    %c0_23 = arith.constant 0 : index
    %79 = vector.load %arg2[%c0_21, %c0_22, %c0_23] : memref<1x24x128xbf16, #tpu.memory_space<vmem>>, vector<1x24x128xbf16>
    %80 = vector.shape_cast %79 : vector<1x24x128xbf16> to vector<24x128xbf16>
    %81 = vector.shape_cast %78 : vector<24x128xbf16> to vector<1x24x128xbf16>
    tpu.vector_store %arg2[%c0_21, %c0_22, %c0_23], %81 {strides = array<i32>} : memref<1x24x128xbf16, #tpu.memory_space<vmem>>, vector<1x24x128xbf16>,
    return
  }
  func.func @transform_0(%arg0: i32) -> (i32, i32, i32) {
    %c0_i32 = arith.constant 0 : i32
    %c0_i32_0 = arith.constant 0 : i32
    %c0_i32_1 = arith.constant 0 : i32
    return %arg0, %c0_i32, %c0_i32_0 : i32, i32, i32
  }
  func.func @transform_1(%arg0: i32) -> (i32, i32, i32) {
    %c0_i32 = arith.constant 0 : i32
    %c0_i32_0 = arith.constant 0 : i32
    %c0_i32_1 = arith.constant 0 : i32
    return %arg0, %c0_i32, %c0_i32_0 : i32, i32, i32
  }
}

module attributes {stable_mosaic.version = 11 : i64} {
  func.func @kernel(%arg0: i32, %arg1: memref<24x512xbf16, #tpu.memory_space<vmem>>, %arg2: memref<512x128xbf16, #tpu.memory_space<vmem>>, %arg3: memref<1x128xf32, #tpu.memory_space<vmem>>, %arg4: memref<24x128xbf16, #tpu.memory_space<vmem>>, %arg5: memref<24x128xbf16, #tpu.memory_space<vmem>>) attributes {dimension_semantics = [#tpu.dimension_semantics<parallel>], iteration_bounds = array<i64: 2>, scalar_prefetch = 0 : i64, scratch_operands = 0 : i64, tpu.core_type = #tpu.core_type<tc>, window_params = [{transform_indices = @transform_0, window_bounds = array<i64: 24, 512>}, {pipeline_mode = #tpu.pipeline_mode<synchronous>, transform_indices = @transform_1, window_bounds = array<i64: 512, 128>}, {pipeline_mode = #tpu.pipeline_mode<synchronous>, transform_indices = @transform_2, window_bounds = array<i64: 1, 128>}, {transform_indices = @transform_3, window_bounds = array<i64: 24, 128>}, {transform_indices = @transform_4, window_bounds = array<i64: 24, 128>}]} {
    %c0 = arith.constant 0 : index
    %c0_0 = arith.constant 0 : index
    %0 = vector.load %arg1[%c0, %c0_0] : memref<24x512xbf16, #tpu.memory_space<vmem>>, vector<24x512xbf16>
    %1 = arith.extf %0 : vector<24x512xbf16> to vector<24x512xf32>
    %2 = arith.truncf %1 : vector<24x512xf32> to vector<24x512xbf16>
    %c0_1 = arith.constant 0 : index
    %c0_2 = arith.constant 0 : index
    %3 = vector.load %arg2[%c0_1, %c0_2] : memref<512x128xbf16, #tpu.memory_space<vmem>>, vector<512x128xbf16>
    %cst = arith.constant dense<0.000000e+00> : vector<24x128xf32>
    %4 = tpu.matmul %2, %3, %cst {dimension_numbers = #tpu.dot_dimension_numbers<[1], [0], [0], [1], [0, 0, 1, 1], [], []>} : vector<24x512xbf16>, vector<512x128xbf16>, vector<24x128xf32> -> vector<24x128xf32>
    %c0_3 = arith.constant 0 : index
    %c0_4 = arith.constant 0 : index
    %5 = vector.load %arg3[%c0_3, %c0_4] : memref<1x128xf32, #tpu.memory_space<vmem>>, vector<1x128xf32>
    %6 = vector.broadcast %5 : vector<1x128xf32> to vector<24x128xf32>
    %7 = arith.addf %4, %6 : vector<24x128xf32>
    %c0_5 = arith.constant 0 : index
    %c0_6 = arith.constant 0 : index
    %8 = vector.load %arg4[%c0_5, %c0_6] : memref<24x128xbf16, #tpu.memory_space<vmem>>, vector<24x128xbf16>
    %9 = arith.extf %8 : vector<24x128xbf16> to vector<24x128xf32>
    %10 = arith.addf %7, %9 : vector<24x128xf32>
    %11 = arith.truncf %10 : vector<24x128xf32> to vector<24x128xbf16>
    %c0_7 = arith.constant 0 : index
    %c0_8 = arith.constant 0 : index
    %12 = vector.load %arg5[%c0_7, %c0_8] : memref<24x128xbf16, #tpu.memory_space<vmem>>, vector<24x128xbf16>
    tpu.vector_store %arg5[%c0_7, %c0_8], %11 {strides = array<i32>} : memref<24x128xbf16, #tpu.memory_space<vmem>>, vector<24x128xbf16>,
    return
  }
  func.func @transform_0(%arg0: i32) -> (i32, i32) {
    %c0_i32 = arith.constant 0 : i32
    %c0_i32_0 = arith.constant 0 : i32
    return %arg0, %c0_i32 : i32, i32
  }
  func.func @transform_1(%arg0: i32) -> (i32, i32) {
    %c0_i32 = arith.constant 0 : i32
    %c0_i32_0 = arith.constant 0 : i32
    %c0_i32_1 = arith.constant 0 : i32
    return %c0_i32, %c0_i32_0 : i32, i32
  }
  func.func @transform_2(%arg0: i32) -> (i32, i32) {
    %c0_i32 = arith.constant 0 : i32
    %c0_i32_0 = arith.constant 0 : i32
    %c0_i32_1 = arith.constant 0 : i32
    return %c0_i32, %c0_i32_0 : i32, i32
  }
  func.func @transform_3(%arg0: i32) -> (i32, i32) {
    %c0_i32 = arith.constant 0 : i32
    %c0_i32_0 = arith.constant 0 : i32
    return %arg0, %c0_i32 : i32, i32
  }
  func.func @transform_4(%arg0: i32) -> (i32, i32) {
    %c0_i32 = arith.constant 0 : i32
    %c0_i32_0 = arith.constant 0 : i32
    return %arg0, %c0_i32 : i32, i32
  }
}

module attributes {stable_mosaic.version = 11 : i64} {
  func.func @attnout_mlp_kernel(%arg0: i32, %arg1: memref<24x128xbf16, #tpu.memory_space<vmem>>, %arg2: memref<128x128xbf16, #tpu.memory_space<vmem>>, %arg3: memref<1x128xf32, #tpu.memory_space<vmem>>, %arg4: memref<24x128xbf16, #tpu.memory_space<vmem>>, %arg5: memref<1x128xf32, #tpu.memory_space<vmem>>, %arg6: memref<1x128xf32, #tpu.memory_space<vmem>>, %arg7: memref<128x512xbf16, #tpu.memory_space<vmem>>, %arg8: memref<1x512xf32, #tpu.memory_space<vmem>>, %arg9: memref<24x128xbf16, #tpu.memory_space<vmem>>, %arg10: memref<24x512xbf16, #tpu.memory_space<vmem>>) attributes {dimension_semantics = [#tpu.dimension_semantics<parallel>], iteration_bounds = array<i64: 2>, scalar_prefetch = 0 : i64, scratch_operands = 0 : i64, tpu.core_type = #tpu.core_type<tc>, window_params = [{transform_indices = @transform_0, window_bounds = array<i64: 24, 128>}, {pipeline_mode = #tpu.pipeline_mode<synchronous>, transform_indices = @transform_1, window_bounds = array<i64: 128, 128>}, {pipeline_mode = #tpu.pipeline_mode<synchronous>, transform_indices = @transform_2, window_bounds = array<i64: 1, 128>}, {transform_indices = @transform_3, window_bounds = array<i64: 24, 128>}, {pipeline_mode = #tpu.pipeline_mode<synchronous>, transform_indices = @transform_4, window_bounds = array<i64: 1, 128>}, {pipeline_mode = #tpu.pipeline_mode<synchronous>, transform_indices = @transform_5, window_bounds = array<i64: 1, 128>}, {pipeline_mode = #tpu.pipeline_mode<synchronous>, transform_indices = @transform_6, window_bounds = array<i64: 128, 512>}, {pipeline_mode = #tpu.pipeline_mode<synchronous>, transform_indices = @transform_7, window_bounds = array<i64: 1, 512>}, {transform_indices = @transform_8, window_bounds = array<i64: 24, 128>}, {transform_indices = @transform_9, window_bounds = array<i64: 24, 512>}]} {
    %c0 = arith.constant 0 : index
    %c0_0 = arith.constant 0 : index
    %0 = vector.load %arg1[%c0, %c0_0] : memref<24x128xbf16, #tpu.memory_space<vmem>>, vector<24x128xbf16>
    %c0_1 = arith.constant 0 : index
    %c0_2 = arith.constant 0 : index
    %1 = vector.load %arg2[%c0_1, %c0_2] : memref<128x128xbf16, #tpu.memory_space<vmem>>, vector<128x128xbf16>
    %cst = arith.constant dense<0.000000e+00> : vector<24x128xf32>
    %2 = tpu.matmul %0, %1, %cst {dimension_numbers = #tpu.dot_dimension_numbers<[1], [0], [0], [1], [0, 0, 1, 1], [], []>} : vector<24x128xbf16>, vector<128x128xbf16>, vector<24x128xf32> -> vector<24x128xf32>
    %c0_3 = arith.constant 0 : index
    %c0_4 = arith.constant 0 : index
    %3 = vector.load %arg3[%c0_3, %c0_4] : memref<1x128xf32, #tpu.memory_space<vmem>>, vector<1x128xf32>
    %4 = vector.broadcast %3 : vector<1x128xf32> to vector<24x128xf32>
    %5 = arith.addf %2, %4 : vector<24x128xf32>
    %c0_5 = arith.constant 0 : index
    %c0_6 = arith.constant 0 : index
    %6 = vector.load %arg4[%c0_5, %c0_6] : memref<24x128xbf16, #tpu.memory_space<vmem>>, vector<24x128xbf16>
    %7 = arith.extf %6 : vector<24x128xbf16> to vector<24x128xf32>
    %8 = arith.addf %5, %7 : vector<24x128xf32>
    %9 = arith.truncf %8 : vector<24x128xf32> to vector<24x128xbf16>
    %c0_7 = arith.constant 0 : index
    %c0_8 = arith.constant 0 : index
    %10 = vector.load %arg9[%c0_7, %c0_8] : memref<24x128xbf16, #tpu.memory_space<vmem>>, vector<24x128xbf16>
    tpu.vector_store %arg9[%c0_7, %c0_8], %9 {strides = array<i32>} : memref<24x128xbf16, #tpu.memory_space<vmem>>, vector<24x128xbf16>,
    %cst_9 = arith.constant dense<0.000000e+00> : vector<24xf32>
    %11 = vector.multi_reduction <add>, %8, %cst_9 [1] : vector<24x128xf32> to vector<24xf32>
    %12 = vector.shape_cast %11 : vector<24xf32> to vector<24x1xf32>
    %cst_10 = arith.constant 1.280000e+02 : f32
    %13 = vector.broadcast %cst_10 : f32 to vector<24x1xf32>
    %14 = arith.divf %12, %13 : vector<24x1xf32>
    %15 = vector.broadcast %14 : vector<24x1xf32> to vector<24x128xf32>
    %16 = arith.subf %8, %15 : vector<24x128xf32>
    %17 = vector.broadcast %14 : vector<24x1xf32> to vector<24x128xf32>
    %18 = arith.subf %8, %17 : vector<24x128xf32>
    %19 = arith.mulf %16, %18 : vector<24x128xf32>
    %cst_11 = arith.constant dense<0.000000e+00> : vector<24xf32>
    %20 = vector.multi_reduction <add>, %19, %cst_11 [1] : vector<24x128xf32> to vector<24xf32>
    %21 = vector.shape_cast %20 : vector<24xf32> to vector<24x1xf32>
    %cst_12 = arith.constant 1.280000e+02 : f32
    %22 = vector.broadcast %cst_12 : f32 to vector<24x1xf32>
    %23 = arith.divf %21, %22 : vector<24x1xf32>
    %24 = vector.broadcast %14 : vector<24x1xf32> to vector<24x128xf32>
    %25 = arith.subf %8, %24 : vector<24x128xf32>
    %cst_13 = arith.constant 9.99999974E-6 : f32
    %26 = vector.broadcast %cst_13 : f32 to vector<24x1xf32>
    %27 = arith.addf %23, %26 : vector<24x1xf32>
    %28 = math.rsqrt %27 : vector<24x1xf32>
    %29 = vector.broadcast %28 : vector<24x1xf32> to vector<24x128xf32>
    %30 = arith.mulf %25, %29 : vector<24x128xf32>
    %c0_14 = arith.constant 0 : index
    %c0_15 = arith.constant 0 : index
    %31 = vector.load %arg5[%c0_14, %c0_15] : memref<1x128xf32, #tpu.memory_space<vmem>>, vector<1x128xf32>
    %32 = vector.broadcast %31 : vector<1x128xf32> to vector<24x128xf32>
    %33 = arith.mulf %30, %32 : vector<24x128xf32>
    %c0_16 = arith.constant 0 : index
    %c0_17 = arith.constant 0 : index
    %34 = vector.load %arg6[%c0_16, %c0_17] : memref<1x128xf32, #tpu.memory_space<vmem>>, vector<1x128xf32>
    %35 = vector.broadcast %34 : vector<1x128xf32> to vector<24x128xf32>
    %36 = arith.addf %33, %35 : vector<24x128xf32>
    %37 = arith.truncf %36 : vector<24x128xf32> to vector<24x128xbf16>
    %c0_18 = arith.constant 0 : index
    %c0_19 = arith.constant 0 : index
    %38 = vector.load %arg7[%c0_18, %c0_19] : memref<128x512xbf16, #tpu.memory_space<vmem>>, vector<128x512xbf16>
    %cst_20 = arith.constant dense<0.000000e+00> : vector<24x512xf32>
    %39 = tpu.matmul %37, %38, %cst_20 {dimension_numbers = #tpu.dot_dimension_numbers<[1], [0], [0], [1], [0, 0, 1, 1], [], []>} : vector<24x128xbf16>, vector<128x512xbf16>, vector<24x512xf32> -> vector<24x512xf32>
    %c0_21 = arith.constant 0 : index
    %c0_22 = arith.constant 0 : index
    %40 = vector.load %arg8[%c0_21, %c0_22] : memref<1x512xf32, #tpu.memory_space<vmem>>, vector<1x512xf32>
    %41 = vector.broadcast %40 : vector<1x512xf32> to vector<24x512xf32>
    %42 = arith.addf %39, %41 : vector<24x512xf32>
    %cst_23 = arith.constant 1.702000e+00 : f32
    %43 = vector.broadcast %cst_23 : f32 to vector<24x512xf32>
    %44 = arith.mulf %43, %42 : vector<24x512xf32>
    %45 = arith.negf %44 : vector<24x512xf32>
    %46 = math.exp %45 : vector<24x512xf32>
    %cst_24 = arith.constant 1.000000e+00 : f32
    %47 = vector.broadcast %cst_24 : f32 to vector<24x512xf32>
    %48 = arith.addf %47, %46 : vector<24x512xf32>
    %49 = arith.divf %47, %48 : vector<24x512xf32>
    %50 = arith.mulf %42, %49 : vector<24x512xf32>
    %51 = arith.truncf %50 : vector<24x512xf32> to vector<24x512xbf16>
    %c0_25 = arith.constant 0 : index
    %c0_26 = arith.constant 0 : index
    %52 = vector.load %arg10[%c0_25, %c0_26] : memref<24x512xbf16, #tpu.memory_space<vmem>>, vector<24x512xbf16>
    tpu.vector_store %arg10[%c0_25, %c0_26], %51 {strides = array<i32>} : memref<24x512xbf16, #tpu.memory_space<vmem>>, vector<24x512xbf16>,
    return
  }
  func.func @transform_0(%arg0: i32) -> (i32, i32) {
    %c0_i32 = arith.constant 0 : i32
    %c0_i32_0 = arith.constant 0 : i32
    return %arg0, %c0_i32 : i32, i32
  }
  func.func @transform_1(%arg0: i32) -> (i32, i32) {
    %c0_i32 = arith.constant 0 : i32
    %c0_i32_0 = arith.constant 0 : i32
    %c0_i32_1 = arith.constant 0 : i32
    return %c0_i32, %c0_i32_0 : i32, i32
  }
  func.func @transform_2(%arg0: i32) -> (i32, i32) {
    %c0_i32 = arith.constant 0 : i32
    %c0_i32_0 = arith.constant 0 : i32
    %c0_i32_1 = arith.constant 0 : i32
    return %c0_i32, %c0_i32_0 : i32, i32
  }
  func.func @transform_3(%arg0: i32) -> (i32, i32) {
    %c0_i32 = arith.constant 0 : i32
    %c0_i32_0 = arith.constant 0 : i32
    return %arg0, %c0_i32 : i32, i32
  }
  func.func @transform_4(%arg0: i32) -> (i32, i32) {
    %c0_i32 = arith.constant 0 : i32
    %c0_i32_0 = arith.constant 0 : i32
    %c0_i32_1 = arith.constant 0 : i32
    return %c0_i32, %c0_i32_0 : i32, i32
  }
  func.func @transform_5(%arg0: i32) -> (i32, i32) {
    %c0_i32 = arith.constant 0 : i32
    %c0_i32_0 = arith.constant 0 : i32
    %c0_i32_1 = arith.constant 0 : i32
    return %c0_i32, %c0_i32_0 : i32, i32
  }
  func.func @transform_6(%arg0: i32) -> (i32, i32) {
    %c0_i32 = arith.constant 0 : i32
    %c0_i32_0 = arith.constant 0 : i32
    %c0_i32_1 = arith.constant 0 : i32
    return %c0_i32, %c0_i32_0 : i32, i32
  }
  func.func @transform_7(%arg0: i32) -> (i32, i32) {
    %c0_i32 = arith.constant 0 : i32
    %c0_i32_0 = arith.constant 0 : i32
    %c0_i32_1 = arith.constant 0 : i32
    return %c0_i32, %c0_i32_0 : i32, i32
  }
  func.func @transform_8(%arg0: i32) -> (i32, i32) {
    %c0_i32 = arith.constant 0 : i32
    %c0_i32_0 = arith.constant 0 : i32
    return %arg0, %c0_i32 : i32, i32
  }
  func.func @transform_9(%arg0: i32) -> (i32, i32) {
    %c0_i32 = arith.constant 0 : i32
    %c0_i32_0 = arith.constant 0 : i32
    return %arg0, %c0_i32 : i32, i32
  }
}

module attributes {stable_mosaic.version = 11 : i64} {
  func.func @head_kernel(%arg0: memref<2x128xbf16, #tpu.memory_space<vmem>>, %arg1: memref<1x128xf32, #tpu.memory_space<vmem>>, %arg2: memref<1x128xf32, #tpu.memory_space<vmem>>, %arg3: memref<128x128xf32, #tpu.memory_space<vmem>>, %arg4: memref<128x64xf32, #tpu.memory_space<vmem>>, %arg5: memref<1x64xf32, #tpu.memory_space<vmem>>, %arg6: memref<64x128xf32, #tpu.memory_space<vmem>>, %arg7: memref<2x128xf32, #tpu.memory_space<vmem>>) attributes {dimension_semantics = [], scalar_prefetch = 0 : i64, scratch_operands = 0 : i64, tpu.core_type = #tpu.core_type<tc>} {
    %c0 = arith.constant 0 : index
    %c0_0 = arith.constant 0 : index
    %0 = vector.load %arg0[%c0, %c0_0] : memref<2x128xbf16, #tpu.memory_space<vmem>>, vector<2x128xbf16>
    %1 = arith.extf %0 : vector<2x128xbf16> to vector<2x128xf32>
    %cst = arith.constant dense<0.000000e+00> : vector<2xf32>
    %2 = vector.multi_reduction <add>, %1, %cst [1] : vector<2x128xf32> to vector<2xf32>
    %3 = vector.shape_cast %2 : vector<2xf32> to vector<2x1xf32>
    %cst_1 = arith.constant 1.280000e+02 : f32
    %4 = vector.broadcast %cst_1 : f32 to vector<2x1xf32>
    %5 = arith.divf %3, %4 : vector<2x1xf32>
    %6 = vector.broadcast %5 : vector<2x1xf32> to vector<2x128xf32>
    %7 = arith.subf %1, %6 : vector<2x128xf32>
    %8 = vector.broadcast %5 : vector<2x1xf32> to vector<2x128xf32>
    %9 = arith.subf %1, %8 : vector<2x128xf32>
    %10 = arith.mulf %7, %9 : vector<2x128xf32>
    %cst_2 = arith.constant dense<0.000000e+00> : vector<2xf32>
    %11 = vector.multi_reduction <add>, %10, %cst_2 [1] : vector<2x128xf32> to vector<2xf32>
    %12 = vector.shape_cast %11 : vector<2xf32> to vector<2x1xf32>
    %cst_3 = arith.constant 1.280000e+02 : f32
    %13 = vector.broadcast %cst_3 : f32 to vector<2x1xf32>
    %14 = arith.divf %12, %13 : vector<2x1xf32>
    %15 = vector.broadcast %5 : vector<2x1xf32> to vector<2x128xf32>
    %16 = arith.subf %1, %15 : vector<2x128xf32>
    %cst_4 = arith.constant 9.99999974E-6 : f32
    %17 = vector.broadcast %cst_4 : f32 to vector<2x1xf32>
    %18 = arith.addf %14, %17 : vector<2x1xf32>
    %19 = math.rsqrt %18 : vector<2x1xf32>
    %20 = vector.broadcast %19 : vector<2x1xf32> to vector<2x128xf32>
    %21 = arith.mulf %16, %20 : vector<2x128xf32>
    %c0_5 = arith.constant 0 : index
    %c0_6 = arith.constant 0 : index
    %22 = vector.load %arg1[%c0_5, %c0_6] : memref<1x128xf32, #tpu.memory_space<vmem>>, vector<1x128xf32>
    %23 = vector.broadcast %22 : vector<1x128xf32> to vector<2x128xf32>
    %24 = arith.mulf %21, %23 : vector<2x128xf32>
    %c0_7 = arith.constant 0 : index
    %c0_8 = arith.constant 0 : index
    %25 = vector.load %arg2[%c0_7, %c0_8] : memref<1x128xf32, #tpu.memory_space<vmem>>, vector<1x128xf32>
    %26 = vector.broadcast %25 : vector<1x128xf32> to vector<2x128xf32>
    %27 = arith.addf %24, %26 : vector<2x128xf32>
    %c0_9 = arith.constant 0 : index
    %c0_10 = arith.constant 0 : index
    %28 = vector.load %arg3[%c0_9, %c0_10] : memref<128x128xf32, #tpu.memory_space<vmem>>, vector<128x128xf32>
    %cst_11 = arith.constant dense<0.000000e+00> : vector<2x128xf32>
    %29 = tpu.matmul %27, %28, %cst_11 {dimension_numbers = #tpu.dot_dimension_numbers<[1], [0], [0], [1], [0, 0, 1, 1], [], []>} : vector<2x128xf32>, vector<128x128xf32>, vector<2x128xf32> -> vector<2x128xf32>
    %c0_12 = arith.constant 0 : index
    %c0_13 = arith.constant 0 : index
    %30 = vector.load %arg4[%c0_12, %c0_13] : memref<128x64xf32, #tpu.memory_space<vmem>>, vector<128x64xf32>
    %cst_14 = arith.constant dense<0.000000e+00> : vector<2x64xf32>
    %31 = tpu.matmul %29, %30, %cst_14 {dimension_numbers = #tpu.dot_dimension_numbers<[1], [0], [0], [1], [0, 0, 1, 1], [], []>} : vector<2x128xf32>, vector<128x64xf32>, vector<2x64xf32> -> vector<2x64xf32>
    %c0_15 = arith.constant 0 : index
    %c0_16 = arith.constant 0 : index
    %32 = vector.load %arg5[%c0_15, %c0_16] : memref<1x64xf32, #tpu.memory_space<vmem>>, vector<1x64xf32>
    %33 = vector.broadcast %32 : vector<1x64xf32> to vector<2x64xf32>
    %34 = arith.addf %31, %33 : vector<2x64xf32>
    %35 = arith.mulf %34, %34 : vector<2x64xf32>
    %cst_17 = arith.constant dense<0.000000e+00> : vector<2xf32>
    %36 = vector.multi_reduction <add>, %35, %cst_17 [1] : vector<2x64xf32> to vector<2xf32>
    %37 = vector.shape_cast %36 : vector<2xf32> to vector<2x1xf32>
    %cst_18 = arith.constant 1.000000e-24 : f32
    %38 = vector.broadcast %cst_18 : f32 to vector<2x1xf32>
    %39 = arith.maximumf %37, %38 : vector<2x1xf32>
    %40 = math.rsqrt %39 : vector<2x1xf32>
    %41 = vector.broadcast %40 : vector<2x1xf32> to vector<2x64xf32>
    %42 = arith.mulf %34, %41 : vector<2x64xf32>
    %c0_19 = arith.constant 0 : index
    %c0_20 = arith.constant 0 : index
    %43 = vector.load %arg6[%c0_19, %c0_20] : memref<64x128xf32, #tpu.memory_space<vmem>>, vector<64x128xf32>
    %cst_21 = arith.constant dense<0.000000e+00> : vector<2x128xf32>
    %44 = tpu.matmul %42, %43, %cst_21 {dimension_numbers = #tpu.dot_dimension_numbers<[1], [0], [0], [1], [0, 0, 1, 1], [], []>} : vector<2x64xf32>, vector<64x128xf32>, vector<2x128xf32> -> vector<2x128xf32>
    %c0_22 = arith.constant 0 : index
    %c0_23 = arith.constant 0 : index
    %45 = vector.load %arg7[%c0_22, %c0_23] : memref<2x128xf32, #tpu.memory_space<vmem>>, vector<2x128xf32>
    tpu.vector_store %arg7[%c0_22, %c0_23], %44 {strides = array<i32>} : memref<2x128xf32, #tpu.memory_space<vmem>>, vector<2x128xf32>,
    return
  }
}

</mosaic_0001>

<llo_original>
// kernel: clip_vit_forward.11
$region0: #{clip_vit_forward.11}
  #allocation0 [shape = 'u32[]', space=smem, size = 0x4, offset = 0x4, fixed_abs, tag = 'smem constant byte address 0x4 - core index']
  #allocation1 [shape = 'u32[72,128]{1,0:T(1,128)}', space=vmem, size = 0x9000, scoped, tag = 'internal scratch']
  %s0 = inlined_call_operand.vmem [shape: bf16[32,192], index: 0, kind: input, shape index: {}]
  %s1 = inlined_call_operand.vmem [shape: bf16[192,128], index: 1, kind: input, shape index: {}]
  %s2 = inlined_call_operand.vmem [shape: bf16[32,128], index: 2, kind: output, shape index: {}]
  %s3 = sld [smem:[#allocation0]]
  $region41: #{clip_vit_forward.11} parent=0
    _
  %s5 = ssub.s32 1, %s3
  %s6 = scalar_select 0, %s5, %s3
  loop: start=0, step=1, limit=4
  $region2: #{clip_vit_forward.11} parent=0 // loop_pre_header
    _
  $region3: #{clip_vit_forward.11} parent=0 // loop_header
    %s8 = sphi 0, %s12
    %p9 = scmp.ge.s32.totalorder %s8, 4
    %s18 = sphi 0, %s20
    %s21 = sphi 0, %s18
    %s22 = sphi 0, %s21
    %s38 = sphi 0, %s22
    %s42 = sphi 0, %s42
    %s44 = sphi 0, %s42
    %s45 = sphi 0, %s44
    %s59 = sphi 0, %s45
    %s65 = sphi 0, %s67
    %s68 = sphi 0, %s65
    %s69 = sphi 0, %s68
    %s85 = sphi 0, %s69
  $region4: #{clip_vit_forward.11} parent=0 // loop_header_branch
    %11 = sbr.rel (%p9) target = $region8
  $region5: #{clip_vit_forward.11} parent=0 // loop_body
    %s13 = ssub.s32 %s8, 1
    %s14 = ssub.s32 %s8, 2
    %s15 = sadd.s32 %s8, 1
    %s16 = ssub.s32 %s8, %s15
    %p17 = scmp.eq.s32.totalorder %s16, 0
    %s19 = sadd.s32 %s18, 1
    %s20 = scalar_select %p17, %s18, %s19
    %p23 = pneg %p17
    %p24 = scmp.eq.s32.totalorder %s8, 1
    %p25 = por %p23, %p24
    %p26 = scmp.ne.s32.totalorder %s18, %s21
    %p27 = scmp.eq.s32.totalorder %s8, 0
    %p28 = por %p26, %p27
    %p29 = scmp.ne.s32.totalorder %s18, %s21
    %p30 = scmp.eq.s32.totalorder %s13, 1
    %p31 = por %p29, %p30
    %p32 = scmp.ne.s32.totalorder %s21, %s22
    %p33 = scmp.eq.s32.totalorder %s13, 0
    %p34 = por %p32, %p33
    %p35 = scmp.ne.s32.totalorder %s21, %s22
    %p36 = scmp.eq.s32.totalorder %s14, 1
    %p37 = por %p35, %p36
    %p39 = scmp.ne.s32.totalorder %s22, %s38
    %p40 = scmp.eq.s32.totalorder %s14, 0
    %p41 = por %p39, %p40
    %s43 = sadd.s32 %s42, 1
    %p46 = scmp.eq.s32.totalorder %s8, 1
    %p47 = scmp.ne.s32.totalorder %s42, %s44
    %p48 = scmp.eq.s32.totalorder %s8, 0
    %p49 = por %p47, %p48
    %p50 = scmp.ne.s32.totalorder %s42, %s44
    %p51 = scmp.eq.s32.totalorder %s13, 1
    %p52 = por %p50, %p51
    %p53 = scmp.ne.s32.totalorder %s44, %s45
    %p54 = scmp.eq.s32.totalorder %s13, 0
    %p55 = por %p53, %p54
    %p56 = scmp.ne.s32.totalorder %s44, %s45
    %p57 = scmp.eq.s32.totalorder %s14, 1
    %p58 = por %p56, %p57
    %p60 = scmp.ne.s32.totalorder %s45, %s59
    %p61 = scmp.eq.s32.totalorder %s14, 0
    %p62 = por %p60, %p61
    %s63 = ssub.s32 %s8, %s15
    %p64 = scmp.eq.s32.totalorder %s63, 0
    %s66 = sadd.s32 %s65, 1
    %s67 = scalar_select %p64, %s65, %s66
    %p70 = pneg %p64
    %p71 = scmp.eq.s32.totalorder %s8, 1
    %p72 = por %p70, %p71
    %p73 = scmp.ne.s32.totalorder %s65, %s68
    %p74 = scmp.eq.s32.totalorder %s8, 0
    %p75 = por %p73, %p74
    %p76 = scmp.ne.s32.totalorder %s65, %s68
    %p77 = scmp.eq.s32.totalorder %s13, 1
    %p78 = por %p76, %p77
    %p79 = scmp.ne.s32.totalorder %s68, %s69
    %p80 = scmp.eq.s32.totalorder %s13, 0
    %p81 = por %p79, %p80
    %p82 = scmp.ne.s32.totalorder %s68, %s69
    %p83 = scmp.eq.s32.totalorder %s14, 1
    %p84 = por %p82, %p83
    %p86 = scmp.ne.s32.totalorder %s69, %s85
    %p87 = scmp.eq.s32.totalorder %s14, 0
    %p88 = por %p86, %p87
    %p89 = scmp.le.s32.totalorder 1, %s8
    %p90 = scmp.lt.s32.totalorder %s8, 3
    %p91 = pnand %p89, %p90
    %p92 = pneg %p91
    // Predicated region
    $region9: #{clip_vit_forward.11} parent=5 // pred_check
      _
    $region10: #{clip_vit_forward.11} parent=5 // pred_check_branch
      %94 = sbr.rel (%p91) target = $region12
    $region11: #{clip_vit_forward.11} parent=5 // pred_region
      %s95 = ssub.s32 %s8, 1
      // Predicated region
      $region13: #{clip_vit_forward.11} parent=11 // pred_check
        %p96 = pneg %p55
      $region14: #{clip_vit_forward.11} parent=11 // pred_check_branch
        %98 = sbr.rel (%p96) target = $region16
      $region15: #{clip_vit_forward.11} parent=11 // pred_region
        _
      $region16: #{clip_vit_forward.11} parent=11 // pred_fallthru
        _
    $region12: #{clip_vit_forward.11} parent=5 // pred_fallthru
      _
    %p99 = scmp.lt.s32.totalorder %s8, 2
    // Predicated region
    $region17: #{clip_vit_forward.11} parent=5 // pred_check
      %p100 = pneg %p99
    $region18: #{clip_vit_forward.11} parent=5 // pred_check_branch
      %102 = sbr.rel (%p100) target = $region20
    $region19: #{clip_vit_forward.11} parent=5 // pred_region
      // Predicated region
      $region21: #{clip_vit_forward.11} parent=19 // pred_check
        %p103 = pneg %p28
      $region22: #{clip_vit_forward.11} parent=19 // pred_check_branch
        %105 = sbr.rel (%p103) target = $region24
      $region23: #{clip_vit_forward.11} parent=19 // pred_region
        %s106 = smul.u32 2, %s8
        %p107 = scmp.lt.s32.totalorder %s106, 3
        %s108 = scalar_select %p107, %s106, 3
        %s109 = smul.addr %s108, 2
        %s110 = smul.addr %s109, 4
        %s111 = scalar_lea.vmem %s0, %s110
        %s112 = smul.u32 2, %s8
      $region24: #{clip_vit_forward.11} parent=19 // pred_fallthru
        _
    $region20: #{clip_vit_forward.11} parent=5 // pred_fallthru
      _
    %p113 = scmp.le.s32.totalorder 1, %s8
    %p114 = scmp.lt.s32.totalorder %s8, 3
    %p115 = pnand %p113, %p114
    %p116 = pneg %p115
    // Predicated region
    $region25: #{clip_vit_forward.11} parent=5 // pred_check
      _
    $region26: #{clip_vit_forward.11} parent=5 // pred_check_branch
      %118 = sbr.rel (%p115) target = $region28
    $region27: #{clip_vit_forward.11} parent=5 // pred_region
      %s119 = ssub.s32 %s8, 1
      %s120 = smul.u32 2, %s13
      %p121 = scmp.lt.s32.totalorder %s120, 3
      %s122 = scalar_select %p121, %s120, 3
      %s123 = smul.addr %s122, 2
      %s124 = smul.addr %s123, 4
      %s125 = scalar_lea.vmem %s0, %s124
      %p126 = pneg %p34
      %p127 = pneg %p31
      %p128 = pneg %p55
      %p129 = pneg %p52
      %p130 = pneg %p81
      %p131 = pneg %p78
      %s132 = smul.u32 2, %s13
      %p133 = scmp.lt.s32.totalorder %s132, 3
      %s134 = scalar_select %p133, %s132, 3
      %s135 = smul.addr %s134, 4
      %s136 = scalar_lea.vmem %s2, %s135
      %s137 = smul.u32 2, %s13
      %p138 = scmp.lt.s32.totalorder %s137, 3
      %s139 = scalar_select %p138, %s137, 3
      %s140 = smul.addr %s139, 2
      %s141 = smul.addr %s140, 4
      %s142 = scalar_lea.vmem %s0, %s141
      %s143 = smul.u32 2, %s13
      %s144 = smul.u32 2, %s13
      %p145 = scmp.lt.s32.totalorder %s144, 3
      %s146 = scalar_select %p145, %s144, 3
      %s147 = smul.addr %s146, 4
      %s148 = scalar_lea.vmem %s2, %s147
      %s149 = smul.u32 2, %s13
      %v151 = vld [vmem:[%s142] sm:$0xff]
      %v152 = vld [vmem:[%s142 + $0x8] sm:$0xff]
      %v153 = vld [vmem:[%s1] sm:$0xf]
      %v154 = vld [vmem:[%s1 + $0x4] sm:$0xf]
      %v155 = vld [vmem:[%s1 + $0x8] sm:$0xf]
      %v156 = vld [vmem:[%s1 + $0xc] sm:$0xf]
      %v157 = vld [vmem:[%s1 + $0x10] sm:$0xf]
      %v158 = vld [vmem:[%s1 + $0x14] sm:$0xf]
      %v159 = vld [vmem:[%s1 + $0x18] sm:$0xf]
      %v160 = vld [vmem:[%s1 + $0x1c] sm:$0xf]
      %v161 = vld [vmem:[%s1 + $0x20] sm:$0xf]
      %v162 = vld [vmem:[%s1 + $0x24] sm:$0xf]
      %v163 = vld [vmem:[%s1 + $0x28] sm:$0xf]
      %v164 = vld [vmem:[%s1 + $0x2c] sm:$0xf]
      %v165 = vld [vmem:[%s1 + $0x30] sm:$0xf]
      %v166 = vld [vmem:[%s1 + $0x34] sm:$0xf]
      %v167 = vld [vmem:[%s1 + $0x38] sm:$0xf]
      %v168 = vld [vmem:[%s1 + $0x3c] sm:$0xf]
      %v169 = vld [vmem:[%s1 + $0x40] sm:$0xf]
      %v170 = vld [vmem:[%s1 + $0x44] sm:$0xf]
      %v171 = vld [vmem:[%s1 + $0x48] sm:$0xf]
      %v172 = vld [vmem:[%s1 + $0x4c] sm:$0xf]
      %v173 = vld [vmem:[%s1 + $0x50] sm:$0xf]
      %v174 = vld [vmem:[%s1 + $0x54] sm:$0xf]
      %v175 = vld [vmem:[%s1 + $0x58] sm:$0xf]
      %v176 = vld [vmem:[%s1 + $0x5c] sm:$0xf]
      %v179 = vunpack.c.l.b16 %v151
      %v180 = vunpack.c.h.b16 %v151
      %v181 = vunpack.c.l.b16 %v152
      %v182 = vunpack.c.h.b16 %v152
      %v183 = vpack.c.b16 %v181, %v179
      %v184 = vpack.c.b16 %v182, %v180
      %v210 = vunpack.c.l.b16 %v153
      %v211 = vunpack.c.l.b16 %v154
      %v212 = vunpack.c.l.b16 %v155
      %v213 = vunpack.c.l.b16 %v156
      %v214 = vunpack.c.l.b16 %v157
      %v215 = vunpack.c.l.b16 %v158
      %v216 = vunpack.c.l.b16 %v159
      %v217 = vunpack.c.l.b16 %v160
      %v218 = vunpack.c.l.b16 %v161
      %v219 = vunpack.c.l.b16 %v162
      %v220 = vunpack.c.l.b16 %v163
      %v221 = vunpack.c.l.b16 %v164
      %v222 = vunpack.c.l.b16 %v165
      %v223 = vunpack.c.l.b16 %v166
      %v224 = vunpack.c.l.b16 %v167
      %v225 = vunpack.c.l.b16 %v168
      %v226 = vunpack.c.l.b16 %v169
      %v227 = vunpack.c.l.b16 %v170
      %v228 = vunpack.c.l.b16 %v171
      %v229 = vunpack.c.l.b16 %v172
      %v230 = vunpack.c.l.b16 %v173
      %v231 = vunpack.c.l.b16 %v174
      %v232 = vunpack.c.l.b16 %v175
      %v233 = vunpack.c.l.b16 %v176
      %v234 = vpack.c.b16 %v211, %v210
      %v235 = vpack.c.b16 %v213, %v212
      %v236 = vpack.c.b16 %v215, %v214
      %v237 = vpack.c.b16 %v217, %v216
      %v238 = vpack.c.b16 %v219, %v218
      %v239 = vpack.c.b16 %v221, %v220
      %v240 = vpack.c.b16 %v223, %v222
      %v241 = vpack.c.b16 %v225, %v224
      %v242 = vpack.c.b16 %v227, %v226
      %v243 = vpack.c.b16 %v229, %v228
      %v244 = vpack.c.b16 %v231, %v230
      %v245 = vpack.c.b16 %v233, %v232
      %vm258 = vcmask 523264
      %v260 = vsel %vm258, %v184, 0
      %262 = vmatpush.bf16.msra.mxu0 %v241
      %263 = vmatpush.bf16.msra.mxu0 %v240
      %264 = vmatpush.bf16.msra.mxu0 %v239
      %265 = vmatpush.bf16.msra.mxu0 %v238
      %266 = vmatpush.bf16.msra.mxu0 %v237
      %267 = vmatpush.bf16.msra.mxu0 %v236
      %268 = vmatpush.bf16.msra.mxu0 %v235
      %269 = vmatpush.bf16.msra.mxu0 %v234
      %270 = vmatmul.bf16.gmra.mxu0 %v183
      %v271 = vpop.f32.mrf.mxu0
      %v272 = vadd.f32 0.0, %v271
      %v273 = vpop.f32.mrf.mxu0
      %v274 = vadd.f32 0.0, %v273
      %275 = vdwg.mxu0
      %276 = vmatpush.bf16.msra.mxu0 0
      %277 = vmatpush.bf16.msra.mxu0 0
      %278 = vmatpush.bf16.msra.mxu0 0
      %279 = vmatpush.bf16.msra.mxu0 0
      %280 = vmatpush.bf16.msra.mxu0 %v245
      %281 = vmatpush.bf16.msra.mxu0 %v244
      %282 = vmatpush.bf16.msra.mxu0 %v243
      %283 = vmatpush.bf16.msra.mxu0 %v242
      %284 = vmatmul.bf16.gmra.mxu0 %v260
      %v285 = vpop.f32.mrf.mxu0
      %v286 = vadd.f32 %v272, %v285
      %v287 = vpop.f32.mrf.mxu0
      %v288 = vadd.f32 %v274, %v287
      %289 = vdwg.mxu0
      %v290 = vpack.c.bf16 %v286, %v286
      %v291 = vpack.c.bf16 %v288, %v288
      %292 = vst [vmem:[%s148] sm:$0xf] %v290
      %293 = vst [vmem:[%s148 + $0x4] sm:$0xf] %v291
      %s294 = smul.u32 2, %s13
      %p295 = scmp.lt.s32.totalorder %s294, 3
      %s296 = scalar_select %p295, %s294, 3
      %s297 = smul.addr %s296, 4
      %s298 = scalar_lea.vmem %s2, %s297
      // Predicated region
      $region29: #{clip_vit_forward.11} parent=27 // pred_check
        %p299 = pneg %p78
      $region30: #{clip_vit_forward.11} parent=27 // pred_check_branch
        %301 = sbr.rel (%p299) target = $region32
      $region31: #{clip_vit_forward.11} parent=27 // pred_region
        %s302 = smul.u32 2, %s13
      $region32: #{clip_vit_forward.11} parent=27 // pred_fallthru
        _
    $region28: #{clip_vit_forward.11} parent=5 // pred_fallthru
      _
    %p303 = scmp.le.s32.totalorder 2, %s8
    // Predicated region
    $region33: #{clip_vit_forward.11} parent=5 // pred_check
      %p304 = pneg %p303
    $region34: #{clip_vit_forward.11} parent=5 // pred_check_branch
      %306 = sbr.rel (%p304) target = $region36
    $region35: #{clip_vit_forward.11} parent=5 // pred_region
      %s307 = ssub.s32 %s8, 2
      // Predicated region
      $region37: #{clip_vit_forward.11} parent=35 // pred_check
        %p308 = pneg %p84
      $region38: #{clip_vit_forward.11} parent=35 // pred_check_branch
        %310 = sbr.rel (%p308) target = $region40
      $region39: #{clip_vit_forward.11} parent=35 // pred_region
        %s311 = smul.u32 2, %s14
        %p312 = scmp.lt.s32.totalorder %s311, 3
        %s313 = scalar_select %p312, %s311, 3
        %s314 = smul.addr %s313, 4
        %s315 = scalar_lea.vmem %s2, %s314
      $region40: #{clip_vit_forward.11} parent=35 // pred_fallthru
        _
    $region36: #{clip_vit_forward.11} parent=5 // pred_fallthru
      _
  $region6: #{clip_vit_forward.11} parent=0 // loop_footer
    %s12 = sadd.s32 1, %s8
  $region7: #{clip_vit_forward.11} parent=0 // loop_footer_branch
    %7 = sbr.rel target = $region3
  $region8: #{clip_vit_forward.11} parent=0 // loop_exit
    _

// kernel: clip_vit_forward.12
$region0: #{clip_vit_forward.12}
  #allocation0 [shape = 'u32[]', space=smem, size = 0x4, offset = 0x4, fixed_abs, tag = 'smem constant byte address 0x4 - core index']
  #allocation1 [shape = 'u32[72,128]{1,0:T(1,128)}', space=vmem, size = 0x9000, scoped, tag = 'internal scratch']
  %s0 = inlined_call_operand.vmem [shape: bf16[2,24,128], index: 0, kind: input, shape index: {}]
  %s1 = inlined_call_operand.vmem [shape: f32[24,128], index: 1, kind: input, shape index: {}]
  %s2 = inlined_call_operand.vmem [shape: f32[1,128], index: 2, kind: input, shape index: {}]
  %s3 = inlined_call_operand.vmem [shape: f32[1,128], index: 3, kind: input, shape index: {}]
  %s4 = inlined_call_operand.vmem [shape: bf16[2,24,128], index: 4, kind: output, shape index: {}]
  %s5 = sld [smem:[#allocation0]]
  $region49: #{clip_vit_forward.12} parent=0
    _
  %s7 = ssub.s32 1, %s5
  %s8 = scalar_select 0, %s7, %s5
  loop: start=0, step=1, limit=4
  $region2: #{clip_vit_forward.12} parent=0 // loop_pre_header
    _
  $region3: #{clip_vit_forward.12} parent=0 // loop_header
    %s10 = sphi 0, %s14
    %p11 = scmp.ge.s32.totalorder %s10, 4
    %s20 = sphi 0, %s22
    %s23 = sphi 0, %s20
    %s24 = sphi 0, %s23
    %s40 = sphi 0, %s24
    %s44 = sphi 0, %s44
    %s46 = sphi 0, %s44
    %s47 = sphi 0, %s46
    %s61 = sphi 0, %s47
    %s65 = sphi 0, %s65
    %s67 = sphi 0, %s65
    %s68 = sphi 0, %s67
    %s82 = sphi 0, %s68
    %s86 = sphi 0, %s86
    %s88 = sphi 0, %s86
    %s89 = sphi 0, %s88
    %s103 = sphi 0, %s89
    %s109 = sphi 0, %s111
    %s112 = sphi 0, %s109
    %s113 = sphi 0, %s112
    %s129 = sphi 0, %s113
  $region4: #{clip_vit_forward.12} parent=0 // loop_header_branch
    %13 = sbr.rel (%p11) target = $region8
  $region5: #{clip_vit_forward.12} parent=0 // loop_body
    %s15 = ssub.s32 %s10, 1
    %s16 = ssub.s32 %s10, 2
    %s17 = sadd.s32 %s10, 1
    %s18 = ssub.s32 %s10, %s17
    %p19 = scmp.eq.s32.totalorder %s18, 0
    %s21 = sadd.s32 %s20, 1
    %s22 = scalar_select %p19, %s20, %s21
    %p25 = pneg %p19
    %p26 = scmp.eq.s32.totalorder %s10, 1
    %p27 = por %p25, %p26
    %p28 = scmp.ne.s32.totalorder %s20, %s23
    %p29 = scmp.eq.s32.totalorder %s10, 0
    %p30 = por %p28, %p29
    %p31 = scmp.ne.s32.totalorder %s20, %s23
    %p32 = scmp.eq.s32.totalorder %s15, 1
    %p33 = por %p31, %p32
    %p34 = scmp.ne.s32.totalorder %s23, %s24
    %p35 = scmp.eq.s32.totalorder %s15, 0
    %p36 = por %p34, %p35
    %p37 = scmp.ne.s32.totalorder %s23, %s24
    %p38 = scmp.eq.s32.totalorder %s16, 1
    %p39 = por %p37, %p38
    %p41 = scmp.ne.s32.totalorder %s24, %s40
    %p42 = scmp.eq.s32.totalorder %s16, 0
    %p43 = por %p41, %p42
    %s45 = sadd.s32 %s44, 1
    %p48 = scmp.eq.s32.totalorder %s10, 1
    %p49 = scmp.ne.s32.totalorder %s44, %s46
    %p50 = scmp.eq.s32.totalorder %s10, 0
    %p51 = por %p49, %p50
    %p52 = scmp.ne.s32.totalorder %s44, %s46
    %p53 = scmp.eq.s32.totalorder %s15, 1
    %p54 = por %p52, %p53
    %p55 = scmp.ne.s32.totalorder %s46, %s47
    %p56 = scmp.eq.s32.totalorder %s15, 0
    %p57 = por %p55, %p56
    %p58 = scmp.ne.s32.totalorder %s46, %s47
    %p59 = scmp.eq.s32.totalorder %s16, 1
    %p60 = por %p58, %p59
    %p62 = scmp.ne.s32.totalorder %s47, %s61
    %p63 = scmp.eq.s32.totalorder %s16, 0
    %p64 = por %p62, %p63
    %s66 = sadd.s32 %s65, 1
    %p69 = scmp.eq.s32.totalorder %s10, 1
    %p70 = scmp.ne.s32.totalorder %s65, %s67
    %p71 = scmp.eq.s32.totalorder %s10, 0
    %p72 = por %p70, %p71
    %p73 = scmp.ne.s32.totalorder %s65, %s67
    %p74 = scmp.eq.s32.totalorder %s15, 1
    %p75 = por %p73, %p74
    %p76 = scmp.ne.s32.totalorder %s67, %s68
    %p77 = scmp.eq.s32.totalorder %s15, 0
    %p78 = por %p76, %p77
    %p79 = scmp.ne.s32.totalorder %s67, %s68
    %p80 = scmp.eq.s32.totalorder %s16, 1
    %p81 = por %p79, %p80
    %p83 = scmp.ne.s32.totalorder %s68, %s82
    %p84 = scmp.eq.s32.totalorder %s16, 0
    %p85 = por %p83, %p84
    %s87 = sadd.s32 %s86, 1
    %p90 = scmp.eq.s32.totalorder %s10, 1
    %p91 = scmp.ne.s32.totalorder %s86, %s88
    %p92 = scmp.eq.s32.totalorder %s10, 0
    %p93 = por %p91, %p92
    %p94 = scmp.ne.s32.totalorder %s86, %s88
    %p95 = scmp.eq.s32.totalorder %s15, 1
    %p96 = por %p94, %p95
    %p97 = scmp.ne.s32.totalorder %s88, %s89
    %p98 = scmp.eq.s32.totalorder %s15, 0
    %p99 = por %p97, %p98
    %p100 = scmp.ne.s32.totalorder %s88, %s89
    %p101 = scmp.eq.s32.totalorder %s16, 1
    %p102 = por %p100, %p101
    %p104 = scmp.ne.s32.totalorder %s89, %s103
    %p105 = scmp.eq.s32.totalorder %s16, 0
    %p106 = por %p104, %p105
    %s107 = ssub.s32 %s10, %s17
    %p108 = scmp.eq.s32.totalorder %s107, 0
    %s110 = sadd.s32 %s109, 1
    %s111 = scalar_select %p108, %s109, %s110
    %p114 = pneg %p108
    %p115 = scmp.eq.s32.totalorder %s10, 1
    %p116 = por %p114, %p115
    %p117 = scmp.ne.s32.totalorder %s109, %s112
    %p118 = scmp.eq.s32.totalorder %s10, 0
    %p119 = por %p117, %p118
    %p120 = scmp.ne.s32.totalorder %s109, %s112
    %p121 = scmp.eq.s32.totalorder %s15, 1
    %p122 = por %p120, %p121
    %p123 = scmp.ne.s32.totalorder %s112, %s113
    %p124 = scmp.eq.s32.totalorder %s15, 0
    %p125 = por %p123, %p124
    %p126 = scmp.ne.s32.totalorder %s112, %s113
    %p127 = scmp.eq.s32.totalorder %s16, 1
    %p128 = por %p126, %p127
    %p130 = scmp.ne.s32.totalorder %s113, %s129
    %p131 = scmp.eq.s32.totalorder %s16, 0
    %p132 = por %p130, %p131
    %p133 = scmp.le.s32.totalorder 1, %s10
    %p134 = scmp.lt.s32.totalorder %s10, 3
    %p135 = pnand %p133, %p134
    %p136 = pneg %p135
    // Predicated region
    $region9: #{clip_vit_forward.12} parent=5 // pred_check
      _
    $region10: #{clip_vit_forward.12} parent=5 // pred_check_branch
      %138 = sbr.rel (%p135) target = $region12
    $region11: #{clip_vit_forward.12} parent=5 // pred_region
      %s139 = ssub.s32 %s10, 1
      // Predicated region
      $region13: #{clip_vit_forward.12} parent=11 // pred_check
        %p140 = pneg %p57
      $region14: #{clip_vit_forward.12} parent=11 // pred_check_branch
        %142 = sbr.rel (%p140) target = $region16
      $region15: #{clip_vit_forward.12} parent=11 // pred_region
        _
      $region16: #{clip_vit_forward.12} parent=11 // pred_fallthru
        _
      // Predicated region
      $region17: #{clip_vit_forward.12} parent=11 // pred_check
        %p143 = pneg %p78
      $region18: #{clip_vit_forward.12} parent=11 // pred_check_branch
        %145 = sbr.rel (%p143) target = $region20
      $region19: #{clip_vit_forward.12} parent=11 // pred_region
        _
      $region20: #{clip_vit_forward.12} parent=11 // pred_fallthru
        _
      // Predicated region
      $region21: #{clip_vit_forward.12} parent=11 // pred_check
        %p146 = pneg %p99
      $region22: #{clip_vit_forward.12} parent=11 // pred_check_branch
        %148 = sbr.rel (%p146) target = $region24
      $region23: #{clip_vit_forward.12} parent=11 // pred_region
        _
      $region24: #{clip_vit_forward.12} parent=11 // pred_fallthru
        _
    $region12: #{clip_vit_forward.12} parent=5 // pred_fallthru
      _
    %p149 = scmp.lt.s32.totalorder %s10, 2
    // Predicated region
    $region25: #{clip_vit_forward.12} parent=5 // pred_check
      %p150 = pneg %p149
    $region26: #{clip_vit_forward.12} parent=5 // pred_check_branch
      %152 = sbr.rel (%p150) target = $region28
    $region27: #{clip_vit_forward.12} parent=5 // pred_region
      // Predicated region
      $region29: #{clip_vit_forward.12} parent=27 // pred_check
        %p153 = pneg %p30
      $region30: #{clip_vit_forward.12} parent=27 // pred_check_branch
        %155 = sbr.rel (%p153) target = $region32
      $region31: #{clip_vit_forward.12} parent=27 // pred_region
        %p156 = scmp.lt.s32.totalorder %s10, 1
        %s157 = scalar_select %p156, %s10, 1
        %s158 = smul.addr %s157, 3
        %s159 = smul.addr %s158, 4
        %s160 = scalar_lea.vmem %s0, %s159
      $region32: #{clip_vit_forward.12} parent=27 // pred_fallthru
        _
    $region28: #{clip_vit_forward.12} parent=5 // pred_fallthru
      _
    %p161 = scmp.le.s32.totalorder 1, %s10
    %p162 = scmp.lt.s32.totalorder %s10, 3
    %p163 = pnand %p161, %p162
    %p164 = pneg %p163
    // Predicated region
    $region33: #{clip_vit_forward.12} parent=5 // pred_check
      _
    $region34: #{clip_vit_forward.12} parent=5 // pred_check_branch
      %166 = sbr.rel (%p163) target = $region36
    $region35: #{clip_vit_forward.12} parent=5 // pred_region
      %s167 = ssub.s32 %s10, 1
      %p168 = scmp.lt.s32.totalorder %s15, 1
      %s169 = scalar_select %p168, %s15, 1
      %s170 = smul.addr %s169, 3
      %s171 = smul.addr %s170, 4
      %s172 = scalar_lea.vmem %s0, %s171
      %p173 = pneg %p36
      %p174 = pneg %p33
      %p175 = pneg %p57
      %p176 = pneg %p54
      %p177 = pneg %p78
      %p178 = pneg %p75
      %p179 = pneg %p99
      %p180 = pneg %p96
      %p181 = pneg %p125
      %p182 = pneg %p122
      %p183 = scmp.lt.s32.totalorder %s15, 1
      %s184 = scalar_select %p183, %s15, 1
      %s185 = smul.addr %s184, 3
      %s186 = smul.addr %s185, 4
      %s187 = scalar_lea.vmem %s4, %s186
      %p188 = scmp.lt.s32.totalorder %s15, 1
      %s189 = scalar_select %p188, %s15, 1
      %s190 = smul.addr %s189, 3
      %s191 = smul.addr %s190, 4
      %s192 = scalar_lea.vmem %s0, %s191
      %p193 = scmp.lt.s32.totalorder %s15, 1
      %s194 = scalar_select %p193, %s15, 1
      %s195 = smul.addr %s194, 3
      %s196 = smul.addr %s195, 4
      %s197 = scalar_lea.vmem %s4, %s196
      %v198 = vld [vmem:[%s192] sm:$0xf]
      %v199 = vld [vmem:[%s192 + $0x4] sm:$0xf]
      %v200 = vld [vmem:[%s192 + $0x8] sm:$0xf]
      %v201 = vunpack.c.l.bf16 %v198
      %v202 = vunpack.c.l.bf16 %v199
      %v203 = vunpack.c.l.bf16 %v200
      %v204 = vld [vmem:[%s1] sm:$0xff]
      %v205 = vld [vmem:[%s1 + $0x8] sm:$0xff]
      %v206 = vld [vmem:[%s1 + $0x10] sm:$0xff]
      %v207 = vadd.f32 %v201, %v204
      %v208 = vadd.f32 %v202, %v205
      %v209 = vadd.f32 %v203, %v206
      %210 = vadd.xlane.f32.xlu0 %v207
      %v211 = vpop.xlane.xlu0 %210
      %212 = vadd.xlane.f32.xlu0 %v208
      %v213 = vpop.xlane.xlu0 %212
      %214 = vadd.xlane.f32.xlu0 %v209
      %v215 = vpop.xlane.xlu0 %214
      %v216 = vrcp.pop 128.0
      %v217 = vmul.f32 128.0, %v216
      %v218 = vsub.f32 1.0, %v217
      %v219 = vmul.f32 %v216, %v218
      %v220 = vadd.f32 %v216, %v219
      %vm221 = vweird.f32 %v216
      %v222 = vsel %vm221, %v216, %v220
      %v223 = vmul.f32 %v211, %v222
      %v224 = vmul.f32 %v213, %v222
      %v225 = vmul.f32 %v215, %v222
      %v226 = vsub.f32 %v207, %v223
      %v227 = vsub.f32 %v208, %v224
      %v228 = vsub.f32 %v209, %v225
      %v229 = vmul.f32 %v226, %v226
      %v230 = vmul.f32 %v227, %v227
      %v231 = vmul.f32 %v228, %v228
      %232 = vadd.xlane.f32.xlu0 %v229
      %v233 = vpop.xlane.xlu0 %232
      %234 = vadd.xlane.f32.xlu0 %v230
      %v235 = vpop.xlane.xlu0 %234
      %236 = vadd.xlane.f32.xlu0 %v231
      %v237 = vpop.xlane.xlu0 %236
      %v238 = vmul.f32 %v233, %v222
      %v239 = vmul.f32 %v235, %v222
      %v240 = vmul.f32 %v237, %v222
      %v241 = vadd.f32 %v238, 1e-05
      %v242 = vadd.f32 %v239, 1e-05
      %v243 = vadd.f32 %v240, 1e-05
      %v244 = vrsqrt.pop %v241
      %v245 = vmul.f32 %v244, %v241
      %v246 = vmul.f32 %v245, %v244
      %v247 = vmul.f32 0.5, %v246
      %v248 = vsub.f32 1.5, %v247
      %v249 = vmul.f32 %v244, %v248
      %vm250 = vweird.f32 %v241
      %vm251 = vweird.f32 %v244
      %vm252 = vmor %vm250, %vm251
      %v253 = vsel %vm252, %v244, %v249
      %v254 = vrsqrt.pop %v242
      %v255 = vmul.f32 %v254, %v242
      %v256 = vmul.f32 %v255, %v254
      %v257 = vmul.f32 0.5, %v256
      %v258 = vsub.f32 1.5, %v257
      %v259 = vmul.f32 %v254, %v258
      %vm260 = vweird.f32 %v242
      %vm261 = vweird.f32 %v254
      %vm262 = vmor %vm260, %vm261
      %v263 = vsel %vm262, %v254, %v259
      %v264 = vrsqrt.pop %v243
      %v265 = vmul.f32 %v264, %v243
      %v266 = vmul.f32 %v265, %v264
      %v267 = vmul.f32 0.5, %v266
      %v268 = vsub.f32 1.5, %v267
      %v269 = vmul.f32 %v264, %v268
      %vm270 = vweird.f32 %v243
      %vm271 = vweird.f32 %v264
      %vm272 = vmor %vm270, %vm271
      %v273 = vsel %vm272, %v264, %v269
      %v274 = vmul.f32 %v226, %v253
      %v275 = vmul.f32 %v227, %v263
      %v276 = vmul.f32 %v228, %v273
      %v277 = vld [vmem:[%s2] sm:$0x1]
      %v279 = vperm.slane %v277, 0
      %v281 = vmul.f32 %v274, %v279
      %v282 = vmul.f32 %v275, %v279
      %v283 = vmul.f32 %v276, %v279
      %v284 = vld [vmem:[%s3] sm:$0x1]
      %v286 = vperm.slane %v284, 0
      %v288 = vadd.f32 %v281, %v286
      %v289 = vadd.f32 %v282, %v286
      %v290 = vadd.f32 %v283, %v286
      %v291 = vpack.c.bf16 %v288, %v288
      %v292 = vpack.c.bf16 %v289, %v289
      %v293 = vpack.c.bf16 %v290, %v290
      %294 = vst [vmem:[%s197] sm:$0xf] %v291
      %295 = vst [vmem:[%s197 + $0x4] sm:$0xf] %v292
      %296 = vst [vmem:[%s197 + $0x8] sm:$0xf] %v293
      %p297 = scmp.lt.s32.totalorder %s15, 1
      %s298 = scalar_select %p297, %s15, 1
      %s299 = smul.addr %s298, 3
      %s300 = smul.addr %s299, 4
      %s301 = scalar_lea.vmem %s4, %s300
      // Predicated region
      $region37: #{clip_vit_forward.12} parent=35 // pred_check
        %p302 = pneg %p122
      $region38: #{clip_vit_forward.12} parent=35 // pred_check_branch
        %304 = sbr.rel (%p302) target = $region40
      $region39: #{clip_vit_forward.12} parent=35 // pred_region
        _
      $region40: #{clip_vit_forward.12} parent=35 // pred_fallthru
        _
    $region36: #{clip_vit_forward.12} parent=5 // pred_fallthru
      _
    %p305 = scmp.le.s32.totalorder 2, %s10
    // Predicated region
    $region41: #{clip_vit_forward.12} parent=5 // pred_check
      %p306 = pneg %p305
    $region42: #{clip_vit_forward.12} parent=5 // pred_check_branch
      %308 = sbr.rel (%p306) target = $region44
    $region43: #{clip_vit_forward.12} parent=5 // pred_region
      %s309 = ssub.s32 %s10, 2
      // Predicated region
      $region45: #{clip_vit_forward.12} parent=43 // pred_check
        %p310 = pneg %p128
      $region46: #{clip_vit_forward.12} parent=43 // pred_check_branch
        %312 = sbr.rel (%p310) target = $region48
      $region47: #{clip_vit_forward.12} parent=43 // pred_region
        %p313 = scmp.lt.s32.totalorder %s16, 1
        %s314 = scalar_select %p313, %s16, 1
        %s315 = smul.addr %s314, 3
        %s316 = smul.addr %s315, 4
        %s317 = scalar_lea.vmem %s4, %s316
      $region48: #{clip_vit_forward.12} parent=43 // pred_fallthru
        _
    $region44: #{clip_vit_forward.12} parent=5 // pred_fallthru
      _
  $region6: #{clip_vit_forward.12} parent=0 // loop_footer
    %s14 = sadd.s32 1, %s10
  $region7: #{clip_vit_forward.12} parent=0 // loop_footer_branch
    %9 = sbr.rel target = $region3
  $region8: #{clip_vit_forward.12} parent=0 // loop_exit
    _

// kernel: clip_vit_forward.13
$region0: #{clip_vit_forward.13}
  #allocation0 [shape = 'u32[]', space=smem, size = 0x4, offset = 0x4, fixed_abs, tag = 'smem constant byte address 0x4 - core index']
  #allocation1 [shape = 'u32[72,128]{1,0:T(1,128)}', space=vmem, size = 0x9000, scoped, tag = 'internal scratch']
  %s0 = inlined_call_operand.vmem [shape: bf16[48,128], index: 0, kind: input, shape index: {}]
  %s1 = inlined_call_operand.vmem [shape: f32[1,128], index: 1, kind: input, shape index: {}]
  %s2 = inlined_call_operand.vmem [shape: f32[1,128], index: 2, kind: input, shape index: {}]
  %s3 = inlined_call_operand.vmem [shape: bf16[128,384], index: 3, kind: input, shape index: {}]
  %s4 = inlined_call_operand.vmem [shape: f32[1,384], index: 4, kind: input, shape index: {}]
  %s5 = inlined_call_operand.vmem [shape: bf16[48,384], index: 5, kind: output, shape index: {}]
  %s6 = sld [smem:[#allocation0]]
  $region53: #{clip_vit_forward.13} parent=0
    _
  %s8 = ssub.s32 1, %s6
  %s9 = scalar_select 0, %s8, %s6
  loop: start=0, step=1, limit=4
  $region2: #{clip_vit_forward.13} parent=0 // loop_pre_header
    _
  $region3: #{clip_vit_forward.13} parent=0 // loop_header
    %s11 = sphi 0, %s15
    %p12 = scmp.ge.s32.totalorder %s11, 4
    %s21 = sphi 0, %s23
    %s24 = sphi 0, %s21
    %s25 = sphi 0, %s24
    %s41 = sphi 0, %s25
    %s45 = sphi 0, %s45
    %s47 = sphi 0, %s45
    %s48 = sphi 0, %s47
    %s62 = sphi 0, %s48
    %s66 = sphi 0, %s66
    %s68 = sphi 0, %s66
    %s69 = sphi 0, %s68
    %s83 = sphi 0, %s69
    %s87 = sphi 0, %s87
    %s89 = sphi 0, %s87
    %s90 = sphi 0, %s89
    %s104 = sphi 0, %s90
    %s108 = sphi 0, %s108
    %s110 = sphi 0, %s108
    %s111 = sphi 0, %s110
    %s125 = sphi 0, %s111
    %s131 = sphi 0, %s133
    %s134 = sphi 0, %s131
    %s135 = sphi 0, %s134
    %s151 = sphi 0, %s135
  $region4: #{clip_vit_forward.13} parent=0 // loop_header_branch
    %14 = sbr.rel (%p12) target = $region8
  $region5: #{clip_vit_forward.13} parent=0 // loop_body
    %s16 = ssub.s32 %s11, 1
    %s17 = ssub.s32 %s11, 2
    %s18 = sadd.s32 %s11, 1
    %s19 = ssub.s32 %s11, %s18
    %p20 = scmp.eq.s32.totalorder %s19, 0
    %s22 = sadd.s32 %s21, 1
    %s23 = scalar_select %p20, %s21, %s22
    %p26 = pneg %p20
    %p27 = scmp.eq.s32.totalorder %s11, 1
    %p28 = por %p26, %p27
    %p29 = scmp.ne.s32.totalorder %s21, %s24
    %p30 = scmp.eq.s32.totalorder %s11, 0
    %p31 = por %p29, %p30
    %p32 = scmp.ne.s32.totalorder %s21, %s24
    %p33 = scmp.eq.s32.totalorder %s16, 1
    %p34 = por %p32, %p33
    %p35 = scmp.ne.s32.totalorder %s24, %s25
    %p36 = scmp.eq.s32.totalorder %s16, 0
    %p37 = por %p35, %p36
    %p38 = scmp.ne.s32.totalorder %s24, %s25
    %p39 = scmp.eq.s32.totalorder %s17, 1
    %p40 = por %p38, %p39
    %p42 = scmp.ne.s32.totalorder %s25, %s41
    %p43 = scmp.eq.s32.totalorder %s17, 0
    %p44 = por %p42, %p43
    %s46 = sadd.s32 %s45, 1
    %p49 = scmp.eq.s32.totalorder %s11, 1
    %p50 = scmp.ne.s32.totalorder %s45, %s47
    %p51 = scmp.eq.s32.totalorder %s11, 0
    %p52 = por %p50, %p51
    %p53 = scmp.ne.s32.totalorder %s45, %s47
    %p54 = scmp.eq.s32.totalorder %s16, 1
    %p55 = por %p53, %p54
    %p56 = scmp.ne.s32.totalorder %s47, %s48
    %p57 = scmp.eq.s32.totalorder %s16, 0
    %p58 = por %p56, %p57
    %p59 = scmp.ne.s32.totalorder %s47, %s48
    %p60 = scmp.eq.s32.totalorder %s17, 1
    %p61 = por %p59, %p60
    %p63 = scmp.ne.s32.totalorder %s48, %s62
    %p64 = scmp.eq.s32.totalorder %s17, 0
    %p65 = por %p63, %p64
    %s67 = sadd.s32 %s66, 1
    %p70 = scmp.eq.s32.totalorder %s11, 1
    %p71 = scmp.ne.s32.totalorder %s66, %s68
    %p72 = scmp.eq.s32.totalorder %s11, 0
    %p73 = por %p71, %p72
    %p74 = scmp.ne.s32.totalorder %s66, %s68
    %p75 = scmp.eq.s32.totalorder %s16, 1
    %p76 = por %p74, %p75
    %p77 = scmp.ne.s32.totalorder %s68, %s69
    %p78 = scmp.eq.s32.totalorder %s16, 0
    %p79 = por %p77, %p78
    %p80 = scmp.ne.s32.totalorder %s68, %s69
    %p81 = scmp.eq.s32.totalorder %s17, 1
    %p82 = por %p80, %p81
    %p84 = scmp.ne.s32.totalorder %s69, %s83
    %p85 = scmp.eq.s32.totalorder %s17, 0
    %p86 = por %p84, %p85
    %s88 = sadd.s32 %s87, 1
    %p91 = scmp.eq.s32.totalorder %s11, 1
    %p92 = scmp.ne.s32.totalorder %s87, %s89
    %p93 = scmp.eq.s32.totalorder %s11, 0
    %p94 = por %p92, %p93
    %p95 = scmp.ne.s32.totalorder %s87, %s89
    %p96 = scmp.eq.s32.totalorder %s16, 1
    %p97 = por %p95, %p96
    %p98 = scmp.ne.s32.totalorder %s89, %s90
    %p99 = scmp.eq.s32.totalorder %s16, 0
    %p100 = por %p98, %p99
    %p101 = scmp.ne.s32.totalorder %s89, %s90
    %p102 = scmp.eq.s32.totalorder %s17, 1
    %p103 = por %p101, %p102
    %p105 = scmp.ne.s32.totalorder %s90, %s104
    %p106 = scmp.eq.s32.totalorder %s17, 0
    %p107 = por %p105, %p106
    %s109 = sadd.s32 %s108, 1
    %p112 = scmp.eq.s32.totalorder %s11, 1
    %p113 = scmp.ne.s32.totalorder %s108, %s110
    %p114 = scmp.eq.s32.totalorder %s11, 0
    %p115 = por %p113, %p114
    %p116 = scmp.ne.s32.totalorder %s108, %s110
    %p117 = scmp.eq.s32.totalorder %s16, 1
    %p118 = por %p116, %p117
    %p119 = scmp.ne.s32.totalorder %s110, %s111
    %p120 = scmp.eq.s32.totalorder %s16, 0
    %p121 = por %p119, %p120
    %p122 = scmp.ne.s32.totalorder %s110, %s111
    %p123 = scmp.eq.s32.totalorder %s17, 1
    %p124 = por %p122, %p123
    %p126 = scmp.ne.s32.totalorder %s111, %s125
    %p127 = scmp.eq.s32.totalorder %s17, 0
    %p128 = por %p126, %p127
    %s129 = ssub.s32 %s11, %s18
    %p130 = scmp.eq.s32.totalorder %s129, 0
    %s132 = sadd.s32 %s131, 1
    %s133 = scalar_select %p130, %s131, %s132
    %p136 = pneg %p130
    %p137 = scmp.eq.s32.totalorder %s11, 1
    %p138 = por %p136, %p137
    %p139 = scmp.ne.s32.totalorder %s131, %s134
    %p140 = scmp.eq.s32.totalorder %s11, 0
    %p141 = por %p139, %p140
    %p142 = scmp.ne.s32.totalorder %s131, %s134
    %p143 = scmp.eq.s32.totalorder %s16, 1
    %p144 = por %p142, %p143
    %p145 = scmp.ne.s32.totalorder %s134, %s135
    %p146 = scmp.eq.s32.totalorder %s16, 0
    %p147 = por %p145, %p146
    %p148 = scmp.ne.s32.totalorder %s134, %s135
    %p149 = scmp.eq.s32.totalorder %s17, 1
    %p150 = por %p148, %p149
    %p152 = scmp.ne.s32.totalorder %s135, %s151
    %p153 = scmp.eq.s32.totalorder %s17, 0
    %p154 = por %p152, %p153
    %p155 = scmp.le.s32.totalorder 1, %s11
    %p156 = scmp.lt.s32.totalorder %s11, 3
    %p157 = pnand %p155, %p156
    %p158 = pneg %p157
    // Predicated region
    $region9: #{clip_vit_forward.13} parent=5 // pred_check
      _
    $region10: #{clip_vit_forward.13} parent=5 // pred_check_branch
      %160 = sbr.rel (%p157) target = $region12
    $region11: #{clip_vit_forward.13} parent=5 // pred_region
      %s161 = ssub.s32 %s11, 1
      // Predicated region
      $region13: #{clip_vit_forward.13} parent=11 // pred_check
        %p162 = pneg %p58
      $region14: #{clip_vit_forward.13} parent=11 // pred_check_branch
        %164 = sbr.rel (%p162) target = $region16
      $region15: #{clip_vit_forward.13} parent=11 // pred_region
        _
      $region16: #{clip_vit_forward.13} parent=11 // pred_fallthru
        _
      // Predicated region
      $region17: #{clip_vit_forward.13} parent=11 // pred_check
        %p165 = pneg %p79
      $region18: #{clip_vit_forward.13} parent=11 // pred_check_branch
        %167 = sbr.rel (%p165) target = $region20
      $region19: #{clip_vit_forward.13} parent=11 // pred_region
        _
      $region20: #{clip_vit_forward.13} parent=11 // pred_fallthru
        _
      // Predicated region
      $region21: #{clip_vit_forward.13} parent=11 // pred_check
        %p168 = pneg %p100
      $region22: #{clip_vit_forward.13} parent=11 // pred_check_branch
        %170 = sbr.rel (%p168) target = $region24
      $region23: #{clip_vit_forward.13} parent=11 // pred_region
        _
      $region24: #{clip_vit_forward.13} parent=11 // pred_fallthru
        _
      // Predicated region
      $region25: #{clip_vit_forward.13} parent=11 // pred_check
        %p171 = pneg %p121
      $region26: #{clip_vit_forward.13} parent=11 // pred_check_branch
        %173 = sbr.rel (%p171) target = $region28
      $region27: #{clip_vit_forward.13} parent=11 // pred_region
        _
      $region28: #{clip_vit_forward.13} parent=11 // pred_fallthru
        _
    $region12: #{clip_vit_forward.13} parent=5 // pred_fallthru
      _
    %p174 = scmp.lt.s32.totalorder %s11, 2
    // Predicated region
    $region29: #{clip_vit_forward.13} parent=5 // pred_check
      %p175 = pneg %p174
    $region30: #{clip_vit_forward.13} parent=5 // pred_check_branch
      %177 = sbr.rel (%p175) target = $region32
    $region31: #{clip_vit_forward.13} parent=5 // pred_region
      // Predicated region
      $region33: #{clip_vit_forward.13} parent=31 // pred_check
        %p178 = pneg %p31
      $region34: #{clip_vit_forward.13} parent=31 // pred_check_branch
        %180 = sbr.rel (%p178) target = $region36
      $region35: #{clip_vit_forward.13} parent=31 // pred_region
        %s181 = smul.u32 3, %s11
        %p182 = scmp.lt.s32.totalorder %s181, 5
        %s183 = scalar_select %p182, %s181, 5
        %s184 = smul.addr %s183, 4
        %s185 = scalar_lea.vmem %s0, %s184
        %s186 = smul.u32 3, %s11
      $region36: #{clip_vit_forward.13} parent=31 // pred_fallthru
        _
    $region32: #{clip_vit_forward.13} parent=5 // pred_fallthru
      _
    %p187 = scmp.le.s32.totalorder 1, %s11
    %p188 = scmp.lt.s32.totalorder %s11, 3
    %p189 = pnand %p187, %p188
    %p190 = pneg %p189
    // Predicated region
    $region37: #{clip_vit_forward.13} parent=5 // pred_check
      _
    $region38: #{clip_vit_forward.13} parent=5 // pred_check_branch
      %192 = sbr.rel (%p189) target = $region40
    $region39: #{clip_vit_forward.13} parent=5 // pred_region
      %s193 = ssub.s32 %s11, 1
      %s194 = smul.u32 3, %s16
      %p195 = scmp.lt.s32.totalorder %s194, 5
      %s196 = scalar_select %p195, %s194, 5
      %s197 = smul.addr %s196, 4
      %s198 = scalar_lea.vmem %s0, %s197
      %p199 = pneg %p37
      %p200 = pneg %p34
      %p201 = pneg %p58
      %p202 = pneg %p55
      %p203 = pneg %p79
      %p204 = pneg %p76
      %p205 = pneg %p100
      %p206 = pneg %p97
      %p207 = pneg %p121
      %p208 = pneg %p118
      %p209 = pneg %p147
      %p210 = pneg %p144
      %s211 = smul.u32 3, %s16
      %p212 = scmp.lt.s32.totalorder %s211, 5
      %s213 = scalar_select %p212, %s211, 5
      %s214 = smul.addr %s213, 3
      %s215 = smul.addr %s214, 4
      %s216 = scalar_lea.vmem %s5, %s215
      %s217 = smul.u32 3, %s16
      %p218 = scmp.lt.s32.totalorder %s217, 5
      %s219 = scalar_select %p218, %s217, 5
      %s220 = smul.addr %s219, 4
      %s221 = scalar_lea.vmem %s0, %s220
      %s222 = smul.u32 3, %s16
      %s223 = smul.u32 3, %s16
      %p224 = scmp.lt.s32.totalorder %s223, 5
      %s225 = scalar_select %p224, %s223, 5
      %s226 = smul.addr %s225, 3
      %s227 = smul.addr %s226, 4
      %s228 = scalar_lea.vmem %s5, %s227
      %s229 = smul.u32 3, %s16
      %v230 = vld [vmem:[%s221] sm:$0xf]
      %v231 = vld [vmem:[%s221 + $0x4] sm:$0xf]
      %v232 = vld [vmem:[%s221 + $0x8] sm:$0xf]
      %v233 = vunpack.c.l.bf16 %v230
      %v234 = vunpack.c.l.bf16 %v231
      %v235 = vunpack.c.l.bf16 %v232
      %236 = vadd.xlane.f32.xlu0 %v233
      %v237 = vpop.xlane.xlu0 %236
      %238 = vadd.xlane.f32.xlu0 %v234
      %v239 = vpop.xlane.xlu0 %238
      %240 = vadd.xlane.f32.xlu0 %v235
      %v241 = vpop.xlane.xlu0 %240
      %v242 = vrcp.pop 128.0
      %v243 = vmul.f32 128.0, %v242
      %v244 = vsub.f32 1.0, %v243
      %v245 = vmul.f32 %v242, %v244
      %v246 = vadd.f32 %v242, %v245
      %vm247 = vweird.f32 %v242
      %v248 = vsel %vm247, %v242, %v246
      %v249 = vmul.f32 %v237, %v248
      %v250 = vmul.f32 %v239, %v248
      %v251 = vmul.f32 %v241, %v248
      %v252 = vsub.f32 %v233, %v249
      %v253 = vsub.f32 %v234, %v250
      %v254 = vsub.f32 %v235, %v251
      %v255 = vmul.f32 %v252, %v252
      %v256 = vmul.f32 %v253, %v253
      %v257 = vmul.f32 %v254, %v254
      %258 = vadd.xlane.f32.xlu0 %v255
      %v259 = vpop.xlane.xlu0 %258
      %260 = vadd.xlane.f32.xlu0 %v256
      %v261 = vpop.xlane.xlu0 %260
      %262 = vadd.xlane.f32.xlu0 %v257
      %v263 = vpop.xlane.xlu0 %262
      %v264 = vmul.f32 %v259, %v248
      %v265 = vmul.f32 %v261, %v248
      %v266 = vmul.f32 %v263, %v248
      %v267 = vadd.f32 %v264, 1e-05
      %v268 = vadd.f32 %v265, 1e-05
      %v269 = vadd.f32 %v266, 1e-05
      %v270 = vrsqrt.pop %v267
      %v271 = vmul.f32 %v270, %v267
      %v272 = vmul.f32 %v271, %v270
      %v273 = vmul.f32 0.5, %v272
      %v274 = vsub.f32 1.5, %v273
      %v275 = vmul.f32 %v270, %v274
      %vm276 = vweird.f32 %v267
      %vm277 = vweird.f32 %v270
      %vm278 = vmor %vm276, %vm277
      %v279 = vsel %vm278, %v270, %v275
      %v280 = vrsqrt.pop %v268
      %v281 = vmul.f32 %v280, %v268
      %v282 = vmul.f32 %v281, %v280
      %v283 = vmul.f32 0.5, %v282
      %v284 = vsub.f32 1.5, %v283
      %v285 = vmul.f32 %v280, %v284
      %vm286 = vweird.f32 %v268
      %vm287 = vweird.f32 %v280
      %vm288 = vmor %vm286, %vm287
      %v289 = vsel %vm288, %v280, %v285
      %v290 = vrsqrt.pop %v269
      %v291 = vmul.f32 %v290, %v269
      %v292 = vmul.f32 %v291, %v290
      %v293 = vmul.f32 0.5, %v292
      %v294 = vsub.f32 1.5, %v293
      %v295 = vmul.f32 %v290, %v294
      %vm296 = vweird.f32 %v269
      %vm297 = vweird.f32 %v290
      %vm298 = vmor %vm296, %vm297
      %v299 = vsel %vm298, %v290, %v295
      %v300 = vmul.f32 %v252, %v279
      %v301 = vmul.f32 %v253, %v289
      %v302 = vmul.f32 %v254, %v299
      %v303 = vld [vmem:[%s1] sm:$0x1]
      %v305 = vperm.slane %v303, 0
      %v307 = vmul.f32 %v300, %v305
      %v308 = vmul.f32 %v301, %v305
      %v309 = vmul.f32 %v302, %v305
      %v310 = vld [vmem:[%s2] sm:$0x1]
      %v312 = vperm.slane %v310, 0
      %v314 = vadd.f32 %v307, %v312
      %v315 = vadd.f32 %v308, %v312
      %v316 = vadd.f32 %v309, %v312
      %v317 = vpack.c.bf16 %v315, %v314
      %v318 = vpack.c.bf16 %v316, %v316
      %v319 = vld [vmem:[%s3] sm:$0xff]
      %v320 = vld [vmem:[%s3 + $0x8] sm:$0xf]
      %v321 = vld [vmem:[%s3 + $0xc] sm:$0xff]
      %v322 = vld [vmem:[%s3 + $0x14] sm:$0xf]
      %v323 = vld [vmem:[%s3 + $0x18] sm:$0xff]
      %v324 = vld [vmem:[%s3 + $0x20] sm:$0xf]
      %v325 = vld [vmem:[%s3 + $0x24] sm:$0xff]
      %v326 = vld [vmem:[%s3 + $0x2c] sm:$0xf]
      %v327 = vld [vmem:[%s3 + $0x30] sm:$0xff]
      %v328 = vld [vmem:[%s3 + $0x38] sm:$0xf]
      %v329 = vld [vmem:[%s3 + $0x3c] sm:$0xff]
      %v330 = vld [vmem:[%s3 + $0x44] sm:$0xf]
      %v331 = vld [vmem:[%s3 + $0x48] sm:$0xff]
      %v332 = vld [vmem:[%s3 + $0x50] sm:$0xf]
      %v333 = vld [vmem:[%s3 + $0x54] sm:$0xff]
      %v334 = vld [vmem:[%s3 + $0x5c] sm:$0xf]
      %v335 = vld [vmem:[%s3 + $0x60] sm:$0xff]
      %v336 = vld [vmem:[%s3 + $0x68] sm:$0xf]
      %v337 = vld [vmem:[%s3 + $0x6c] sm:$0xff]
      %v338 = vld [vmem:[%s3 + $0x74] sm:$0xf]
      %v339 = vld [vmem:[%s3 + $0x78] sm:$0xff]
      %v340 = vld [vmem:[%s3 + $0x80] sm:$0xf]
      %v341 = vld [vmem:[%s3 + $0x84] sm:$0xff]
      %v342 = vld [vmem:[%s3 + $0x8c] sm:$0xf]
      %v343 = vld [vmem:[%s3 + $0x90] sm:$0xff]
      %v344 = vld [vmem:[%s3 + $0x98] sm:$0xf]
      %v345 = vld [vmem:[%s3 + $0x9c] sm:$0xff]
      %v346 = vld [vmem:[%s3 + $0xa4] sm:$0xf]
      %v347 = vld [vmem:[%s3 + $0xa8] sm:$0xff]
      %v348 = vld [vmem:[%s3 + $0xb0] sm:$0xf]
      %v349 = vld [vmem:[%s3 + $0xb4] sm:$0xff]
      %v350 = vld [vmem:[%s3 + $0xbc] sm:$0xf]
      %v351 = vld [vmem:[%s4] sm:$0x7]
      %v353 = vperm.slane %v351, 0
      %v354 = vperm.slane %v351, 1
      %v355 = vperm.slane %v351, 2
      %v391 = vunpack.c.l.b16 %v319
      %v392 = vunpack.c.h.b16 %v319
      %v393 = vunpack.c.l.b16 %v320
      %v394 = vunpack.c.l.b16 %v321
      %v395 = vunpack.c.h.b16 %v321
      %v396 = vunpack.c.l.b16 %v322
      %v397 = vunpack.c.l.b16 %v323
      %v398 = vunpack.c.h.b16 %v323
      %v399 = vunpack.c.l.b16 %v324
      %v400 = vunpack.c.l.b16 %v325
      %v401 = vunpack.c.h.b16 %v325
      %v402 = vunpack.c.l.b16 %v326
      %v403 = vunpack.c.l.b16 %v327
      %v404 = vunpack.c.h.b16 %v327
      %v405 = vunpack.c.l.b16 %v328
      %v406 = vunpack.c.l.b16 %v329
      %v407 = vunpack.c.h.b16 %v329
      %v408 = vunpack.c.l.b16 %v330
      %v409 = vunpack.c.l.b16 %v331
      %v410 = vunpack.c.h.b16 %v331
      %v411 = vunpack.c.l.b16 %v332
      %v412 = vunpack.c.l.b16 %v333
      %v413 = vunpack.c.h.b16 %v333
      %v414 = vunpack.c.l.b16 %v334
      %v415 = vunpack.c.l.b16 %v335
      %v416 = vunpack.c.h.b16 %v335
      %v417 = vunpack.c.l.b16 %v336
      %v418 = vunpack.c.l.b16 %v337
      %v419 = vunpack.c.h.b16 %v337
      %v420 = vunpack.c.l.b16 %v338
      %v421 = vunpack.c.l.b16 %v339
      %v422 = vunpack.c.h.b16 %v339
      %v423 = vunpack.c.l.b16 %v340
      %v424 = vunpack.c.l.b16 %v341
      %v425 = vunpack.c.h.b16 %v341
      %v426 = vunpack.c.l.b16 %v342
      %v427 = vunpack.c.l.b16 %v343
      %v428 = vunpack.c.h.b16 %v343
      %v429 = vunpack.c.l.b16 %v344
      %v430 = vunpack.c.l.b16 %v345
      %v431 = vunpack.c.h.b16 %v345
      %v432 = vunpack.c.l.b16 %v346
      %v433 = vunpack.c.l.b16 %v347
      %v434 = vunpack.c.h.b16 %v347
      %v435 = vunpack.c.l.b16 %v348
      %v436 = vunpack.c.l.b16 %v349
      %v437 = vunpack.c.h.b16 %v349
      %v438 = vunpack.c.l.b16 %v350
      %v439 = vpack.c.b16 %v394, %v391
      %v440 = vpack.c.b16 %v395, %v392
      %v441 = vpack.c.b16 %v396, %v393
      %v442 = vpack.c.b16 %v400, %v397
      %v443 = vpack.c.b16 %v401, %v398
      %v444 = vpack.c.b16 %v402, %v399
      %v445 = vpack.c.b16 %v406, %v403
      %v446 = vpack.c.b16 %v407, %v404
      %v447 = vpack.c.b16 %v408, %v405
      %v448 = vpack.c.b16 %v412, %v409
      %v449 = vpack.c.b16 %v413, %v410
      %v450 = vpack.c.b16 %v414, %v411
      %v451 = vpack.c.b16 %v418, %v415
      %v452 = vpack.c.b16 %v419, %v416
      %v453 = vpack.c.b16 %v420, %v417
      %v454 = vpack.c.b16 %v424, %v421
      %v455 = vpack.c.b16 %v425, %v422
      %v456 = vpack.c.b16 %v426, %v423
      %v457 = vpack.c.b16 %v430, %v427
      %v458 = vpack.c.b16 %v431, %v428
      %v459 = vpack.c.b16 %v432, %v429
      %v460 = vpack.c.b16 %v436, %v433
      %v461 = vpack.c.b16 %v437, %v434
      %v462 = vpack.c.b16 %v438, %v435
      %487 = vmatpush.bf16.msra.mxu0 %v460
      %488 = vmatpush.bf16.msra.mxu0 %v457
      %489 = vmatpush.bf16.msra.mxu0 %v454
      %490 = vmatpush.bf16.msra.mxu0 %v451
      %491 = vmatpush.bf16.msra.mxu0 %v448
      %492 = vmatpush.bf16.msra.mxu0 %v445
      %493 = vmatpush.bf16.msra.mxu0 %v442
      %494 = vmatpush.bf16.msra.mxu0 %v439
      %495 = vmatmul.bf16.gmra.mxu0 %v317
      %v496 = vpop.f32.mrf.mxu0
      %v497 = vadd.f32 %v353, %v496
      %v498 = vpop.f32.mrf.mxu0
      %v499 = vadd.f32 %v353, %v498
      %500 = vmatmul.bf16.gmra.mxu0 %v318
      %v501 = vpop.f32.mrf.mxu0
      %v502 = vadd.f32 %v353, %v501
      %v503 = vpop.f32.mrf.mxu0
      %504 = vdwg.mxu0
      %505 = vmatpush.bf16.msra.mxu0 %v461
      %506 = vmatpush.bf16.msra.mxu0 %v458
      %507 = vmatpush.bf16.msra.mxu0 %v455
      %508 = vmatpush.bf16.msra.mxu0 %v452
      %509 = vmatpush.bf16.msra.mxu0 %v449
      %510 = vmatpush.bf16.msra.mxu0 %v446
      %511 = vmatpush.bf16.msra.mxu0 %v443
      %512 = vmatpush.bf16.msra.mxu0 %v440
      %513 = vmatmul.bf16.gmra.mxu0 %v317
      %v514 = vpop.f32.mrf.mxu0
      %v515 = vadd.f32 %v354, %v514
      %v516 = vpop.f32.mrf.mxu0
      %v517 = vadd.f32 %v354, %v516
      %518 = vmatmul.bf16.gmra.mxu0 %v318
      %v519 = vpop.f32.mrf.mxu0
      %v520 = vadd.f32 %v354, %v519
      %v521 = vpop.f32.mrf.mxu0
      %522 = vdwg.mxu0
      %523 = vmatpush.bf16.msra.mxu0 %v462
      %524 = vmatpush.bf16.msra.mxu0 %v459
      %525 = vmatpush.bf16.msra.mxu0 %v456
      %526 = vmatpush.bf16.msra.mxu0 %v453
      %527 = vmatpush.bf16.msra.mxu0 %v450
      %528 = vmatpush.bf16.msra.mxu0 %v447
      %529 = vmatpush.bf16.msra.mxu0 %v444
      %530 = vmatpush.bf16.msra.mxu0 %v441
      %531 = vmatmul.bf16.gmra.mxu0 %v317
      %v532 = vpop.f32.mrf.mxu0
      %v533 = vadd.f32 %v355, %v532
      %v534 = vpop.f32.mrf.mxu0
      %v535 = vadd.f32 %v355, %v534
      %536 = vmatmul.bf16.gmra.mxu0 %v318
      %v537 = vpop.f32.mrf.mxu0
      %v538 = vadd.f32 %v355, %v537
      %v539 = vpop.f32.mrf.mxu0
      %540 = vdwg.mxu0
      %v541 = vpack.c.bf16 %v515, %v497
      %v542 = vpack.c.bf16 %v533, %v533
      %v543 = vpack.c.bf16 %v517, %v499
      %v544 = vpack.c.bf16 %v535, %v535
      %v545 = vpack.c.bf16 %v520, %v502
      %v546 = vpack.c.bf16 %v538, %v538
      %547 = vst [vmem:[%s228] sm:$0xff] %v541
      %548 = vst [vmem:[%s228 + $0x8] sm:$0xf] %v542
      %549 = vst [vmem:[%s228 + $0xc] sm:$0xff] %v543
      %550 = vst [vmem:[%s228 + $0x14] sm:$0xf] %v544
      %551 = vst [vmem:[%s228 + $0x18] sm:$0xff] %v545
      %552 = vst [vmem:[%s228 + $0x20] sm:$0xf] %v546
      %s553 = smul.u32 3, %s16
      %p554 = scmp.lt.s32.totalorder %s553, 5
      %s555 = scalar_select %p554, %s553, 5
      %s556 = smul.addr %s555, 3
      %s557 = smul.addr %s556, 4
      %s558 = scalar_lea.vmem %s5, %s557
      // Predicated region
      $region41: #{clip_vit_forward.13} parent=39 // pred_check
        %p559 = pneg %p144
      $region42: #{clip_vit_forward.13} parent=39 // pred_check_branch
        %561 = sbr.rel (%p559) target = $region44
      $region43: #{clip_vit_forward.13} parent=39 // pred_region
        %s562 = smul.u32 3, %s16
      $region44: #{clip_vit_forward.13} parent=39 // pred_fallthru
        _
    $region40: #{clip_vit_forward.13} parent=5 // pred_fallthru
      _
    %p563 = scmp.le.s32.totalorder 2, %s11
    // Predicated region
    $region45: #{clip_vit_forward.13} parent=5 // pred_check
      %p564 = pneg %p563
    $region46: #{clip_vit_forward.13} parent=5 // pred_check_branch
      %566 = sbr.rel (%p564) target = $region48
    $region47: #{clip_vit_forward.13} parent=5 // pred_region
      %s567 = ssub.s32 %s11, 2
      // Predicated region
      $region49: #{clip_vit_forward.13} parent=47 // pred_check
        %p568 = pneg %p150
      $region50: #{clip_vit_forward.13} parent=47 // pred_check_branch
        %570 = sbr.rel (%p568) target = $region52
      $region51: #{clip_vit_forward.13} parent=47 // pred_region
        %s571 = smul.u32 3, %s17
        %p572 = scmp.lt.s32.totalorder %s571, 5
        %s573 = scalar_select %p572, %s571, 5
        %s574 = smul.addr %s573, 3
        %s575 = smul.addr %s574, 4
        %s576 = scalar_lea.vmem %s5, %s575
      $region52: #{clip_vit_forward.13} parent=47 // pred_fallthru
        _
    $region48: #{clip_vit_forward.13} parent=5 // pred_fallthru
      _
  $region6: #{clip_vit_forward.13} parent=0 // loop_footer
    %s15 = sadd.s32 1, %s11
  $region7: #{clip_vit_forward.13} parent=0 // loop_footer_branch
    %10 = sbr.rel target = $region3
  $region8: #{clip_vit_forward.13} parent=0 // loop_exit
    _

// kernel: clip_vit_forward.14
$region0: #{clip_vit_forward.14}
  #allocation0 [shape = 'u32[]', space=smem, size = 0x4, offset = 0x4, fixed_abs, tag = 'smem constant byte address 0x4 - core index']
  #allocation1 [shape = 'u32[72,128]{1,0:T(1,128)}', space=vmem, size = 0x9000, scoped, tag = 'internal scratch']
  %s0 = inlined_call_operand.vmem [shape: bf16[2,24,384], index: 0, kind: input, shape index: {}]
  %s1 = inlined_call_operand.vmem [shape: bf16[2,24,128], index: 1, kind: output, shape index: {}]
  %s2 = sld [smem:[#allocation0]]
  $region37: #{clip_vit_forward.14} parent=0
    _
  %s4 = ssub.s32 1, %s2
  %s5 = scalar_select 0, %s4, %s2
  loop: start=0, step=1, limit=4
  $region2: #{clip_vit_forward.14} parent=0 // loop_pre_header
    _
  $region3: #{clip_vit_forward.14} parent=0 // loop_header
    %s7 = sphi 0, %s11
    %p8 = scmp.ge.s32.totalorder %s7, 4
    %s17 = sphi 0, %s19
    %s20 = sphi 0, %s17
    %s21 = sphi 0, %s20
    %s37 = sphi 0, %s21
    %s43 = sphi 0, %s45
    %s46 = sphi 0, %s43
    %s47 = sphi 0, %s46
    %s63 = sphi 0, %s47
  $region4: #{clip_vit_forward.14} parent=0 // loop_header_branch
    %10 = sbr.rel (%p8) target = $region8
  $region5: #{clip_vit_forward.14} parent=0 // loop_body
    %s12 = ssub.s32 %s7, 1
    %s13 = ssub.s32 %s7, 2
    %s14 = sadd.s32 %s7, 1
    %s15 = ssub.s32 %s7, %s14
    %p16 = scmp.eq.s32.totalorder %s15, 0
    %s18 = sadd.s32 %s17, 1
    %s19 = scalar_select %p16, %s17, %s18
    %p22 = pneg %p16
    %p23 = scmp.eq.s32.totalorder %s7, 1
    %p24 = por %p22, %p23
    %p25 = scmp.ne.s32.totalorder %s17, %s20
    %p26 = scmp.eq.s32.totalorder %s7, 0
    %p27 = por %p25, %p26
    %p28 = scmp.ne.s32.totalorder %s17, %s20
    %p29 = scmp.eq.s32.totalorder %s12, 1
    %p30 = por %p28, %p29
    %p31 = scmp.ne.s32.totalorder %s20, %s21
    %p32 = scmp.eq.s32.totalorder %s12, 0
    %p33 = por %p31, %p32
    %p34 = scmp.ne.s32.totalorder %s20, %s21
    %p35 = scmp.eq.s32.totalorder %s13, 1
    %p36 = por %p34, %p35
    %p38 = scmp.ne.s32.totalorder %s21, %s37
    %p39 = scmp.eq.s32.totalorder %s13, 0
    %p40 = por %p38, %p39
    %s41 = ssub.s32 %s7, %s14
    %p42 = scmp.eq.s32.totalorder %s41, 0
    %s44 = sadd.s32 %s43, 1
    %s45 = scalar_select %p42, %s43, %s44
    %p48 = pneg %p42
    %p49 = scmp.eq.s32.totalorder %s7, 1
    %p50 = por %p48, %p49
    %p51 = scmp.ne.s32.totalorder %s43, %s46
    %p52 = scmp.eq.s32.totalorder %s7, 0
    %p53 = por %p51, %p52
    %p54 = scmp.ne.s32.totalorder %s43, %s46
    %p55 = scmp.eq.s32.totalorder %s12, 1
    %p56 = por %p54, %p55
    %p57 = scmp.ne.s32.totalorder %s46, %s47
    %p58 = scmp.eq.s32.totalorder %s12, 0
    %p59 = por %p57, %p58
    %p60 = scmp.ne.s32.totalorder %s46, %s47
    %p61 = scmp.eq.s32.totalorder %s13, 1
    %p62 = por %p60, %p61
    %p64 = scmp.ne.s32.totalorder %s47, %s63
    %p65 = scmp.eq.s32.totalorder %s13, 0
    %p66 = por %p64, %p65
    %p67 = scmp.le.s32.totalorder 1, %s7
    %p68 = scmp.lt.s32.totalorder %s7, 3
    %p69 = pnand %p67, %p68
    %p70 = pneg %p69
    // Predicated region
    $region9: #{clip_vit_forward.14} parent=5 // pred_check
      _
    $region10: #{clip_vit_forward.14} parent=5 // pred_check_branch
      %72 = sbr.rel (%p69) target = $region12
    $region11: #{clip_vit_forward.14} parent=5 // pred_region
      %s73 = ssub.s32 %s7, 1
    $region12: #{clip_vit_forward.14} parent=5 // pred_fallthru
      _
    %p74 = scmp.lt.s32.totalorder %s7, 2
    // Predicated region
    $region13: #{clip_vit_forward.14} parent=5 // pred_check
      %p75 = pneg %p74
    $region14: #{clip_vit_forward.14} parent=5 // pred_check_branch
      %77 = sbr.rel (%p75) target = $region16
    $region15: #{clip_vit_forward.14} parent=5 // pred_region
      // Predicated region
      $region17: #{clip_vit_forward.14} parent=15 // pred_check
        %p78 = pneg %p27
      $region18: #{clip_vit_forward.14} parent=15 // pred_check_branch
        %80 = sbr.rel (%p78) target = $region20
      $region19: #{clip_vit_forward.14} parent=15 // pred_region
        %p81 = scmp.lt.s32.totalorder %s7, 1
        %s82 = scalar_select %p81, %s7, 1
        %s83 = smul.addr %s82, 9
        %s84 = smul.addr %s83, 4
        %s85 = scalar_lea.vmem %s0, %s84
      $region20: #{clip_vit_forward.14} parent=15 // pred_fallthru
        _
    $region16: #{clip_vit_forward.14} parent=5 // pred_fallthru
      _
    %p86 = scmp.le.s32.totalorder 1, %s7
    %p87 = scmp.lt.s32.totalorder %s7, 3
    %p88 = pnand %p86, %p87
    %p89 = pneg %p88
    // Predicated region
    $region21: #{clip_vit_forward.14} parent=5 // pred_check
      _
    $region22: #{clip_vit_forward.14} parent=5 // pred_check_branch
      %91 = sbr.rel (%p88) target = $region24
    $region23: #{clip_vit_forward.14} parent=5 // pred_region
      %s92 = ssub.s32 %s7, 1
      %p93 = scmp.lt.s32.totalorder %s12, 1
      %s94 = scalar_select %p93, %s12, 1
      %s95 = smul.addr %s94, 9
      %s96 = smul.addr %s95, 4
      %s97 = scalar_lea.vmem %s0, %s96
      %p98 = pneg %p33
      %p99 = pneg %p30
      %p100 = pneg %p59
      %p101 = pneg %p56
      %p102 = scmp.lt.s32.totalorder %s12, 1
      %s103 = scalar_select %p102, %s12, 1
      %s104 = smul.addr %s103, 3
      %s105 = smul.addr %s104, 4
      %s106 = scalar_lea.vmem %s1, %s105
      %p107 = scmp.lt.s32.totalorder %s12, 1
      %s108 = scalar_select %p107, %s12, 1
      %s109 = smul.addr %s108, 9
      %s110 = smul.addr %s109, 4
      %s111 = scalar_lea.vmem %s0, %s110
      %p112 = scmp.lt.s32.totalorder %s12, 1
      %s113 = scalar_select %p112, %s12, 1
      %s114 = smul.addr %s113, 3
      %s115 = smul.addr %s114, 4
      %s116 = scalar_lea.vmem %s1, %s115
      %v118 = vld [vmem:[%s111] sm:$0xff]
      %v119 = vld [vmem:[%s111 + $0x8] sm:$0xf]
      %v120 = vld [vmem:[%s111 + $0xc] sm:$0xff]
      %v121 = vld [vmem:[%s111 + $0x14] sm:$0xf]
      %v122 = vld [vmem:[%s111 + $0x18] sm:$0xff]
      %v123 = vld [vmem:[%s111 + $0x20] sm:$0xf]
      %v124 = vlaneseq
      %v125 = vand.u32 %v124, 127
      %vm126 = vcmp.lt.s32.totalorder %v125, 17
      %v130 = vunpack.c.l.b16 %v118
      %v131 = vunpack.c.l.b16 %v120
      %v132 = vunpack.c.l.b16 %v122
      %v133 = vpack.c.b16 %v131, %v130
      %v134 = vpack.c.b16 %v132, %v132
      %v135 = vunpack.c.h.b16 %v118
      %v136 = vunpack.c.h.b16 %v120
      %v137 = vunpack.c.h.b16 %v122
      %v138 = vpack.c.b16 %v136, %v135
      %v139 = vpack.c.b16 %v137, %v137
      %vm140 = vcmask 261120
      %v142 = vsel %vm140, %v133, 0
      %v145 = vsel %vm140, %v134, 0
      %v148 = vsel %vm140, %v138, 0
      %v151 = vsel %vm140, %v139, 0
      %153 = vmatpush.bf16.xpose.msra.mxu0 0
      %154 = vmatpush.bf16.xpose.msra.mxu0 0
      %155 = vmatpush.bf16.xpose.msra.mxu0 0
      %156 = vmatpush.bf16.xpose.msra.mxu0 0
      %157 = vmatpush.bf16.xpose.msra.mxu0 0
      %158 = vmatpush.bf16.xpose.msra.mxu0 0
      %159 = vmatpush.bf16.xpose.msra.mxu0 %v151
      %160 = vmatpush.bf16.xpose.msra.mxu0 %v148
      %161 = vmatmul.bf16.gmra.mxu0 %v142
      %v162 = vpop.f32.mrf.mxu0
      %v163 = vadd.f32 0.0, %v162
      %v164 = vpop.f32.mrf.mxu0
      %v165 = vadd.f32 0.0, %v164
      %166 = vmatmul.bf16.gmra.mxu0 %v145
      %v167 = vpop.f32.mrf.mxu0
      %v168 = vadd.f32 0.0, %v167
      %v169 = vpop.f32.mrf.mxu0
      %170 = vdwg.mxu0
      %v171 = vsel %vm126, %v163, -1e+30
      %v172 = vsel %vm126, %v165, -1e+30
      %v173 = vsel %vm126, %v168, -1e+30
      %vm174 = vcmask 195584
      %v175 = vsel %vm174, %v171, -inf
      %176 = vmax.xlane.f32.xlu0 %v175
      %v177 = vpop.xlane.xlu0 %176
      %v178 = vsel %vm174, %v172, -inf
      %179 = vmax.xlane.f32.xlu0 %v178
      %v180 = vpop.xlane.xlu0 %179
      %v181 = vsel %vm174, %v173, -inf
      %182 = vmax.xlane.f32.xlu0 %v181
      %v183 = vpop.xlane.xlu0 %182
      %v184 = vsub.f32 %v171, %v177
      %v185 = vsub.f32 %v172, %v180
      %v186 = vsub.f32 %v173, %v183
      %v187 = vmul.f32 %v184, 1.442695
      %v188 = vpow.pop %v187
      %v189 = vmul.f32 %v185, 1.442695
      %v190 = vpow.pop %v189
      %v191 = vmul.f32 %v186, 1.442695
      %v192 = vpow.pop %v191
      %v193 = vsel %vm174, %v188, 0.0
      %194 = vadd.xlane.f32.xlu0 %v193
      %v195 = vpop.xlane.xlu0 %194
      %v196 = vsel %vm174, %v190, 0.0
      %197 = vadd.xlane.f32.xlu0 %v196
      %v198 = vpop.xlane.xlu0 %197
      %v199 = vsel %vm174, %v192, 0.0
      %200 = vadd.xlane.f32.xlu0 %v199
      %v201 = vpop.xlane.xlu0 %200
      %v202 = vrcp.pop %v195
      %v203 = vrcp.pop %v198
      %v204 = vrcp.pop %v201
      %v205 = vmul.f32 %v188, %v202
      %v206 = vmul.f32 %v190, %v203
      %v207 = vmul.f32 %v192, %v204
      %v208 = vpack.c.bf16 %v206, %v205
      %v209 = vpack.c.bf16 %v207, %v207
      %v213 = vunpack.c.l.b16 %v119
      %v214 = vunpack.c.l.b16 %v121
      %v215 = vunpack.c.l.b16 %v123
      %v216 = vpack.c.b16 %v214, %v213
      %v217 = vpack.c.b16 %v215, %v215
      %v220 = vsel %vm174, %v208, 0
      %v223 = vsel %vm174, %v209, 0
      %vm225 = vcmask 1043456
      %v227 = vsel %vm225, %v217, 0
      %229 = vmatpush.bf16.msra.mxu0 0
      %230 = vmatpush.bf16.msra.mxu0 0
      %231 = vmatpush.bf16.msra.mxu0 0
      %232 = vmatpush.bf16.msra.mxu0 0
      %233 = vmatpush.bf16.msra.mxu0 0
      %234 = vmatpush.bf16.msra.mxu0 0
      %235 = vmatpush.bf16.msra.mxu0 %v227
      %236 = vmatpush.bf16.msra.mxu0 %v216
      %237 = vmatmul.bf16.gmra.mxu0 %v220
      %v238 = vpop.f32.mrf.mxu0
      %v239 = vadd.f32 0.0, %v238
      %v240 = vpop.f32.mrf.mxu0
      %v241 = vadd.f32 0.0, %v240
      %242 = vmatmul.bf16.gmra.mxu0 %v223
      %v243 = vpop.f32.mrf.mxu0
      %v244 = vadd.f32 0.0, %v243
      %v245 = vpop.f32.mrf.mxu0
      %246 = vdwg.mxu0
      %247 = vrot.lane.b32.xlu0 %v133, 96
      %v248 = vpop.permute.xlu0 %247
      %249 = vrot.lane.b32.xlu0 %v134, 96
      %v250 = vpop.permute.xlu0 %249
      %251 = vrot.lane.b32.xlu0 %v138, 96
      %v252 = vpop.permute.xlu0 %251
      %253 = vrot.lane.b32.xlu0 %v139, 96
      %v254 = vpop.permute.xlu0 %253
      %v256 = vsel %vm140, %v248, 0
      %v259 = vsel %vm140, %v250, 0
      %v262 = vsel %vm140, %v252, 0
      %v265 = vsel %vm140, %v254, 0
      %267 = vmatpush.bf16.xpose.msra.mxu0 0
      %268 = vmatpush.bf16.xpose.msra.mxu0 0
      %269 = vmatpush.bf16.xpose.msra.mxu0 0
      %270 = vmatpush.bf16.xpose.msra.mxu0 0
      %271 = vmatpush.bf16.xpose.msra.mxu0 0
      %272 = vmatpush.bf16.xpose.msra.mxu0 0
      %273 = vmatpush.bf16.xpose.msra.mxu0 %v265
      %274 = vmatpush.bf16.xpose.msra.mxu0 %v262
      %275 = vmatmul.bf16.gmra.mxu0 %v256
      %v276 = vpop.f32.mrf.mxu0
      %v277 = vadd.f32 0.0, %v276
      %v278 = vpop.f32.mrf.mxu0
      %v279 = vadd.f32 0.0, %v278
      %280 = vmatmul.bf16.gmra.mxu0 %v259
      %v281 = vpop.f32.mrf.mxu0
      %v282 = vadd.f32 0.0, %v281
      %v283 = vpop.f32.mrf.mxu0
      %284 = vdwg.mxu0
      %v285 = vsel %vm126, %v277, -1e+30
      %v286 = vsel %vm126, %v279, -1e+30
      %v287 = vsel %vm126, %v282, -1e+30
      %v288 = vsel %vm174, %v285, -inf
      %289 = vmax.xlane.f32.xlu0 %v288
      %v290 = vpop.xlane.xlu0 %289
      %v291 = vsel %vm174, %v286, -inf
      %292 = vmax.xlane.f32.xlu0 %v291
      %v293 = vpop.xlane.xlu0 %292
      %v294 = vsel %vm174, %v287, -inf
      %295 = vmax.xlane.f32.xlu0 %v294
      %v296 = vpop.xlane.xlu0 %295
      %v297 = vsub.f32 %v285, %v290
      %v298 = vsub.f32 %v286, %v293
      %v299 = vsub.f32 %v287, %v296
      %v300 = vmul.f32 %v297, 1.442695
      %v301 = vpow.pop %v300
      %v302 = vmul.f32 %v298, 1.442695
      %v303 = vpow.pop %v302
      %v304 = vmul.f32 %v299, 1.442695
      %v305 = vpow.pop %v304
      %v306 = vsel %vm174, %v301, 0.0
      %307 = vadd.xlane.f32.xlu0 %v306
      %v308 = vpop.xlane.xlu0 %307
      %v309 = vsel %vm174, %v303, 0.0
      %310 = vadd.xlane.f32.xlu0 %v309
      %v311 = vpop.xlane.xlu0 %310
      %v312 = vsel %vm174, %v305, 0.0
      %313 = vadd.xlane.f32.xlu0 %v312
      %v314 = vpop.xlane.xlu0 %313
      %v315 = vrcp.pop %v308
      %v316 = vrcp.pop %v311
      %v317 = vrcp.pop %v314
      %v318 = vmul.f32 %v301, %v315
      %v319 = vmul.f32 %v303, %v316
      %v320 = vmul.f32 %v305, %v317
      %v321 = vpack.c.bf16 %v319, %v318
      %v322 = vpack.c.bf16 %v320, %v320
      %323 = vrot.lane.b32.xlu0 %v216, 96
      %v324 = vpop.permute.xlu0 %323
      %325 = vrot.lane.b32.xlu0 %v217, 96
      %v326 = vpop.permute.xlu0 %325
      %v329 = vsel %vm174, %v321, 0
      %v332 = vsel %vm174, %v322, 0
      %v335 = vsel %vm225, %v326, 0
      %337 = vmatpush.bf16.msra.mxu0 0
      %338 = vmatpush.bf16.msra.mxu0 0
      %339 = vmatpush.bf16.msra.mxu0 0
      %340 = vmatpush.bf16.msra.mxu0 0
      %341 = vmatpush.bf16.msra.mxu0 0
      %342 = vmatpush.bf16.msra.mxu0 0
      %343 = vmatpush.bf16.msra.mxu0 %v335
      %344 = vmatpush.bf16.msra.mxu0 %v324
      %345 = vmatmul.bf16.gmra.mxu0 %v329
      %v346 = vpop.f32.mrf.mxu0
      %v347 = vadd.f32 0.0, %v346
      %v348 = vpop.f32.mrf.mxu0
      %v349 = vadd.f32 0.0, %v348
      %350 = vmatmul.bf16.gmra.mxu0 %v332
      %v351 = vpop.f32.mrf.mxu0
      %v352 = vadd.f32 0.0, %v351
      %v353 = vpop.f32.mrf.mxu0
      %354 = vdwg.mxu0
      %355 = vrot.lane.b32.xlu0 %v133, 64
      %v356 = vpop.permute.xlu0 %355
      %357 = vrot.lane.b32.xlu0 %v134, 64
      %v358 = vpop.permute.xlu0 %357
      %359 = vrot.lane.b32.xlu0 %v138, 64
      %v360 = vpop.permute.xlu0 %359
      %361 = vrot.lane.b32.xlu0 %v139, 64
      %v362 = vpop.permute.xlu0 %361
      %v364 = vsel %vm140, %v356, 0
      %v367 = vsel %vm140, %v358, 0
      %v370 = vsel %vm140, %v360, 0
      %v373 = vsel %vm140, %v362, 0
      %375 = vmatpush.bf16.xpose.msra.mxu0 0
      %376 = vmatpush.bf16.xpose.msra.mxu0 0
      %377 = vmatpush.bf16.xpose.msra.mxu0 0
      %378 = vmatpush.bf16.xpose.msra.mxu0 0
      %379 = vmatpush.bf16.xpose.msra.mxu0 0
      %380 = vmatpush.bf16.xpose.msra.mxu0 0
      %381 = vmatpush.bf16.xpose.msra.mxu0 %v373
      %382 = vmatpush.bf16.xpose.msra.mxu0 %v370
      %383 = vmatmul.bf16.gmra.mxu0 %v364
      %v384 = vpop.f32.mrf.mxu0
      %v385 = vadd.f32 0.0, %v384
      %v386 = vpop.f32.mrf.mxu0
      %v387 = vadd.f32 0.0, %v386
      %388 = vmatmul.bf16.gmra.mxu0 %v367
      %v389 = vpop.f32.mrf.mxu0
      %v390 = vadd.f32 0.0, %v389
      %v391 = vpop.f32.mrf.mxu0
      %392 = vdwg.mxu0
      %v393 = vsel %vm126, %v385, -1e+30
      %v394 = vsel %vm126, %v387, -1e+30
      %v395 = vsel %vm126, %v390, -1e+30
      %v396 = vsel %vm174, %v393, -inf
      %397 = vmax.xlane.f32.xlu0 %v396
      %v398 = vpop.xlane.xlu0 %397
      %v399 = vsel %vm174, %v394, -inf
      %400 = vmax.xlane.f32.xlu0 %v399
      %v401 = vpop.xlane.xlu0 %400
      %v402 = vsel %vm174, %v395, -inf
      %403 = vmax.xlane.f32.xlu0 %v402
      %v404 = vpop.xlane.xlu0 %403
      %v405 = vsub.f32 %v393, %v398
      %v406 = vsub.f32 %v394, %v401
      %v407 = vsub.f32 %v395, %v404
      %v408 = vmul.f32 %v405, 1.442695
      %v409 = vpow.pop %v408
      %v410 = vmul.f32 %v406, 1.442695
      %v411 = vpow.pop %v410
      %v412 = vmul.f32 %v407, 1.442695
      %v413 = vpow.pop %v412
      %v414 = vsel %vm174, %v409, 0.0
      %415 = vadd.xlane.f32.xlu0 %v414
      %v416 = vpop.xlane.xlu0 %415
      %v417 = vsel %vm174, %v411, 0.0
      %418 = vadd.xlane.f32.xlu0 %v417
      %v419 = vpop.xlane.xlu0 %418
      %v420 = vsel %vm174, %v413, 0.0
      %421 = vadd.xlane.f32.xlu0 %v420
      %v422 = vpop.xlane.xlu0 %421
      %v423 = vrcp.pop %v416
      %v424 = vrcp.pop %v419
      %v425 = vrcp.pop %v422
      %v426 = vmul.f32 %v409, %v423
      %v427 = vmul.f32 %v411, %v424
      %v428 = vmul.f32 %v413, %v425
      %v429 = vpack.c.bf16 %v427, %v426
      %v430 = vpack.c.bf16 %v428, %v428
      %431 = vrot.lane.b32.xlu0 %v216, 64
      %v432 = vpop.permute.xlu0 %431
      %433 = vrot.lane.b32.xlu0 %v217, 64
      %v434 = vpop.permute.xlu0 %433
      %v437 = vsel %vm174, %v429, 0
      %v440 = vsel %vm174, %v430, 0
      %v443 = vsel %vm225, %v434, 0
      %445 = vmatpush.bf16.msra.mxu0 0
      %446 = vmatpush.bf16.msra.mxu0 0
      %447 = vmatpush.bf16.msra.mxu0 0
      %448 = vmatpush.bf16.msra.mxu0 0
      %449 = vmatpush.bf16.msra.mxu0 0
      %450 = vmatpush.bf16.msra.mxu0 0
      %451 = vmatpush.bf16.msra.mxu0 %v443
      %452 = vmatpush.bf16.msra.mxu0 %v432
      %453 = vmatmul.bf16.gmra.mxu0 %v437
      %v454 = vpop.f32.mrf.mxu0
      %v455 = vadd.f32 0.0, %v454
      %v456 = vpop.f32.mrf.mxu0
      %v457 = vadd.f32 0.0, %v456
      %458 = vmatmul.bf16.gmra.mxu0 %v440
      %v459 = vpop.f32.mrf.mxu0
      %v460 = vadd.f32 0.0, %v459
      %v461 = vpop.f32.mrf.mxu0
      %462 = vdwg.mxu0
      %463 = vrot.lane.b32.xlu0 %v133, 32
      %v464 = vpop.permute.xlu0 %463
      %465 = vrot.lane.b32.xlu0 %v134, 32
      %v466 = vpop.permute.xlu0 %465
      %467 = vrot.lane.b32.xlu0 %v138, 32
      %v468 = vpop.permute.xlu0 %467
      %469 = vrot.lane.b32.xlu0 %v139, 32
      %v470 = vpop.permute.xlu0 %469
      %v472 = vsel %vm140, %v464, 0
      %v475 = vsel %vm140, %v466, 0
      %v478 = vsel %vm140, %v468, 0
      %v481 = vsel %vm140, %v470, 0
      %483 = vmatpush.bf16.xpose.msra.mxu0 0
      %484 = vmatpush.bf16.xpose.msra.mxu0 0
      %485 = vmatpush.bf16.xpose.msra.mxu0 0
      %486 = vmatpush.bf16.xpose.msra.mxu0 0
      %487 = vmatpush.bf16.xpose.msra.mxu0 0
      %488 = vmatpush.bf16.xpose.msra.mxu0 0
      %489 = vmatpush.bf16.xpose.msra.mxu0 %v481
      %490 = vmatpush.bf16.xpose.msra.mxu0 %v478
      %491 = vmatmul.bf16.gmra.mxu0 %v472
      %v492 = vpop.f32.mrf.mxu0
      %v493 = vadd.f32 0.0, %v492
      %v494 = vpop.f32.mrf.mxu0
      %v495 = vadd.f32 0.0, %v494
      %496 = vmatmul.bf16.gmra.mxu0 %v475
      %v497 = vpop.f32.mrf.mxu0
      %v498 = vadd.f32 0.0, %v497
      %v499 = vpop.f32.mrf.mxu0
      %500 = vdwg.mxu0
      %v501 = vsel %vm126, %v493, -1e+30
      %v502 = vsel %vm126, %v495, -1e+30
      %v503 = vsel %vm126, %v498, -1e+30
      %v504 = vsel %vm174, %v501, -inf
      %505 = vmax.xlane.f32.xlu0 %v504
      %v506 = vpop.xlane.xlu0 %505
      %v507 = vsel %vm174, %v502, -inf
      %508 = vmax.xlane.f32.xlu0 %v507
      %v509 = vpop.xlane.xlu0 %508
      %v510 = vsel %vm174, %v503, -inf
      %511 = vmax.xlane.f32.xlu0 %v510
      %v512 = vpop.xlane.xlu0 %511
      %v513 = vsub.f32 %v501, %v506
      %v514 = vsub.f32 %v502, %v509
      %v515 = vsub.f32 %v503, %v512
      %v516 = vmul.f32 %v513, 1.442695
      %v517 = vpow.pop %v516
      %v518 = vmul.f32 %v514, 1.442695
      %v519 = vpow.pop %v518
      %v520 = vmul.f32 %v515, 1.442695
      %v521 = vpow.pop %v520
      %v522 = vsel %vm174, %v517, 0.0
      %523 = vadd.xlane.f32.xlu0 %v522
      %v524 = vpop.xlane.xlu0 %523
      %v525 = vsel %vm174, %v519, 0.0
      %526 = vadd.xlane.f32.xlu0 %v525
      %v527 = vpop.xlane.xlu0 %526
      %v528 = vsel %vm174, %v521, 0.0
      %529 = vadd.xlane.f32.xlu0 %v528
      %v530 = vpop.xlane.xlu0 %529
      %v531 = vrcp.pop %v524
      %v532 = vrcp.pop %v527
      %v533 = vrcp.pop %v530
      %v534 = vmul.f32 %v517, %v531
      %v535 = vmul.f32 %v519, %v532
      %v536 = vmul.f32 %v521, %v533
      %v537 = vpack.c.bf16 %v535, %v534
      %v538 = vpack.c.bf16 %v536, %v536
      %539 = vrot.lane.b32.xlu0 %v216, 32
      %v540 = vpop.permute.xlu0 %539
      %541 = vrot.lane.b32.xlu0 %v217, 32
      %v542 = vpop.permute.xlu0 %541
      %v545 = vsel %vm174, %v537, 0
      %v548 = vsel %vm174, %v538, 0
      %v551 = vsel %vm225, %v542, 0
      %553 = vmatpush.bf16.msra.mxu0 0
      %554 = vmatpush.bf16.msra.mxu0 0
      %555 = vmatpush.bf16.msra.mxu0 0
      %556 = vmatpush.bf16.msra.mxu0 0
      %557 = vmatpush.bf16.msra.mxu0 0
      %558 = vmatpush.bf16.msra.mxu0 0
      %559 = vmatpush.bf16.msra.mxu0 %v551
      %560 = vmatpush.bf16.msra.mxu0 %v540
      %561 = vmatmul.bf16.gmra.mxu0 %v545
      %v562 = vpop.f32.mrf.mxu0
      %v563 = vadd.f32 0.0, %v562
      %v564 = vpop.f32.mrf.mxu0
      %v565 = vadd.f32 0.0, %v564
      %566 = vmatmul.bf16.gmra.mxu0 %v548
      %v567 = vpop.f32.mrf.mxu0
      %v568 = vadd.f32 0.0, %v567
      %v569 = vpop.f32.mrf.mxu0
      %570 = vdwg.mxu0
      %574 = vrot.lane.b32.xlu0 %v347, 32
      %v575 = vpop.permute.xlu0 %574
      %576 = vrot.lane.b32.xlu0 %v349, 32
      %v577 = vpop.permute.xlu0 %576
      %578 = vrot.lane.b32.xlu0 %v352, 32
      %v579 = vpop.permute.xlu0 %578
      %586 = vrot.lane.b32.xlu0 %v455, 64
      %v587 = vpop.permute.xlu0 %586
      %588 = vrot.lane.b32.xlu0 %v457, 64
      %v589 = vpop.permute.xlu0 %588
      %590 = vrot.lane.b32.xlu0 %v460, 64
      %v591 = vpop.permute.xlu0 %590
      %598 = vrot.lane.b32.xlu0 %v563, 96
      %v599 = vpop.permute.xlu0 %598
      %600 = vrot.lane.b32.xlu0 %v565, 96
      %v601 = vpop.permute.xlu0 %600
      %602 = vrot.lane.b32.xlu0 %v568, 96
      %v603 = vpop.permute.xlu0 %602
      %v607 = vsel %vm140, %v239, %v575
      %v608 = vsel %vm140, %v241, %v577
      %v609 = vsel %vm140, %v244, %v579
      %vm610 = vcmask 523264
      %v611 = vsel %vm610, %v607, %v587
      %v612 = vsel %vm610, %v608, %v589
      %v613 = vsel %vm610, %v609, %v591
      %vm614 = vcmask 785408
      %v615 = vsel %vm614, %v611, %v599
      %v616 = vsel %vm614, %v612, %v601
      %v617 = vsel %vm614, %v613, %v603
      %v618 = vpack.c.bf16 %v615, %v615
      %v619 = vpack.c.bf16 %v616, %v616
      %v620 = vpack.c.bf16 %v617, %v617
      %621 = vst [vmem:[%s116] sm:$0xf] %v618
      %622 = vst [vmem:[%s116 + $0x4] sm:$0xf] %v619
      %623 = vst [vmem:[%s116 + $0x8] sm:$0xf] %v620
      %p624 = scmp.lt.s32.totalorder %s12, 1
      %s625 = scalar_select %p624, %s12, 1
      %s626 = smul.addr %s625, 3
      %s627 = smul.addr %s626, 4
      %s628 = scalar_lea.vmem %s1, %s627
      // Predicated region
      $region25: #{clip_vit_forward.14} parent=23 // pred_check
        %p629 = pneg %p56
      $region26: #{clip_vit_forward.14} parent=23 // pred_check_branch
        %631 = sbr.rel (%p629) target = $region28
      $region27: #{clip_vit_forward.14} parent=23 // pred_region
        _
      $region28: #{clip_vit_forward.14} parent=23 // pred_fallthru
        _
    $region24: #{clip_vit_forward.14} parent=5 // pred_fallthru
      _
    %p632 = scmp.le.s32.totalorder 2, %s7
    // Predicated region
    $region29: #{clip_vit_forward.14} parent=5 // pred_check
      %p633 = pneg %p632
    $region30: #{clip_vit_forward.14} parent=5 // pred_check_branch
      %635 = sbr.rel (%p633) target = $region32
    $region31: #{clip_vit_forward.14} parent=5 // pred_region
      %s636 = ssub.s32 %s7, 2
      // Predicated region
      $region33: #{clip_vit_forward.14} parent=31 // pred_check
        %p637 = pneg %p62
      $region34: #{clip_vit_forward.14} parent=31 // pred_check_branch
        %639 = sbr.rel (%p637) target = $region36
      $region35: #{clip_vit_forward.14} parent=31 // pred_region
        %p640 = scmp.lt.s32.totalorder %s13, 1
        %s641 = scalar_select %p640, %s13, 1
        %s642 = smul.addr %s641, 3
        %s643 = smul.addr %s642, 4
        %s644 = scalar_lea.vmem %s1, %s643
      $region36: #{clip_vit_forward.14} parent=31 // pred_fallthru
        _
    $region32: #{clip_vit_forward.14} parent=5 // pred_fallthru
      _
  $region6: #{clip_vit_forward.14} parent=0 // loop_footer
    %s11 = sadd.s32 1, %s7
  $region7: #{clip_vit_forward.14} parent=0 // loop_footer_branch
    %6 = sbr.rel target = $region3
  $region8: #{clip_vit_forward.14} parent=0 // loop_exit
    _

// kernel: clip_vit_forward.16
$region0: #{clip_vit_forward.16}
  #allocation0 [shape = 'u32[]', space=smem, size = 0x4, offset = 0x4, fixed_abs, tag = 'smem constant byte address 0x4 - core index']
  #allocation1 [shape = 'u32[72,128]{1,0:T(1,128)}', space=vmem, size = 0x9000, scoped, tag = 'internal scratch']
  %s0 = inlined_call_operand.vmem [shape: bf16[48,512], index: 0, kind: input, shape index: {}]
  %s1 = inlined_call_operand.vmem [shape: bf16[512,128], index: 1, kind: input, shape index: {}]
  %s2 = inlined_call_operand.vmem [shape: f32[1,128], index: 2, kind: input, shape index: {}]
  %s3 = inlined_call_operand.vmem [shape: bf16[48,128], index: 3, kind: input, shape index: {}]
  %s4 = inlined_call_operand.vmem [shape: bf16[48,128], index: 4, kind: output, shape index: {}]
  %s5 = sld [smem:[#allocation0]]
  $region49: #{clip_vit_forward.16} parent=0
    _
  %s7 = ssub.s32 1, %s5
  %s8 = scalar_select 0, %s7, %s5
  loop: start=0, step=1, limit=4
  $region2: #{clip_vit_forward.16} parent=0 // loop_pre_header
    _
  $region3: #{clip_vit_forward.16} parent=0 // loop_header
    %s10 = sphi 0, %s14
    %p11 = scmp.ge.s32.totalorder %s10, 4
    %s20 = sphi 0, %s22
    %s23 = sphi 0, %s20
    %s24 = sphi 0, %s23
    %s40 = sphi 0, %s24
    %s44 = sphi 0, %s44
    %s46 = sphi 0, %s44
    %s47 = sphi 0, %s46
    %s61 = sphi 0, %s47
    %s65 = sphi 0, %s65
    %s67 = sphi 0, %s65
    %s68 = sphi 0, %s67
    %s82 = sphi 0, %s68
    %s88 = sphi 0, %s90
    %s91 = sphi 0, %s88
    %s92 = sphi 0, %s91
    %s108 = sphi 0, %s92
    %s114 = sphi 0, %s116
    %s117 = sphi 0, %s114
    %s118 = sphi 0, %s117
    %s134 = sphi 0, %s118
  $region4: #{clip_vit_forward.16} parent=0 // loop_header_branch
    %13 = sbr.rel (%p11) target = $region8
  $region5: #{clip_vit_forward.16} parent=0 // loop_body
    %s15 = ssub.s32 %s10, 1
    %s16 = ssub.s32 %s10, 2
    %s17 = sadd.s32 %s10, 1
    %s18 = ssub.s32 %s10, %s17
    %p19 = scmp.eq.s32.totalorder %s18, 0
    %s21 = sadd.s32 %s20, 1
    %s22 = scalar_select %p19, %s20, %s21
    %p25 = pneg %p19
    %p26 = scmp.eq.s32.totalorder %s10, 1
    %p27 = por %p25, %p26
    %p28 = scmp.ne.s32.totalorder %s20, %s23
    %p29 = scmp.eq.s32.totalorder %s10, 0
    %p30 = por %p28, %p29
    %p31 = scmp.ne.s32.totalorder %s20, %s23
    %p32 = scmp.eq.s32.totalorder %s15, 1
    %p33 = por %p31, %p32
    %p34 = scmp.ne.s32.totalorder %s23, %s24
    %p35 = scmp.eq.s32.totalorder %s15, 0
    %p36 = por %p34, %p35
    %p37 = scmp.ne.s32.totalorder %s23, %s24
    %p38 = scmp.eq.s32.totalorder %s16, 1
    %p39 = por %p37, %p38
    %p41 = scmp.ne.s32.totalorder %s24, %s40
    %p42 = scmp.eq.s32.totalorder %s16, 0
    %p43 = por %p41, %p42
    %s45 = sadd.s32 %s44, 1
    %p48 = scmp.eq.s32.totalorder %s10, 1
    %p49 = scmp.ne.s32.totalorder %s44, %s46
    %p50 = scmp.eq.s32.totalorder %s10, 0
    %p51 = por %p49, %p50
    %p52 = scmp.ne.s32.totalorder %s44, %s46
    %p53 = scmp.eq.s32.totalorder %s15, 1
    %p54 = por %p52, %p53
    %p55 = scmp.ne.s32.totalorder %s46, %s47
    %p56 = scmp.eq.s32.totalorder %s15, 0
    %p57 = por %p55, %p56
    %p58 = scmp.ne.s32.totalorder %s46, %s47
    %p59 = scmp.eq.s32.totalorder %s16, 1
    %p60 = por %p58, %p59
    %p62 = scmp.ne.s32.totalorder %s47, %s61
    %p63 = scmp.eq.s32.totalorder %s16, 0
    %p64 = por %p62, %p63
    %s66 = sadd.s32 %s65, 1
    %p69 = scmp.eq.s32.totalorder %s10, 1
    %p70 = scmp.ne.s32.totalorder %s65, %s67
    %p71 = scmp.eq.s32.totalorder %s10, 0
    %p72 = por %p70, %p71
    %p73 = scmp.ne.s32.totalorder %s65, %s67
    %p74 = scmp.eq.s32.totalorder %s15, 1
    %p75 = por %p73, %p74
    %p76 = scmp.ne.s32.totalorder %s67, %s68
    %p77 = scmp.eq.s32.totalorder %s15, 0
    %p78 = por %p76, %p77
    %p79 = scmp.ne.s32.totalorder %s67, %s68
    %p80 = scmp.eq.s32.totalorder %s16, 1
    %p81 = por %p79, %p80
    %p83 = scmp.ne.s32.totalorder %s68, %s82
    %p84 = scmp.eq.s32.totalorder %s16, 0
    %p85 = por %p83, %p84
    %s86 = ssub.s32 %s10, %s17
    %p87 = scmp.eq.s32.totalorder %s86, 0
    %s89 = sadd.s32 %s88, 1
    %s90 = scalar_select %p87, %s88, %s89
    %p93 = pneg %p87
    %p94 = scmp.eq.s32.totalorder %s10, 1
    %p95 = por %p93, %p94
    %p96 = scmp.ne.s32.totalorder %s88, %s91
    %p97 = scmp.eq.s32.totalorder %s10, 0
    %p98 = por %p96, %p97
    %p99 = scmp.ne.s32.totalorder %s88, %s91
    %p100 = scmp.eq.s32.totalorder %s15, 1
    %p101 = por %p99, %p100
    %p102 = scmp.ne.s32.totalorder %s91, %s92
    %p103 = scmp.eq.s32.totalorder %s15, 0
    %p104 = por %p102, %p103
    %p105 = scmp.ne.s32.totalorder %s91, %s92
    %p106 = scmp.eq.s32.totalorder %s16, 1
    %p107 = por %p105, %p106
    %p109 = scmp.ne.s32.totalorder %s92, %s108
    %p110 = scmp.eq.s32.totalorder %s16, 0
    %p111 = por %p109, %p110
    %s112 = ssub.s32 %s10, %s17
    %p113 = scmp.eq.s32.totalorder %s112, 0
    %s115 = sadd.s32 %s114, 1
    %s116 = scalar_select %p113, %s114, %s115
    %p119 = pneg %p113
    %p120 = scmp.eq.s32.totalorder %s10, 1
    %p121 = por %p119, %p120
    %p122 = scmp.ne.s32.totalorder %s114, %s117
    %p123 = scmp.eq.s32.totalorder %s10, 0
    %p124 = por %p122, %p123
    %p125 = scmp.ne.s32.totalorder %s114, %s117
    %p126 = scmp.eq.s32.totalorder %s15, 1
    %p127 = por %p125, %p126
    %p128 = scmp.ne.s32.totalorder %s117, %s118
    %p129 = scmp.eq.s32.totalorder %s15, 0
    %p130 = por %p128, %p129
    %p131 = scmp.ne.s32.totalorder %s117, %s118
    %p132 = scmp.eq.s32.totalorder %s16, 1
    %p133 = por %p131, %p132
    %p135 = scmp.ne.s32.totalorder %s118, %s134
    %p136 = scmp.eq.s32.totalorder %s16, 0
    %p137 = por %p135, %p136
    %p138 = scmp.le.s32.totalorder 1, %s10
    %p139 = scmp.lt.s32.totalorder %s10, 3
    %p140 = pnand %p138, %p139
    %p141 = pneg %p140
    // Predicated region
    $region9: #{clip_vit_forward.16} parent=5 // pred_check
      _
    $region10: #{clip_vit_forward.16} parent=5 // pred_check_branch
      %143 = sbr.rel (%p140) target = $region12
    $region11: #{clip_vit_forward.16} parent=5 // pred_region
      %s144 = ssub.s32 %s10, 1
      // Predicated region
      $region13: #{clip_vit_forward.16} parent=11 // pred_check
        %p145 = pneg %p57
      $region14: #{clip_vit_forward.16} parent=11 // pred_check_branch
        %147 = sbr.rel (%p145) target = $region16
      $region15: #{clip_vit_forward.16} parent=11 // pred_region
        _
      $region16: #{clip_vit_forward.16} parent=11 // pred_fallthru
        _
      // Predicated region
      $region17: #{clip_vit_forward.16} parent=11 // pred_check
        %p148 = pneg %p78
      $region18: #{clip_vit_forward.16} parent=11 // pred_check_branch
        %150 = sbr.rel (%p148) target = $region20
      $region19: #{clip_vit_forward.16} parent=11 // pred_region
        _
      $region20: #{clip_vit_forward.16} parent=11 // pred_fallthru
        _
    $region12: #{clip_vit_forward.16} parent=5 // pred_fallthru
      _
    %p151 = scmp.lt.s32.totalorder %s10, 2
    // Predicated region
    $region21: #{clip_vit_forward.16} parent=5 // pred_check
      %p152 = pneg %p151
    $region22: #{clip_vit_forward.16} parent=5 // pred_check_branch
      %154 = sbr.rel (%p152) target = $region24
    $region23: #{clip_vit_forward.16} parent=5 // pred_region
      // Predicated region
      $region25: #{clip_vit_forward.16} parent=23 // pred_check
        %p155 = pneg %p30
      $region26: #{clip_vit_forward.16} parent=23 // pred_check_branch
        %157 = sbr.rel (%p155) target = $region28
      $region27: #{clip_vit_forward.16} parent=23 // pred_region
        %s158 = smul.u32 3, %s10
        %p159 = scmp.lt.s32.totalorder %s158, 5
        %s160 = scalar_select %p159, %s158, 5
        %s161 = smul.addr %s160, 4
        %s162 = smul.addr %s161, 4
        %s163 = scalar_lea.vmem %s0, %s162
        %s164 = smul.u32 3, %s10
      $region28: #{clip_vit_forward.16} parent=23 // pred_fallthru
        _
      // Predicated region
      $region29: #{clip_vit_forward.16} parent=23 // pred_check
        %p165 = pneg %p98
      $region30: #{clip_vit_forward.16} parent=23 // pred_check_branch
        %167 = sbr.rel (%p165) target = $region32
      $region31: #{clip_vit_forward.16} parent=23 // pred_region
        %s168 = smul.u32 3, %s10
        %p169 = scmp.lt.s32.totalorder %s168, 5
        %s170 = scalar_select %p169, %s168, 5
        %s171 = smul.addr %s170, 4
        %s172 = scalar_lea.vmem %s3, %s171
        %s173 = smul.u32 3, %s10
      $region32: #{clip_vit_forward.16} parent=23 // pred_fallthru
        _
    $region24: #{clip_vit_forward.16} parent=5 // pred_fallthru
      _
    %p174 = scmp.le.s32.totalorder 1, %s10
    %p175 = scmp.lt.s32.totalorder %s10, 3
    %p176 = pnand %p174, %p175
    %p177 = pneg %p176
    // Predicated region
    $region33: #{clip_vit_forward.16} parent=5 // pred_check
      _
    $region34: #{clip_vit_forward.16} parent=5 // pred_check_branch
      %179 = sbr.rel (%p176) target = $region36
    $region35: #{clip_vit_forward.16} parent=5 // pred_region
      %s180 = ssub.s32 %s10, 1
      %s181 = smul.u32 3, %s15
      %p182 = scmp.lt.s32.totalorder %s181, 5
      %s183 = scalar_select %p182, %s181, 5
      %s184 = smul.addr %s183, 4
      %s185 = smul.addr %s184, 4
      %s186 = scalar_lea.vmem %s0, %s185
      %p187 = pneg %p36
      %p188 = pneg %p33
      %p189 = pneg %p57
      %p190 = pneg %p54
      %p191 = pneg %p78
      %p192 = pneg %p75
      %s193 = smul.u32 3, %s15
      %p194 = scmp.lt.s32.totalorder %s193, 5
      %s195 = scalar_select %p194, %s193, 5
      %s196 = smul.addr %s195, 4
      %s197 = scalar_lea.vmem %s3, %s196
      %p198 = pneg %p104
      %p199 = pneg %p101
      %p200 = pneg %p130
      %p201 = pneg %p127
      %s202 = smul.u32 3, %s15
      %p203 = scmp.lt.s32.totalorder %s202, 5
      %s204 = scalar_select %p203, %s202, 5
      %s205 = smul.addr %s204, 4
      %s206 = scalar_lea.vmem %s4, %s205
      %s207 = smul.u32 3, %s15
      %p208 = scmp.lt.s32.totalorder %s207, 5
      %s209 = scalar_select %p208, %s207, 5
      %s210 = smul.addr %s209, 4
      %s211 = smul.addr %s210, 4
      %s212 = scalar_lea.vmem %s0, %s211
      %s213 = smul.u32 3, %s15
      %s214 = smul.u32 3, %s15
      %p215 = scmp.lt.s32.totalorder %s214, 5
      %s216 = scalar_select %p215, %s214, 5
      %s217 = smul.addr %s216, 4
      %s218 = scalar_lea.vmem %s3, %s217
      %s219 = smul.u32 3, %s15
      %s220 = smul.u32 3, %s15
      %p221 = scmp.lt.s32.totalorder %s220, 5
      %s222 = scalar_select %p221, %s220, 5
      %s223 = smul.addr %s222, 4
      %s224 = scalar_lea.vmem %s4, %s223
      %s225 = smul.u32 3, %s15
      %v226 = vld [vmem:[%s212] sm:$0xff]
      %v227 = vld [vmem:[%s212 + $0x8] sm:$0xff]
      %v228 = vld [vmem:[%s212 + $0x10] sm:$0xff]
      %v229 = vld [vmem:[%s212 + $0x18] sm:$0xff]
      %v230 = vld [vmem:[%s212 + $0x20] sm:$0xff]
      %v231 = vld [vmem:[%s212 + $0x28] sm:$0xff]
      %v232 = vld [vmem:[%s1] sm:$0xf]
      %v233 = vld [vmem:[%s1 + $0x4] sm:$0xf]
      %v234 = vld [vmem:[%s1 + $0x8] sm:$0xf]
      %v235 = vld [vmem:[%s1 + $0xc] sm:$0xf]
      %v236 = vld [vmem:[%s1 + $0x10] sm:$0xf]
      %v237 = vld [vmem:[%s1 + $0x14] sm:$0xf]
      %v238 = vld [vmem:[%s1 + $0x18] sm:$0xf]
      %v239 = vld [vmem:[%s1 + $0x1c] sm:$0xf]
      %v240 = vld [vmem:[%s1 + $0x20] sm:$0xf]
      %v241 = vld [vmem:[%s1 + $0x24] sm:$0xf]
      %v242 = vld [vmem:[%s1 + $0x28] sm:$0xf]
      %v243 = vld [vmem:[%s1 + $0x2c] sm:$0xf]
      %v244 = vld [vmem:[%s1 + $0x30] sm:$0xf]
      %v245 = vld [vmem:[%s1 + $0x34] sm:$0xf]
      %v246 = vld [vmem:[%s1 + $0x38] sm:$0xf]
      %v247 = vld [vmem:[%s1 + $0x3c] sm:$0xf]
      %v248 = vld [vmem:[%s1 + $0x40] sm:$0xf]
      %v249 = vld [vmem:[%s1 + $0x44] sm:$0xf]
      %v250 = vld [vmem:[%s1 + $0x48] sm:$0xf]
      %v251 = vld [vmem:[%s1 + $0x4c] sm:$0xf]
      %v252 = vld [vmem:[%s1 + $0x50] sm:$0xf]
      %v253 = vld [vmem:[%s1 + $0x54] sm:$0xf]
      %v254 = vld [vmem:[%s1 + $0x58] sm:$0xf]
      %v255 = vld [vmem:[%s1 + $0x5c] sm:$0xf]
      %v256 = vld [vmem:[%s1 + $0x60] sm:$0xf]
      %v257 = vld [vmem:[%s1 + $0x64] sm:$0xf]
      %v258 = vld [vmem:[%s1 + $0x68] sm:$0xf]
      %v259 = vld [vmem:[%s1 + $0x6c] sm:$0xf]
      %v260 = vld [vmem:[%s1 + $0x70] sm:$0xf]
      %v261 = vld [vmem:[%s1 + $0x74] sm:$0xf]
      %v262 = vld [vmem:[%s1 + $0x78] sm:$0xf]
      %v263 = vld [vmem:[%s1 + $0x7c] sm:$0xf]
      %v264 = vld [vmem:[%s1 + $0x80] sm:$0xf]
      %v265 = vld [vmem:[%s1 + $0x84] sm:$0xf]
      %v266 = vld [vmem:[%s1 + $0x88] sm:$0xf]
      %v267 = vld [vmem:[%s1 + $0x8c] sm:$0xf]
      %v268 = vld [vmem:[%s1 + $0x90] sm:$0xf]
      %v269 = vld [vmem:[%s1 + $0x94] sm:$0xf]
      %v270 = vld [vmem:[%s1 + $0x98] sm:$0xf]
      %v271 = vld [vmem:[%s1 + $0x9c] sm:$0xf]
      %v272 = vld [vmem:[%s1 + $0xa0] sm:$0xf]
      %v273 = vld [vmem:[%s1 + $0xa4] sm:$0xf]
      %v274 = vld [vmem:[%s1 + $0xa8] sm:$0xf]
      %v275 = vld [vmem:[%s1 + $0xac] sm:$0xf]
      %v276 = vld [vmem:[%s1 + $0xb0] sm:$0xf]
      %v277 = vld [vmem:[%s1 + $0xb4] sm:$0xf]
      %v278 = vld [vmem:[%s1 + $0xb8] sm:$0xf]
      %v279 = vld [vmem:[%s1 + $0xbc] sm:$0xf]
      %v280 = vld [vmem:[%s1 + $0xc0] sm:$0xf]
      %v281 = vld [vmem:[%s1 + $0xc4] sm:$0xf]
      %v282 = vld [vmem:[%s1 + $0xc8] sm:$0xf]
      %v283 = vld [vmem:[%s1 + $0xcc] sm:$0xf]
      %v284 = vld [vmem:[%s1 + $0xd0] sm:$0xf]
      %v285 = vld [vmem:[%s1 + $0xd4] sm:$0xf]
      %v286 = vld [vmem:[%s1 + $0xd8] sm:$0xf]
      %v287 = vld [vmem:[%s1 + $0xdc] sm:$0xf]
      %v288 = vld [vmem:[%s1 + $0xe0] sm:$0xf]
      %v289 = vld [vmem:[%s1 + $0xe4] sm:$0xf]
      %v290 = vld [vmem:[%s1 + $0xe8] sm:$0xf]
      %v291 = vld [vmem:[%s1 + $0xec] sm:$0xf]
      %v292 = vld [vmem:[%s1 + $0xf0] sm:$0xf]
      %v293 = vld [vmem:[%s1 + $0xf4] sm:$0xf]
      %v294 = vld [vmem:[%s1 + $0xf8] sm:$0xf]
      %v295 = vld [vmem:[%s1 + $0xfc] sm:$0xf]
      %v296 = vld [vmem:[%s2] sm:$0x1]
      %v298 = vperm.slane %v296, 0
      %v306 = vunpack.c.l.b16 %v226
      %v307 = vunpack.c.h.b16 %v226
      %v308 = vunpack.c.l.b16 %v227
      %v309 = vunpack.c.h.b16 %v227
      %v310 = vunpack.c.l.b16 %v228
      %v311 = vunpack.c.h.b16 %v228
      %v312 = vunpack.c.l.b16 %v229
      %v313 = vunpack.c.h.b16 %v229
      %v314 = vunpack.c.l.b16 %v230
      %v315 = vunpack.c.h.b16 %v230
      %v316 = vunpack.c.l.b16 %v231
      %v317 = vunpack.c.h.b16 %v231
      %v318 = vpack.c.b16 %v310, %v306
      %v319 = vpack.c.b16 %v311, %v307
      %v320 = vpack.c.b16 %v312, %v308
      %v321 = vpack.c.b16 %v313, %v309
      %v322 = vpack.c.b16 %v314, %v314
      %v323 = vpack.c.b16 %v315, %v315
      %v324 = vpack.c.b16 %v316, %v316
      %v325 = vpack.c.b16 %v317, %v317
      %v398 = vunpack.c.l.b16 %v232
      %v399 = vunpack.c.l.b16 %v233
      %v400 = vunpack.c.l.b16 %v234
      %v401 = vunpack.c.l.b16 %v235
      %v402 = vunpack.c.l.b16 %v236
      %v403 = vunpack.c.l.b16 %v237
      %v404 = vunpack.c.l.b16 %v238
      %v405 = vunpack.c.l.b16 %v239
      %v406 = vunpack.c.l.b16 %v240
      %v407 = vunpack.c.l.b16 %v241
      %v408 = vunpack.c.l.b16 %v242
      %v409 = vunpack.c.l.b16 %v243
      %v410 = vunpack.c.l.b16 %v244
      %v411 = vunpack.c.l.b16 %v245
      %v412 = vunpack.c.l.b16 %v246
      %v413 = vunpack.c.l.b16 %v247
      %v414 = vunpack.c.l.b16 %v248
      %v415 = vunpack.c.l.b16 %v249
      %v416 = vunpack.c.l.b16 %v250
      %v417 = vunpack.c.l.b16 %v251
      %v418 = vunpack.c.l.b16 %v252
      %v419 = vunpack.c.l.b16 %v253
      %v420 = vunpack.c.l.b16 %v254
      %v421 = vunpack.c.l.b16 %v255
      %v422 = vunpack.c.l.b16 %v256
      %v423 = vunpack.c.l.b16 %v257
      %v424 = vunpack.c.l.b16 %v258
      %v425 = vunpack.c.l.b16 %v259
      %v426 = vunpack.c.l.b16 %v260
      %v427 = vunpack.c.l.b16 %v261
      %v428 = vunpack.c.l.b16 %v262
      %v429 = vunpack.c.l.b16 %v263
      %v430 = vunpack.c.l.b16 %v264
      %v431 = vunpack.c.l.b16 %v265
      %v432 = vunpack.c.l.b16 %v266
      %v433 = vunpack.c.l.b16 %v267
      %v434 = vunpack.c.l.b16 %v268
      %v435 = vunpack.c.l.b16 %v269
      %v436 = vunpack.c.l.b16 %v270
      %v437 = vunpack.c.l.b16 %v271
      %v438 = vunpack.c.l.b16 %v272
      %v439 = vunpack.c.l.b16 %v273
      %v440 = vunpack.c.l.b16 %v274
      %v441 = vunpack.c.l.b16 %v275
      %v442 = vunpack.c.l.b16 %v276
      %v443 = vunpack.c.l.b16 %v277
      %v444 = vunpack.c.l.b16 %v278
      %v445 = vunpack.c.l.b16 %v279
      %v446 = vunpack.c.l.b16 %v280
      %v447 = vunpack.c.l.b16 %v281
      %v448 = vunpack.c.l.b16 %v282
      %v449 = vunpack.c.l.b16 %v283
      %v450 = vunpack.c.l.b16 %v284
      %v451 = vunpack.c.l.b16 %v285
      %v452 = vunpack.c.l.b16 %v286
      %v453 = vunpack.c.l.b16 %v287
      %v454 = vunpack.c.l.b16 %v288
      %v455 = vunpack.c.l.b16 %v289
      %v456 = vunpack.c.l.b16 %v290
      %v457 = vunpack.c.l.b16 %v291
      %v458 = vunpack.c.l.b16 %v292
      %v459 = vunpack.c.l.b16 %v293
      %v460 = vunpack.c.l.b16 %v294
      %v461 = vunpack.c.l.b16 %v295
      %v462 = vpack.c.b16 %v399, %v398
      %v463 = vpack.c.b16 %v401, %v400
      %v464 = vpack.c.b16 %v403, %v402
      %v465 = vpack.c.b16 %v405, %v404
      %v466 = vpack.c.b16 %v407, %v406
      %v467 = vpack.c.b16 %v409, %v408
      %v468 = vpack.c.b16 %v411, %v410
      %v469 = vpack.c.b16 %v413, %v412
      %v470 = vpack.c.b16 %v415, %v414
      %v471 = vpack.c.b16 %v417, %v416
      %v472 = vpack.c.b16 %v419, %v418
      %v473 = vpack.c.b16 %v421, %v420
      %v474 = vpack.c.b16 %v423, %v422
      %v475 = vpack.c.b16 %v425, %v424
      %v476 = vpack.c.b16 %v427, %v426
      %v477 = vpack.c.b16 %v429, %v428
      %v478 = vpack.c.b16 %v431, %v430
      %v479 = vpack.c.b16 %v433, %v432
      %v480 = vpack.c.b16 %v435, %v434
      %v481 = vpack.c.b16 %v437, %v436
      %v482 = vpack.c.b16 %v439, %v438
      %v483 = vpack.c.b16 %v441, %v440
      %v484 = vpack.c.b16 %v443, %v442
      %v485 = vpack.c.b16 %v445, %v444
      %v486 = vpack.c.b16 %v447, %v446
      %v487 = vpack.c.b16 %v449, %v448
      %v488 = vpack.c.b16 %v451, %v450
      %v489 = vpack.c.b16 %v453, %v452
      %v490 = vpack.c.b16 %v455, %v454
      %v491 = vpack.c.b16 %v457, %v456
      %v492 = vpack.c.b16 %v459, %v458
      %v493 = vpack.c.b16 %v461, %v460
      %526 = vmatpush.bf16.msra.mxu0 %v469
      %527 = vmatpush.bf16.msra.mxu0 %v468
      %528 = vmatpush.bf16.msra.mxu0 %v467
      %529 = vmatpush.bf16.msra.mxu0 %v466
      %530 = vmatpush.bf16.msra.mxu0 %v465
      %531 = vmatpush.bf16.msra.mxu0 %v464
      %532 = vmatpush.bf16.msra.mxu0 %v463
      %533 = vmatpush.bf16.msra.mxu0 %v462
      %534 = vmatmul.bf16.gmra.mxu0 %v318
      %v535 = vpop.f32.mrf.mxu0
      %v536 = vadd.f32 %v298, %v535
      %v537 = vpop.f32.mrf.mxu0
      %v538 = vadd.f32 %v298, %v537
      %539 = vmatmul.bf16.gmra.mxu0 %v322
      %v540 = vpop.f32.mrf.mxu0
      %v541 = vadd.f32 %v298, %v540
      %v542 = vpop.f32.mrf.mxu0
      %543 = vdwg.mxu0
      %544 = vmatpush.bf16.msra.mxu0 %v477
      %545 = vmatpush.bf16.msra.mxu0 %v476
      %546 = vmatpush.bf16.msra.mxu0 %v475
      %547 = vmatpush.bf16.msra.mxu0 %v474
      %548 = vmatpush.bf16.msra.mxu0 %v473
      %549 = vmatpush.bf16.msra.mxu0 %v472
      %550 = vmatpush.bf16.msra.mxu0 %v471
      %551 = vmatpush.bf16.msra.mxu0 %v470
      %552 = vmatmul.bf16.gmra.mxu0 %v319
      %v553 = vpop.f32.mrf.mxu0
      %v554 = vadd.f32 %v536, %v553
      %v555 = vpop.f32.mrf.mxu0
      %v556 = vadd.f32 %v538, %v555
      %557 = vmatmul.bf16.gmra.mxu0 %v323
      %v558 = vpop.f32.mrf.mxu0
      %v559 = vadd.f32 %v541, %v558
      %v560 = vpop.f32.mrf.mxu0
      %561 = vdwg.mxu0
      %562 = vmatpush.bf16.msra.mxu0 %v485
      %563 = vmatpush.bf16.msra.mxu0 %v484
      %564 = vmatpush.bf16.msra.mxu0 %v483
      %565 = vmatpush.bf16.msra.mxu0 %v482
      %566 = vmatpush.bf16.msra.mxu0 %v481
      %567 = vmatpush.bf16.msra.mxu0 %v480
      %568 = vmatpush.bf16.msra.mxu0 %v479
      %569 = vmatpush.bf16.msra.mxu0 %v478
      %570 = vmatmul.bf16.gmra.mxu0 %v320
      %v571 = vpop.f32.mrf.mxu0
      %v572 = vadd.f32 %v554, %v571
      %v573 = vpop.f32.mrf.mxu0
      %v574 = vadd.f32 %v556, %v573
      %575 = vmatmul.bf16.gmra.mxu0 %v324
      %v576 = vpop.f32.mrf.mxu0
      %v577 = vadd.f32 %v559, %v576
      %v578 = vpop.f32.mrf.mxu0
      %579 = vdwg.mxu0
      %580 = vmatpush.bf16.msra.mxu0 %v493
      %581 = vmatpush.bf16.msra.mxu0 %v492
      %582 = vmatpush.bf16.msra.mxu0 %v491
      %583 = vmatpush.bf16.msra.mxu0 %v490
      %584 = vmatpush.bf16.msra.mxu0 %v489
      %585 = vmatpush.bf16.msra.mxu0 %v488
      %586 = vmatpush.bf16.msra.mxu0 %v487
      %587 = vmatpush.bf16.msra.mxu0 %v486
      %588 = vmatmul.bf16.gmra.mxu0 %v321
      %v589 = vpop.f32.mrf.mxu0
      %v590 = vadd.f32 %v572, %v589
      %v591 = vpop.f32.mrf.mxu0
      %v592 = vadd.f32 %v574, %v591
      %593 = vmatmul.bf16.gmra.mxu0 %v325
      %v594 = vpop.f32.mrf.mxu0
      %v595 = vadd.f32 %v577, %v594
      %v596 = vpop.f32.mrf.mxu0
      %597 = vdwg.mxu0
      %v598 = vld [vmem:[%s218] sm:$0xf]
      %v599 = vld [vmem:[%s218 + $0x4] sm:$0xf]
      %v600 = vld [vmem:[%s218 + $0x8] sm:$0xf]
      %v601 = vunpack.c.l.bf16 %v598
      %v602 = vunpack.c.l.bf16 %v599
      %v603 = vunpack.c.l.bf16 %v600
      %v604 = vadd.f32 %v590, %v601
      %v605 = vadd.f32 %v592, %v602
      %v606 = vadd.f32 %v595, %v603
      %v607 = vpack.c.bf16 %v604, %v604
      %v608 = vpack.c.bf16 %v605, %v605
      %v609 = vpack.c.bf16 %v606, %v606
      %610 = vst [vmem:[%s224] sm:$0xf] %v607
      %611 = vst [vmem:[%s224 + $0x4] sm:$0xf] %v608
      %612 = vst [vmem:[%s224 + $0x8] sm:$0xf] %v609
      %s613 = smul.u32 3, %s15
      %p614 = scmp.lt.s32.totalorder %s613, 5
      %s615 = scalar_select %p614, %s613, 5
      %s616 = smul.addr %s615, 4
      %s617 = scalar_lea.vmem %s4, %s616
      // Predicated region
      $region37: #{clip_vit_forward.16} parent=35 // pred_check
        %p618 = pneg %p127
      $region38: #{clip_vit_forward.16} parent=35 // pred_check_branch
        %620 = sbr.rel (%p618) target = $region40
      $region39: #{clip_vit_forward.16} parent=35 // pred_region
        %s621 = smul.u32 3, %s15
      $region40: #{clip_vit_forward.16} parent=35 // pred_fallthru
        _
    $region36: #{clip_vit_forward.16} parent=5 // pred_fallthru
      _
    %p622 = scmp.le.s32.totalorder 2, %s10
    // Predicated region
    $region41: #{clip_vit_forward.16} parent=5 // pred_check
      %p623 = pneg %p622
    $region42: #{clip_vit_forward.16} parent=5 // pred_check_branch
      %625 = sbr.rel (%p623) target = $region44
    $region43: #{clip_vit_forward.16} parent=5 // pred_region
      %s626 = ssub.s32 %s10, 2
      // Predicated region
      $region45: #{clip_vit_forward.16} parent=43 // pred_check
        %p627 = pneg %p133
      $region46: #{clip_vit_forward.16} parent=43 // pred_check_branch
        %629 = sbr.rel (%p627) target = $region48
      $region47: #{clip_vit_forward.16} parent=43 // pred_region
        %s630 = smul.u32 3, %s16
        %p631 = scmp.lt.s32.totalorder %s630, 5
        %s632 = scalar_select %p631, %s630, 5
        %s633 = smul.addr %s632, 4
        %s634 = scalar_lea.vmem %s4, %s633
      $region48: #{clip_vit_forward.16} parent=43 // pred_fallthru
        _
    $region44: #{clip_vit_forward.16} parent=5 // pred_fallthru
      _
  $region6: #{clip_vit_forward.16} parent=0 // loop_footer
    %s14 = sadd.s32 1, %s10
  $region7: #{clip_vit_forward.16} parent=0 // loop_footer_branch
    %9 = sbr.rel target = $region3
  $region8: #{clip_vit_forward.16} parent=0 // loop_exit
    _

// kernel: clip_vit_forward.15
$region0: #{clip_vit_forward.15}
  #allocation0 [shape = 'u32[]', space=smem, size = 0x4, offset = 0x4, fixed_abs, tag = 'smem constant byte address 0x4 - core index']
  #allocation1 [shape = 'u32[72,128]{1,0:T(1,128)}', space=vmem, size = 0x9000, scoped, tag = 'internal scratch']
  %s0 = inlined_call_operand.vmem [shape: bf16[48,128], index: 0, kind: input, shape index: {}]
  %s1 = inlined_call_operand.vmem [shape: bf16[128,128], index: 1, kind: input, shape index: {}]
  %s2 = inlined_call_operand.vmem [shape: f32[1,128], index: 2, kind: input, shape index: {}]
  %s3 = inlined_call_operand.vmem [shape: bf16[48,128], index: 3, kind: input, shape index: {}]
  %s4 = inlined_call_operand.vmem [shape: f32[1,128], index: 4, kind: input, shape index: {}]
  %s5 = inlined_call_operand.vmem [shape: f32[1,128], index: 5, kind: input, shape index: {}]
  %s6 = inlined_call_operand.vmem [shape: bf16[128,512], index: 6, kind: input, shape index: {}]
  %s7 = inlined_call_operand.vmem [shape: f32[1,512], index: 7, kind: input, shape index: {}]
  %s8 = inlined_call_operand.vmem [shape: bf16[48,128], index: 8, kind: output, shape index: {0}]
  %s9 = inlined_call_operand.vmem [shape: bf16[48,512], index: 9, kind: output, shape index: {1}]
  %10 = xla_tuple %s8, %s9
  %s11 = sld [smem:[#allocation0]]
  $region73: #{clip_vit_forward.15} parent=0
    _
  %s13 = ssub.s32 1, %s11
  %s14 = scalar_select 0, %s13, %s11
  loop: start=0, step=1, limit=4
  $region2: #{clip_vit_forward.15} parent=0 // loop_pre_header
    _
  $region3: #{clip_vit_forward.15} parent=0 // loop_header
    %s16 = sphi 0, %s20
    %p17 = scmp.ge.s32.totalorder %s16, 4
    %s26 = sphi 0, %s28
    %s29 = sphi 0, %s26
    %s30 = sphi 0, %s29
    %s46 = sphi 0, %s30
    %s50 = sphi 0, %s50
    %s52 = sphi 0, %s50
    %s53 = sphi 0, %s52
    %s67 = sphi 0, %s53
    %s71 = sphi 0, %s71
    %s73 = sphi 0, %s71
    %s74 = sphi 0, %s73
    %s88 = sphi 0, %s74
    %s94 = sphi 0, %s96
    %s97 = sphi 0, %s94
    %s98 = sphi 0, %s97
    %s114 = sphi 0, %s98
    %s118 = sphi 0, %s118
    %s120 = sphi 0, %s118
    %s121 = sphi 0, %s120
    %s135 = sphi 0, %s121
    %s139 = sphi 0, %s139
    %s141 = sphi 0, %s139
    %s142 = sphi 0, %s141
    %s156 = sphi 0, %s142
    %s160 = sphi 0, %s160
    %s162 = sphi 0, %s160
    %s163 = sphi 0, %s162
    %s177 = sphi 0, %s163
    %s181 = sphi 0, %s181
    %s183 = sphi 0, %s181
    %s184 = sphi 0, %s183
    %s198 = sphi 0, %s184
    %s204 = sphi 0, %s206
    %s207 = sphi 0, %s204
    %s208 = sphi 0, %s207
    %s224 = sphi 0, %s208
    %s230 = sphi 0, %s232
    %s233 = sphi 0, %s230
    %s234 = sphi 0, %s233
    %s250 = sphi 0, %s234
  $region4: #{clip_vit_forward.15} parent=0 // loop_header_branch
    %19 = sbr.rel (%p17) target = $region8
  $region5: #{clip_vit_forward.15} parent=0 // loop_body
    %s21 = ssub.s32 %s16, 1
    %s22 = ssub.s32 %s16, 2
    %s23 = sadd.s32 %s16, 1
    %s24 = ssub.s32 %s16, %s23
    %p25 = scmp.eq.s32.totalorder %s24, 0
    %s27 = sadd.s32 %s26, 1
    %s28 = scalar_select %p25, %s26, %s27
    %p31 = pneg %p25
    %p32 = scmp.eq.s32.totalorder %s16, 1
    %p33 = por %p31, %p32
    %p34 = scmp.ne.s32.totalorder %s26, %s29
    %p35 = scmp.eq.s32.totalorder %s16, 0
    %p36 = por %p34, %p35
    %p37 = scmp.ne.s32.totalorder %s26, %s29
    %p38 = scmp.eq.s32.totalorder %s21, 1
    %p39 = por %p37, %p38
    %p40 = scmp.ne.s32.totalorder %s29, %s30
    %p41 = scmp.eq.s32.totalorder %s21, 0
    %p42 = por %p40, %p41
    %p43 = scmp.ne.s32.totalorder %s29, %s30
    %p44 = scmp.eq.s32.totalorder %s22, 1
    %p45 = por %p43, %p44
    %p47 = scmp.ne.s32.totalorder %s30, %s46
    %p48 = scmp.eq.s32.totalorder %s22, 0
    %p49 = por %p47, %p48
    %s51 = sadd.s32 %s50, 1
    %p54 = scmp.eq.s32.totalorder %s16, 1
    %p55 = scmp.ne.s32.totalorder %s50, %s52
    %p56 = scmp.eq.s32.totalorder %s16, 0
    %p57 = por %p55, %p56
    %p58 = scmp.ne.s32.totalorder %s50, %s52
    %p59 = scmp.eq.s32.totalorder %s21, 1
    %p60 = por %p58, %p59
    %p61 = scmp.ne.s32.totalorder %s52, %s53
    %p62 = scmp.eq.s32.totalorder %s21, 0
    %p63 = por %p61, %p62
    %p64 = scmp.ne.s32.totalorder %s52, %s53
    %p65 = scmp.eq.s32.totalorder %s22, 1
    %p66 = por %p64, %p65
    %p68 = scmp.ne.s32.totalorder %s53, %s67
    %p69 = scmp.eq.s32.totalorder %s22, 0
    %p70 = por %p68, %p69
    %s72 = sadd.s32 %s71, 1
    %p75 = scmp.eq.s32.totalorder %s16, 1
    %p76 = scmp.ne.s32.totalorder %s71, %s73
    %p77 = scmp.eq.s32.totalorder %s16, 0
    %p78 = por %p76, %p77
    %p79 = scmp.ne.s32.totalorder %s71, %s73
    %p80 = scmp.eq.s32.totalorder %s21, 1
    %p81 = por %p79, %p80
    %p82 = scmp.ne.s32.totalorder %s73, %s74
    %p83 = scmp.eq.s32.totalorder %s21, 0
    %p84 = por %p82, %p83
    %p85 = scmp.ne.s32.totalorder %s73, %s74
    %p86 = scmp.eq.s32.totalorder %s22, 1
    %p87 = por %p85, %p86
    %p89 = scmp.ne.s32.totalorder %s74, %s88
    %p90 = scmp.eq.s32.totalorder %s22, 0
    %p91 = por %p89, %p90
    %s92 = ssub.s32 %s16, %s23
    %p93 = scmp.eq.s32.totalorder %s92, 0
    %s95 = sadd.s32 %s94, 1
    %s96 = scalar_select %p93, %s94, %s95
    %p99 = pneg %p93
    %p100 = scmp.eq.s32.totalorder %s16, 1
    %p101 = por %p99, %p100
    %p102 = scmp.ne.s32.totalorder %s94, %s97
    %p103 = scmp.eq.s32.totalorder %s16, 0
    %p104 = por %p102, %p103
    %p105 = scmp.ne.s32.totalorder %s94, %s97
    %p106 = scmp.eq.s32.totalorder %s21, 1
    %p107 = por %p105, %p106
    %p108 = scmp.ne.s32.totalorder %s97, %s98
    %p109 = scmp.eq.s32.totalorder %s21, 0
    %p110 = por %p108, %p109
    %p111 = scmp.ne.s32.totalorder %s97, %s98
    %p112 = scmp.eq.s32.totalorder %s22, 1
    %p113 = por %p111, %p112
    %p115 = scmp.ne.s32.totalorder %s98, %s114
    %p116 = scmp.eq.s32.totalorder %s22, 0
    %p117 = por %p115, %p116
    %s119 = sadd.s32 %s118, 1
    %p122 = scmp.eq.s32.totalorder %s16, 1
    %p123 = scmp.ne.s32.totalorder %s118, %s120
    %p124 = scmp.eq.s32.totalorder %s16, 0
    %p125 = por %p123, %p124
    %p126 = scmp.ne.s32.totalorder %s118, %s120
    %p127 = scmp.eq.s32.totalorder %s21, 1
    %p128 = por %p126, %p127
    %p129 = scmp.ne.s32.totalorder %s120, %s121
    %p130 = scmp.eq.s32.totalorder %s21, 0
    %p131 = por %p129, %p130
    %p132 = scmp.ne.s32.totalorder %s120, %s121
    %p133 = scmp.eq.s32.totalorder %s22, 1
    %p134 = por %p132, %p133
    %p136 = scmp.ne.s32.totalorder %s121, %s135
    %p137 = scmp.eq.s32.totalorder %s22, 0
    %p138 = por %p136, %p137
    %s140 = sadd.s32 %s139, 1
    %p143 = scmp.eq.s32.totalorder %s16, 1
    %p144 = scmp.ne.s32.totalorder %s139, %s141
    %p145 = scmp.eq.s32.totalorder %s16, 0
    %p146 = por %p144, %p145
    %p147 = scmp.ne.s32.totalorder %s139, %s141
    %p148 = scmp.eq.s32.totalorder %s21, 1
    %p149 = por %p147, %p148
    %p150 = scmp.ne.s32.totalorder %s141, %s142
    %p151 = scmp.eq.s32.totalorder %s21, 0
    %p152 = por %p150, %p151
    %p153 = scmp.ne.s32.totalorder %s141, %s142
    %p154 = scmp.eq.s32.totalorder %s22, 1
    %p155 = por %p153, %p154
    %p157 = scmp.ne.s32.totalorder %s142, %s156
    %p158 = scmp.eq.s32.totalorder %s22, 0
    %p159 = por %p157, %p158
    %s161 = sadd.s32 %s160, 1
    %p164 = scmp.eq.s32.totalorder %s16, 1
    %p165 = scmp.ne.s32.totalorder %s160, %s162
    %p166 = scmp.eq.s32.totalorder %s16, 0
    %p167 = por %p165, %p166
    %p168 = scmp.ne.s32.totalorder %s160, %s162
    %p169 = scmp.eq.s32.totalorder %s21, 1
    %p170 = por %p168, %p169
    %p171 = scmp.ne.s32.totalorder %s162, %s163
    %p172 = scmp.eq.s32.totalorder %s21, 0
    %p173 = por %p171, %p172
    %p174 = scmp.ne.s32.totalorder %s162, %s163
    %p175 = scmp.eq.s32.totalorder %s22, 1
    %p176 = por %p174, %p175
    %p178 = scmp.ne.s32.totalorder %s163, %s177
    %p179 = scmp.eq.s32.totalorder %s22, 0
    %p180 = por %p178, %p179
    %s182 = sadd.s32 %s181, 1
    %p185 = scmp.eq.s32.totalorder %s16, 1
    %p186 = scmp.ne.s32.totalorder %s181, %s183
    %p187 = scmp.eq.s32.totalorder %s16, 0
    %p188 = por %p186, %p187
    %p189 = scmp.ne.s32.totalorder %s181, %s183
    %p190 = scmp.eq.s32.totalorder %s21, 1
    %p191 = por %p189, %p190
    %p192 = scmp.ne.s32.totalorder %s183, %s184
    %p193 = scmp.eq.s32.totalorder %s21, 0
    %p194 = por %p192, %p193
    %p195 = scmp.ne.s32.totalorder %s183, %s184
    %p196 = scmp.eq.s32.totalorder %s22, 1
    %p197 = por %p195, %p196
    %p199 = scmp.ne.s32.totalorder %s184, %s198
    %p200 = scmp.eq.s32.totalorder %s22, 0
    %p201 = por %p199, %p200
    %s202 = ssub.s32 %s16, %s23
    %p203 = scmp.eq.s32.totalorder %s202, 0
    %s205 = sadd.s32 %s204, 1
    %s206 = scalar_select %p203, %s204, %s205
    %p209 = pneg %p203
    %p210 = scmp.eq.s32.totalorder %s16, 1
    %p211 = por %p209, %p210
    %p212 = scmp.ne.s32.totalorder %s204, %s207
    %p213 = scmp.eq.s32.totalorder %s16, 0
    %p214 = por %p212, %p213
    %p215 = scmp.ne.s32.totalorder %s204, %s207
    %p216 = scmp.eq.s32.totalorder %s21, 1
    %p217 = por %p215, %p216
    %p218 = scmp.ne.s32.totalorder %s207, %s208
    %p219 = scmp.eq.s32.totalorder %s21, 0
    %p220 = por %p218, %p219
    %p221 = scmp.ne.s32.totalorder %s207, %s208
    %p222 = scmp.eq.s32.totalorder %s22, 1
    %p223 = por %p221, %p222
    %p225 = scmp.ne.s32.totalorder %s208, %s224
    %p226 = scmp.eq.s32.totalorder %s22, 0
    %p227 = por %p225, %p226
    %s228 = ssub.s32 %s16, %s23
    %p229 = scmp.eq.s32.totalorder %s228, 0
    %s231 = sadd.s32 %s230, 1
    %s232 = scalar_select %p229, %s230, %s231
    %p235 = pneg %p229
    %p236 = scmp.eq.s32.totalorder %s16, 1
    %p237 = por %p235, %p236
    %p238 = scmp.ne.s32.totalorder %s230, %s233
    %p239 = scmp.eq.s32.totalorder %s16, 0
    %p240 = por %p238, %p239
    %p241 = scmp.ne.s32.totalorder %s230, %s233
    %p242 = scmp.eq.s32.totalorder %s21, 1
    %p243 = por %p241, %p242
    %p244 = scmp.ne.s32.totalorder %s233, %s234
    %p245 = scmp.eq.s32.totalorder %s21, 0
    %p246 = por %p244, %p245
    %p247 = scmp.ne.s32.totalorder %s233, %s234
    %p248 = scmp.eq.s32.totalorder %s22, 1
    %p249 = por %p247, %p248
    %p251 = scmp.ne.s32.totalorder %s234, %s250
    %p252 = scmp.eq.s32.totalorder %s22, 0
    %p253 = por %p251, %p252
    %p254 = scmp.le.s32.totalorder 1, %s16
    %p255 = scmp.lt.s32.totalorder %s16, 3
    %p256 = pnand %p254, %p255
    %p257 = pneg %p256
    // Predicated region
    $region9: #{clip_vit_forward.15} parent=5 // pred_check
      _
    $region10: #{clip_vit_forward.15} parent=5 // pred_check_branch
      %259 = sbr.rel (%p256) target = $region12
    $region11: #{clip_vit_forward.15} parent=5 // pred_region
      %s260 = ssub.s32 %s16, 1
      // Predicated region
      $region13: #{clip_vit_forward.15} parent=11 // pred_check
        %p261 = pneg %p63
      $region14: #{clip_vit_forward.15} parent=11 // pred_check_branch
        %263 = sbr.rel (%p261) target = $region16
      $region15: #{clip_vit_forward.15} parent=11 // pred_region
        _
      $region16: #{clip_vit_forward.15} parent=11 // pred_fallthru
        _
      // Predicated region
      $region17: #{clip_vit_forward.15} parent=11 // pred_check
        %p264 = pneg %p84
      $region18: #{clip_vit_forward.15} parent=11 // pred_check_branch
        %266 = sbr.rel (%p264) target = $region20
      $region19: #{clip_vit_forward.15} parent=11 // pred_region
        _
      $region20: #{clip_vit_forward.15} parent=11 // pred_fallthru
        _
      // Predicated region
      $region21: #{clip_vit_forward.15} parent=11 // pred_check
        %p267 = pneg %p131
      $region22: #{clip_vit_forward.15} parent=11 // pred_check_branch
        %269 = sbr.rel (%p267) target = $region24
      $region23: #{clip_vit_forward.15} parent=11 // pred_region
        _
      $region24: #{clip_vit_forward.15} parent=11 // pred_fallthru
        _
      // Predicated region
      $region25: #{clip_vit_forward.15} parent=11 // pred_check
        %p270 = pneg %p152
      $region26: #{clip_vit_forward.15} parent=11 // pred_check_branch
        %272 = sbr.rel (%p270) target = $region28
      $region27: #{clip_vit_forward.15} parent=11 // pred_region
        _
      $region28: #{clip_vit_forward.15} parent=11 // pred_fallthru
        _
      // Predicated region
      $region29: #{clip_vit_forward.15} parent=11 // pred_check
        %p273 = pneg %p173
      $region30: #{clip_vit_forward.15} parent=11 // pred_check_branch
        %275 = sbr.rel (%p273) target = $region32
      $region31: #{clip_vit_forward.15} parent=11 // pred_region
        _
      $region32: #{clip_vit_forward.15} parent=11 // pred_fallthru
        _
      // Predicated region
      $region33: #{clip_vit_forward.15} parent=11 // pred_check
        %p276 = pneg %p194
      $region34: #{clip_vit_forward.15} parent=11 // pred_check_branch
        %278 = sbr.rel (%p276) target = $region36
      $region35: #{clip_vit_forward.15} parent=11 // pred_region
        _
      $region36: #{clip_vit_forward.15} parent=11 // pred_fallthru
        _
    $region12: #{clip_vit_forward.15} parent=5 // pred_fallthru
      _
    %p279 = scmp.lt.s32.totalorder %s16, 2
    // Predicated region
    $region37: #{clip_vit_forward.15} parent=5 // pred_check
      %p280 = pneg %p279
    $region38: #{clip_vit_forward.15} parent=5 // pred_check_branch
      %282 = sbr.rel (%p280) target = $region40
    $region39: #{clip_vit_forward.15} parent=5 // pred_region
      // Predicated region
      $region41: #{clip_vit_forward.15} parent=39 // pred_check
        %p283 = pneg %p36
      $region42: #{clip_vit_forward.15} parent=39 // pred_check_branch
        %285 = sbr.rel (%p283) target = $region44
      $region43: #{clip_vit_forward.15} parent=39 // pred_region
        %s286 = smul.u32 3, %s16
        %p287 = scmp.lt.s32.totalorder %s286, 5
        %s288 = scalar_select %p287, %s286, 5
        %s289 = smul.addr %s288, 4
        %s290 = scalar_lea.vmem %s0, %s289
        %s291 = smul.u32 3, %s16
      $region44: #{clip_vit_forward.15} parent=39 // pred_fallthru
        _
      // Predicated region
      $region45: #{clip_vit_forward.15} parent=39 // pred_check
        %p292 = pneg %p104
      $region46: #{clip_vit_forward.15} parent=39 // pred_check_branch
        %294 = sbr.rel (%p292) target = $region48
      $region47: #{clip_vit_forward.15} parent=39 // pred_region
        %s295 = smul.u32 3, %s16
        %p296 = scmp.lt.s32.totalorder %s295, 5
        %s297 = scalar_select %p296, %s295, 5
        %s298 = smul.addr %s297, 4
        %s299 = scalar_lea.vmem %s3, %s298
        %s300 = smul.u32 3, %s16
      $region48: #{clip_vit_forward.15} parent=39 // pred_fallthru
        _
    $region40: #{clip_vit_forward.15} parent=5 // pred_fallthru
      _
    %p301 = scmp.le.s32.totalorder 1, %s16
    %p302 = scmp.lt.s32.totalorder %s16, 3
    %p303 = pnand %p301, %p302
    %p304 = pneg %p303
    // Predicated region
    $region49: #{clip_vit_forward.15} parent=5 // pred_check
      _
    $region50: #{clip_vit_forward.15} parent=5 // pred_check_branch
      %306 = sbr.rel (%p303) target = $region52
    $region51: #{clip_vit_forward.15} parent=5 // pred_region
      %s307 = ssub.s32 %s16, 1
      %s308 = smul.u32 3, %s21
      %p309 = scmp.lt.s32.totalorder %s308, 5
      %s310 = scalar_select %p309, %s308, 5
      %s311 = smul.addr %s310, 4
      %s312 = scalar_lea.vmem %s0, %s311
      %p313 = pneg %p42
      %p314 = pneg %p39
      %p315 = pneg %p63
      %p316 = pneg %p60
      %p317 = pneg %p84
      %p318 = pneg %p81
      %s319 = smul.u32 3, %s21
      %p320 = scmp.lt.s32.totalorder %s319, 5
      %s321 = scalar_select %p320, %s319, 5
      %s322 = smul.addr %s321, 4
      %s323 = scalar_lea.vmem %s3, %s322
      %p324 = pneg %p110
      %p325 = pneg %p107
      %p326 = pneg %p131
      %p327 = pneg %p128
      %p328 = pneg %p152
      %p329 = pneg %p149
      %p330 = pneg %p173
      %p331 = pneg %p170
      %p332 = pneg %p194
      %p333 = pneg %p191
      %p334 = pneg %p220
      %p335 = pneg %p217
      %s336 = smul.u32 3, %s21
      %p337 = scmp.lt.s32.totalorder %s336, 5
      %s338 = scalar_select %p337, %s336, 5
      %s339 = smul.addr %s338, 4
      %s340 = scalar_lea.vmem %s8, %s339
      %p341 = pneg %p246
      %p342 = pneg %p243
      %s343 = smul.u32 3, %s21
      %p344 = scmp.lt.s32.totalorder %s343, 5
      %s345 = scalar_select %p344, %s343, 5
      %s346 = smul.addr %s345, 4
      %s347 = smul.addr %s346, 4
      %s348 = scalar_lea.vmem %s9, %s347
      %s349 = smul.u32 3, %s21
      %p350 = scmp.lt.s32.totalorder %s349, 5
      %s351 = scalar_select %p350, %s349, 5
      %s352 = smul.addr %s351, 4
      %s353 = scalar_lea.vmem %s0, %s352
      %s354 = smul.u32 3, %s21
      %s355 = smul.u32 3, %s21
      %p356 = scmp.lt.s32.totalorder %s355, 5
      %s357 = scalar_select %p356, %s355, 5
      %s358 = smul.addr %s357, 4
      %s359 = scalar_lea.vmem %s3, %s358
      %s360 = smul.u32 3, %s21
      %s361 = smul.u32 3, %s21
      %p362 = scmp.lt.s32.totalorder %s361, 5
      %s363 = scalar_select %p362, %s361, 5
      %s364 = smul.addr %s363, 4
      %s365 = scalar_lea.vmem %s8, %s364
      %s366 = smul.u32 3, %s21
      %s367 = smul.u32 3, %s21
      %p368 = scmp.lt.s32.totalorder %s367, 5
      %s369 = scalar_select %p368, %s367, 5
      %s370 = smul.addr %s369, 4
      %s371 = smul.addr %s370, 4
      %s372 = scalar_lea.vmem %s9, %s371
      %s373 = smul.u32 3, %s21
      %v374 = vld [vmem:[%s353] sm:$0xf]
      %v375 = vld [vmem:[%s353 + $0x4] sm:$0xf]
      %v376 = vld [vmem:[%s353 + $0x8] sm:$0xf]
      %v377 = vld [vmem:[%s1] sm:$0xf]
      %v378 = vld [vmem:[%s1 + $0x4] sm:$0xf]
      %v379 = vld [vmem:[%s1 + $0x8] sm:$0xf]
      %v380 = vld [vmem:[%s1 + $0xc] sm:$0xf]
      %v381 = vld [vmem:[%s1 + $0x10] sm:$0xf]
      %v382 = vld [vmem:[%s1 + $0x14] sm:$0xf]
      %v383 = vld [vmem:[%s1 + $0x18] sm:$0xf]
      %v384 = vld [vmem:[%s1 + $0x1c] sm:$0xf]
      %v385 = vld [vmem:[%s1 + $0x20] sm:$0xf]
      %v386 = vld [vmem:[%s1 + $0x24] sm:$0xf]
      %v387 = vld [vmem:[%s1 + $0x28] sm:$0xf]
      %v388 = vld [vmem:[%s1 + $0x2c] sm:$0xf]
      %v389 = vld [vmem:[%s1 + $0x30] sm:$0xf]
      %v390 = vld [vmem:[%s1 + $0x34] sm:$0xf]
      %v391 = vld [vmem:[%s1 + $0x38] sm:$0xf]
      %v392 = vld [vmem:[%s1 + $0x3c] sm:$0xf]
      %v393 = vld [vmem:[%s2] sm:$0x1]
      %v395 = vperm.slane %v393, 0
      %v400 = vunpack.c.l.b16 %v374
      %v401 = vunpack.c.l.b16 %v375
      %v402 = vunpack.c.l.b16 %v376
      %v403 = vpack.c.b16 %v401, %v400
      %v404 = vpack.c.b16 %v402, %v402
      %v423 = vunpack.c.l.b16 %v377
      %v424 = vunpack.c.l.b16 %v378
      %v425 = vunpack.c.l.b16 %v379
      %v426 = vunpack.c.l.b16 %v380
      %v427 = vunpack.c.l.b16 %v381
      %v428 = vunpack.c.l.b16 %v382
      %v429 = vunpack.c.l.b16 %v383
      %v430 = vunpack.c.l.b16 %v384
      %v431 = vunpack.c.l.b16 %v385
      %v432 = vunpack.c.l.b16 %v386
      %v433 = vunpack.c.l.b16 %v387
      %v434 = vunpack.c.l.b16 %v388
      %v435 = vunpack.c.l.b16 %v389
      %v436 = vunpack.c.l.b16 %v390
      %v437 = vunpack.c.l.b16 %v391
      %v438 = vunpack.c.l.b16 %v392
      %v439 = vpack.c.b16 %v424, %v423
      %v440 = vpack.c.b16 %v426, %v425
      %v441 = vpack.c.b16 %v428, %v427
      %v442 = vpack.c.b16 %v430, %v429
      %v443 = vpack.c.b16 %v432, %v431
      %v444 = vpack.c.b16 %v434, %v433
      %v445 = vpack.c.b16 %v436, %v435
      %v446 = vpack.c.b16 %v438, %v437
      %455 = vmatpush.bf16.msra.mxu0 %v446
      %456 = vmatpush.bf16.msra.mxu0 %v445
      %457 = vmatpush.bf16.msra.mxu0 %v444
      %458 = vmatpush.bf16.msra.mxu0 %v443
      %459 = vmatpush.bf16.msra.mxu0 %v442
      %460 = vmatpush.bf16.msra.mxu0 %v441
      %461 = vmatpush.bf16.msra.mxu0 %v440
      %462 = vmatpush.bf16.msra.mxu0 %v439
      %463 = vmatmul.bf16.gmra.mxu0 %v403
      %v464 = vpop.f32.mrf.mxu0
      %v465 = vadd.f32 %v395, %v464
      %v466 = vpop.f32.mrf.mxu0
      %v467 = vadd.f32 %v395, %v466
      %468 = vmatmul.bf16.gmra.mxu0 %v404
      %v469 = vpop.f32.mrf.mxu0
      %v470 = vadd.f32 %v395, %v469
      %v471 = vpop.f32.mrf.mxu0
      %472 = vdwg.mxu0
      %v473 = vld [vmem:[%s359] sm:$0xf]
      %v474 = vld [vmem:[%s359 + $0x4] sm:$0xf]
      %v475 = vld [vmem:[%s359 + $0x8] sm:$0xf]
      %v476 = vunpack.c.l.bf16 %v473
      %v477 = vunpack.c.l.bf16 %v474
      %v478 = vunpack.c.l.bf16 %v475
      %v479 = vadd.f32 %v465, %v476
      %v480 = vadd.f32 %v467, %v477
      %v481 = vadd.f32 %v470, %v478
      %v482 = vpack.c.bf16 %v479, %v479
      %v483 = vpack.c.bf16 %v480, %v480
      %v484 = vpack.c.bf16 %v481, %v481
      %485 = vst [vmem:[%s365] sm:$0xf] %v482
      %486 = vst [vmem:[%s365 + $0x4] sm:$0xf] %v483
      %487 = vst [vmem:[%s365 + $0x8] sm:$0xf] %v484
      %488 = vadd.xlane.f32.xlu0 %v479
      %v489 = vpop.xlane.xlu0 %488
      %490 = vadd.xlane.f32.xlu0 %v480
      %v491 = vpop.xlane.xlu0 %490
      %492 = vadd.xlane.f32.xlu0 %v481
      %v493 = vpop.xlane.xlu0 %492
      %v494 = vrcp.pop 128.0
      %v495 = vmul.f32 128.0, %v494
      %v496 = vsub.f32 1.0, %v495
      %v497 = vmul.f32 %v494, %v496
      %v498 = vadd.f32 %v494, %v497
      %vm499 = vweird.f32 %v494
      %v500 = vsel %vm499, %v494, %v498
      %v501 = vmul.f32 %v489, %v500
      %v502 = vmul.f32 %v491, %v500
      %v503 = vmul.f32 %v493, %v500
      %v504 = vsub.f32 %v479, %v501
      %v505 = vsub.f32 %v480, %v502
      %v506 = vsub.f32 %v481, %v503
      %v507 = vmul.f32 %v504, %v504
      %v508 = vmul.f32 %v505, %v505
      %v509 = vmul.f32 %v506, %v506
      %510 = vadd.xlane.f32.xlu0 %v507
      %v511 = vpop.xlane.xlu0 %510
      %512 = vadd.xlane.f32.xlu0 %v508
      %v513 = vpop.xlane.xlu0 %512
      %514 = vadd.xlane.f32.xlu0 %v509
      %v515 = vpop.xlane.xlu0 %514
      %v516 = vmul.f32 %v511, %v500
      %v517 = vmul.f32 %v513, %v500
      %v518 = vmul.f32 %v515, %v500
      %v519 = vadd.f32 %v516, 1e-05
      %v520 = vadd.f32 %v517, 1e-05
      %v521 = vadd.f32 %v518, 1e-05
      %v522 = vrsqrt.pop %v519
      %v523 = vmul.f32 %v522, %v519
      %v524 = vmul.f32 %v523, %v522
      %v525 = vmul.f32 0.5, %v524
      %v526 = vsub.f32 1.5, %v525
      %v527 = vmul.f32 %v522, %v526
      %vm528 = vweird.f32 %v519
      %vm529 = vweird.f32 %v522
      %vm530 = vmor %vm528, %vm529
      %v531 = vsel %vm530, %v522, %v527
      %v532 = vrsqrt.pop %v520
      %v533 = vmul.f32 %v532, %v520
      %v534 = vmul.f32 %v533, %v532
      %v535 = vmul.f32 0.5, %v534
      %v536 = vsub.f32 1.5, %v535
      %v537 = vmul.f32 %v532, %v536
      %vm538 = vweird.f32 %v520
      %vm539 = vweird.f32 %v532
      %vm540 = vmor %vm538, %vm539
      %v541 = vsel %vm540, %v532, %v537
      %v542 = vrsqrt.pop %v521
      %v543 = vmul.f32 %v542, %v521
      %v544 = vmul.f32 %v543, %v542
      %v545 = vmul.f32 0.5, %v544
      %v546 = vsub.f32 1.5, %v545
      %v547 = vmul.f32 %v542, %v546
      %vm548 = vweird.f32 %v521
      %vm549 = vweird.f32 %v542
      %vm550 = vmor %vm548, %vm549
      %v551 = vsel %vm550, %v542, %v547
      %v552 = vmul.f32 %v504, %v531
      %v553 = vmul.f32 %v505, %v541
      %v554 = vmul.f32 %v506, %v551
      %v555 = vld [vmem:[%s4] sm:$0x1]
      %v557 = vperm.slane %v555, 0
      %v559 = vmul.f32 %v552, %v557
      %v560 = vmul.f32 %v553, %v557
      %v561 = vmul.f32 %v554, %v557
      %v562 = vld [vmem:[%s5] sm:$0x1]
      %v564 = vperm.slane %v562, 0
      %v566 = vadd.f32 %v559, %v564
      %v567 = vadd.f32 %v560, %v564
      %v568 = vadd.f32 %v561, %v564
      %v569 = vpack.c.bf16 %v567, %v566
      %v570 = vpack.c.bf16 %v568, %v568
      %v571 = vld [vmem:[%s6] sm:$0xff]
      %v572 = vld [vmem:[%s6 + $0x8] sm:$0xff]
      %v573 = vld [vmem:[%s6 + $0x10] sm:$0xff]
      %v574 = vld [vmem:[%s6 + $0x18] sm:$0xff]
      %v575 = vld [vmem:[%s6 + $0x20] sm:$0xff]
      %v576 = vld [vmem:[%s6 + $0x28] sm:$0xff]
      %v577 = vld [vmem:[%s6 + $0x30] sm:$0xff]
      %v578 = vld [vmem:[%s6 + $0x38] sm:$0xff]
      %v579 = vld [vmem:[%s6 + $0x40] sm:$0xff]
      %v580 = vld [vmem:[%s6 + $0x48] sm:$0xff]
      %v581 = vld [vmem:[%s6 + $0x50] sm:$0xff]
      %v582 = vld [vmem:[%s6 + $0x58] sm:$0xff]
      %v583 = vld [vmem:[%s6 + $0x60] sm:$0xff]
      %v584 = vld [vmem:[%s6 + $0x68] sm:$0xff]
      %v585 = vld [vmem:[%s6 + $0x70] sm:$0xff]
      %v586 = vld [vmem:[%s6 + $0x78] sm:$0xff]
      %v587 = vld [vmem:[%s6 + $0x80] sm:$0xff]
      %v588 = vld [vmem:[%s6 + $0x88] sm:$0xff]
      %v589 = vld [vmem:[%s6 + $0x90] sm:$0xff]
      %v590 = vld [vmem:[%s6 + $0x98] sm:$0xff]
      %v591 = vld [vmem:[%s6 + $0xa0] sm:$0xff]
      %v592 = vld [vmem:[%s6 + $0xa8] sm:$0xff]
      %v593 = vld [vmem:[%s6 + $0xb0] sm:$0xff]
      %v594 = vld [vmem:[%s6 + $0xb8] sm:$0xff]
      %v595 = vld [vmem:[%s6 + $0xc0] sm:$0xff]
      %v596 = vld [vmem:[%s6 + $0xc8] sm:$0xff]
      %v597 = vld [vmem:[%s6 + $0xd0] sm:$0xff]
      %v598 = vld [vmem:[%s6 + $0xd8] sm:$0xff]
      %v599 = vld [vmem:[%s6 + $0xe0] sm:$0xff]
      %v600 = vld [vmem:[%s6 + $0xe8] sm:$0xff]
      %v601 = vld [vmem:[%s6 + $0xf0] sm:$0xff]
      %v602 = vld [vmem:[%s6 + $0xf8] sm:$0xff]
      %v603 = vld [vmem:[%s7] sm:$0xf]
      %v605 = vperm.slane %v603, 0
      %v606 = vperm.slane %v603, 1
      %v607 = vperm.slane %v603, 2
      %v608 = vperm.slane %v603, 3
      %v645 = vunpack.c.l.b16 %v571
      %v646 = vunpack.c.h.b16 %v571
      %v647 = vunpack.c.l.b16 %v572
      %v648 = vunpack.c.h.b16 %v572
      %v649 = vunpack.c.l.b16 %v573
      %v650 = vunpack.c.h.b16 %v573
      %v651 = vunpack.c.l.b16 %v574
      %v652 = vunpack.c.h.b16 %v574
      %v653 = vunpack.c.l.b16 %v575
      %v654 = vunpack.c.h.b16 %v575
      %v655 = vunpack.c.l.b16 %v576
      %v656 = vunpack.c.h.b16 %v576
      %v657 = vunpack.c.l.b16 %v577
      %v658 = vunpack.c.h.b16 %v577
      %v659 = vunpack.c.l.b16 %v578
      %v660 = vunpack.c.h.b16 %v578
      %v661 = vunpack.c.l.b16 %v579
      %v662 = vunpack.c.h.b16 %v579
      %v663 = vunpack.c.l.b16 %v580
      %v664 = vunpack.c.h.b16 %v580
      %v665 = vunpack.c.l.b16 %v581
      %v666 = vunpack.c.h.b16 %v581
      %v667 = vunpack.c.l.b16 %v582
      %v668 = vunpack.c.h.b16 %v582
      %v669 = vunpack.c.l.b16 %v583
      %v670 = vunpack.c.h.b16 %v583
      %v671 = vunpack.c.l.b16 %v584
      %v672 = vunpack.c.h.b16 %v584
      %v673 = vunpack.c.l.b16 %v585
      %v674 = vunpack.c.h.b16 %v585
      %v675 = vunpack.c.l.b16 %v586
      %v676 = vunpack.c.h.b16 %v586
      %v677 = vunpack.c.l.b16 %v587
      %v678 = vunpack.c.h.b16 %v587
      %v679 = vunpack.c.l.b16 %v588
      %v680 = vunpack.c.h.b16 %v588
      %v681 = vunpack.c.l.b16 %v589
      %v682 = vunpack.c.h.b16 %v589
      %v683 = vunpack.c.l.b16 %v590
      %v684 = vunpack.c.h.b16 %v590
      %v685 = vunpack.c.l.b16 %v591
      %v686 = vunpack.c.h.b16 %v591
      %v687 = vunpack.c.l.b16 %v592
      %v688 = vunpack.c.h.b16 %v592
      %v689 = vunpack.c.l.b16 %v593
      %v690 = vunpack.c.h.b16 %v593
      %v691 = vunpack.c.l.b16 %v594
      %v692 = vunpack.c.h.b16 %v594
      %v693 = vunpack.c.l.b16 %v595
      %v694 = vunpack.c.h.b16 %v595
      %v695 = vunpack.c.l.b16 %v596
      %v696 = vunpack.c.h.b16 %v596
      %v697 = vunpack.c.l.b16 %v597
      %v698 = vunpack.c.h.b16 %v597
      %v699 = vunpack.c.l.b16 %v598
      %v700 = vunpack.c.h.b16 %v598
      %v701 = vunpack.c.l.b16 %v599
      %v702 = vunpack.c.h.b16 %v599
      %v703 = vunpack.c.l.b16 %v600
      %v704 = vunpack.c.h.b16 %v600
      %v705 = vunpack.c.l.b16 %v601
      %v706 = vunpack.c.h.b16 %v601
      %v707 = vunpack.c.l.b16 %v602
      %v708 = vunpack.c.h.b16 %v602
      %v709 = vpack.c.b16 %v649, %v645
      %v710 = vpack.c.b16 %v650, %v646
      %v711 = vpack.c.b16 %v651, %v647
      %v712 = vpack.c.b16 %v652, %v648
      %v713 = vpack.c.b16 %v657, %v653
      %v714 = vpack.c.b16 %v658, %v654
      %v715 = vpack.c.b16 %v659, %v655
      %v716 = vpack.c.b16 %v660, %v656
      %v717 = vpack.c.b16 %v665, %v661
      %v718 = vpack.c.b16 %v666, %v662
      %v719 = vpack.c.b16 %v667, %v663
      %v720 = vpack.c.b16 %v668, %v664
      %v721 = vpack.c.b16 %v673, %v669
      %v722 = vpack.c.b16 %v674, %v670
      %v723 = vpack.c.b16 %v675, %v671
      %v724 = vpack.c.b16 %v676, %v672
      %v725 = vpack.c.b16 %v681, %v677
      %v726 = vpack.c.b16 %v682, %v678
      %v727 = vpack.c.b16 %v683, %v679
      %v728 = vpack.c.b16 %v684, %v680
      %v729 = vpack.c.b16 %v689, %v685
      %v730 = vpack.c.b16 %v690, %v686
      %v731 = vpack.c.b16 %v691, %v687
      %v732 = vpack.c.b16 %v692, %v688
      %v733 = vpack.c.b16 %v697, %v693
      %v734 = vpack.c.b16 %v698, %v694
      %v735 = vpack.c.b16 %v699, %v695
      %v736 = vpack.c.b16 %v700, %v696
      %v737 = vpack.c.b16 %v705, %v701
      %v738 = vpack.c.b16 %v706, %v702
      %v739 = vpack.c.b16 %v707, %v703
      %v740 = vpack.c.b16 %v708, %v704
      %773 = vmatpush.bf16.msra.mxu0 %v737
      %774 = vmatpush.bf16.msra.mxu0 %v733
      %775 = vmatpush.bf16.msra.mxu0 %v729
      %776 = vmatpush.bf16.msra.mxu0 %v725
      %777 = vmatpush.bf16.msra.mxu0 %v721
      %778 = vmatpush.bf16.msra.mxu0 %v717
      %779 = vmatpush.bf16.msra.mxu0 %v713
      %780 = vmatpush.bf16.msra.mxu0 %v709
      %781 = vmatmul.bf16.gmra.mxu0 %v569
      %v782 = vpop.f32.mrf.mxu0
      %v783 = vadd.f32 %v605, %v782
      %v784 = vpop.f32.mrf.mxu0
      %v785 = vadd.f32 %v605, %v784
      %786 = vmatmul.bf16.gmra.mxu0 %v570
      %v787 = vpop.f32.mrf.mxu0
      %v788 = vadd.f32 %v605, %v787
      %v789 = vpop.f32.mrf.mxu0
      %790 = vdwg.mxu0
      %791 = vmatpush.bf16.msra.mxu0 %v738
      %792 = vmatpush.bf16.msra.mxu0 %v734
      %793 = vmatpush.bf16.msra.mxu0 %v730
      %794 = vmatpush.bf16.msra.mxu0 %v726
      %795 = vmatpush.bf16.msra.mxu0 %v722
      %796 = vmatpush.bf16.msra.mxu0 %v718
      %797 = vmatpush.bf16.msra.mxu0 %v714
      %798 = vmatpush.bf16.msra.mxu0 %v710
      %799 = vmatmul.bf16.gmra.mxu0 %v569
      %v800 = vpop.f32.mrf.mxu0
      %v801 = vadd.f32 %v606, %v800
      %v802 = vpop.f32.mrf.mxu0
      %v803 = vadd.f32 %v606, %v802
      %804 = vmatmul.bf16.gmra.mxu0 %v570
      %v805 = vpop.f32.mrf.mxu0
      %v806 = vadd.f32 %v606, %v805
      %v807 = vpop.f32.mrf.mxu0
      %808 = vdwg.mxu0
      %809 = vmatpush.bf16.msra.mxu0 %v739
      %810 = vmatpush.bf16.msra.mxu0 %v735
      %811 = vmatpush.bf16.msra.mxu0 %v731
      %812 = vmatpush.bf16.msra.mxu0 %v727
      %813 = vmatpush.bf16.msra.mxu0 %v723
      %814 = vmatpush.bf16.msra.mxu0 %v719
      %815 = vmatpush.bf16.msra.mxu0 %v715
      %816 = vmatpush.bf16.msra.mxu0 %v711
      %817 = vmatmul.bf16.gmra.mxu0 %v569
      %v818 = vpop.f32.mrf.mxu0
      %v819 = vadd.f32 %v607, %v818
      %v820 = vpop.f32.mrf.mxu0
      %v821 = vadd.f32 %v607, %v820
      %822 = vmatmul.bf16.gmra.mxu0 %v570
      %v823 = vpop.f32.mrf.mxu0
      %v824 = vadd.f32 %v607, %v823
      %v825 = vpop.f32.mrf.mxu0
      %826 = vdwg.mxu0
      %827 = vmatpush.bf16.msra.mxu0 %v740
      %828 = vmatpush.bf16.msra.mxu0 %v736
      %829 = vmatpush.bf16.msra.mxu0 %v732
      %830 = vmatpush.bf16.msra.mxu0 %v728
      %831 = vmatpush.bf16.msra.mxu0 %v724
      %832 = vmatpush.bf16.msra.mxu0 %v720
      %833 = vmatpush.bf16.msra.mxu0 %v716
      %834 = vmatpush.bf16.msra.mxu0 %v712
      %835 = vmatmul.bf16.gmra.mxu0 %v569
      %v836 = vpop.f32.mrf.mxu0
      %v837 = vadd.f32 %v608, %v836
      %v838 = vpop.f32.mrf.mxu0
      %v839 = vadd.f32 %v608, %v838
      %840 = vmatmul.bf16.gmra.mxu0 %v570
      %v841 = vpop.f32.mrf.mxu0
      %v842 = vadd.f32 %v608, %v841
      %v843 = vpop.f32.mrf.mxu0
      %844 = vdwg.mxu0
      %v845 = vmul.f32 %v783, 1.702
      %v846 = vmul.f32 %v801, 1.702
      %v847 = vmul.f32 %v819, 1.702
      %v848 = vmul.f32 %v837, 1.702
      %v849 = vmul.f32 %v785, 1.702
      %v850 = vmul.f32 %v803, 1.702
      %v851 = vmul.f32 %v821, 1.702
      %v852 = vmul.f32 %v839, 1.702
      %v853 = vmul.f32 %v788, 1.702
      %v854 = vmul.f32 %v806, 1.702
      %v855 = vmul.f32 %v824, 1.702
      %v856 = vmul.f32 %v842, 1.702
      %v857 = vxor.u32 %v845, 2147483648
      %v858 = vxor.u32 %v846, 2147483648
      %v859 = vxor.u32 %v847, 2147483648
      %v860 = vxor.u32 %v848, 2147483648
      %v861 = vxor.u32 %v849, 2147483648
      %v862 = vxor.u32 %v850, 2147483648
      %v863 = vxor.u32 %v851, 2147483648
      %v864 = vxor.u32 %v852, 2147483648
      %v865 = vxor.u32 %v853, 2147483648
      %v866 = vxor.u32 %v854, 2147483648
      %v867 = vxor.u32 %v855, 2147483648
      %v868 = vxor.u32 %v856, 2147483648
      %v869 = vmul.f32 %v857, 1.442695
      %v870 = vpow.pop %v869
      %v871 = vmul.f32 %v858, 1.442695
      %v872 = vpow.pop %v871
      %v873 = vmul.f32 %v859, 1.442695
      %v874 = vpow.pop %v873
      %v875 = vmul.f32 %v860, 1.442695
      %v876 = vpow.pop %v875
      %v877 = vmul.f32 %v861, 1.442695
      %v878 = vpow.pop %v877
      %v879 = vmul.f32 %v862, 1.442695
      %v880 = vpow.pop %v879
      %v881 = vmul.f32 %v863, 1.442695
      %v882 = vpow.pop %v881
      %v883 = vmul.f32 %v864, 1.442695
      %v884 = vpow.pop %v883
      %v885 = vmul.f32 %v865, 1.442695
      %v886 = vpow.pop %v885
      %v887 = vmul.f32 %v866, 1.442695
      %v888 = vpow.pop %v887
      %v889 = vmul.f32 %v867, 1.442695
      %v890 = vpow.pop %v889
      %v891 = vmul.f32 %v868, 1.442695
      %v892 = vpow.pop %v891
      %v893 = vadd.f32 %v870, 1.0
      %v894 = vadd.f32 %v872, 1.0
      %v895 = vadd.f32 %v874, 1.0
      %v896 = vadd.f32 %v876, 1.0
      %v897 = vadd.f32 %v878, 1.0
      %v898 = vadd.f32 %v880, 1.0
      %v899 = vadd.f32 %v882, 1.0
      %v900 = vadd.f32 %v884, 1.0
      %v901 = vadd.f32 %v886, 1.0
      %v902 = vadd.f32 %v888, 1.0
      %v903 = vadd.f32 %v890, 1.0
      %v904 = vadd.f32 %v892, 1.0
      %v905 = vrcp.pop %v893
      %v906 = vmul.f32 %v893, %v905
      %v907 = vsub.f32 1.0, %v906
      %v908 = vmul.f32 %v905, %v907
      %v909 = vadd.f32 %v905, %v908
      %vm910 = vweird.f32 %v893
      %vm911 = vweird.f32 %v905
      %vm912 = vmor %vm910, %vm911
      %v913 = vsel %vm912, %v905, %v909
      %v914 = vand.u32 2147483647, %v893
      %vm915 = vcmp.eq.f32.partialorder %v914, 8.507059e+37
      %v916 = vand.u32 %v893, 2147483648
      %v917 = vor.u32 1.1754944e-38, %v916
      %v918 = vsel %vm915, %v917, %v913
      %v919 = vmul.f32 1.0, %v918
      %v920 = vrcp.pop %v894
      %v921 = vmul.f32 %v894, %v920
      %v922 = vsub.f32 1.0, %v921
      %v923 = vmul.f32 %v920, %v922
      %v924 = vadd.f32 %v920, %v923
      %vm925 = vweird.f32 %v894
      %vm926 = vweird.f32 %v920
      %vm927 = vmor %vm925, %vm926
      %v928 = vsel %vm927, %v920, %v924
      %v929 = vand.u32 2147483647, %v894
      %vm930 = vcmp.eq.f32.partialorder %v929, 8.507059e+37
      %v931 = vand.u32 %v894, 2147483648
      %v932 = vor.u32 1.1754944e-38, %v931
      %v933 = vsel %vm930, %v932, %v928
      %v934 = vmul.f32 1.0, %v933
      %v935 = vrcp.pop %v895
      %v936 = vmul.f32 %v895, %v935
      %v937 = vsub.f32 1.0, %v936
      %v938 = vmul.f32 %v935, %v937
      %v939 = vadd.f32 %v935, %v938
      %vm940 = vweird.f32 %v895
      %vm941 = vweird.f32 %v935
      %vm942 = vmor %vm940, %vm941
      %v943 = vsel %vm942, %v935, %v939
      %v944 = vand.u32 2147483647, %v895
      %vm945 = vcmp.eq.f32.partialorder %v944, 8.507059e+37
      %v946 = vand.u32 %v895, 2147483648
      %v947 = vor.u32 1.1754944e-38, %v946
      %v948 = vsel %vm945, %v947, %v943
      %v949 = vmul.f32 1.0, %v948
      %v950 = vrcp.pop %v896
      %v951 = vmul.f32 %v896, %v950
      %v952 = vsub.f32 1.0, %v951
      %v953 = vmul.f32 %v950, %v952
      %v954 = vadd.f32 %v950, %v953
      %vm955 = vweird.f32 %v896
      %vm956 = vweird.f32 %v950
      %vm957 = vmor %vm955, %vm956
      %v958 = vsel %vm957, %v950, %v954
      %v959 = vand.u32 2147483647, %v896
      %vm960 = vcmp.eq.f32.partialorder %v959, 8.507059e+37
      %v961 = vand.u32 %v896, 2147483648
      %v962 = vor.u32 1.1754944e-38, %v961
      %v963 = vsel %vm960, %v962, %v958
      %v964 = vmul.f32 1.0, %v963
      %v965 = vrcp.pop %v897
      %v966 = vmul.f32 %v897, %v965
      %v967 = vsub.f32 1.0, %v966
      %v968 = vmul.f32 %v965, %v967
      %v969 = vadd.f32 %v965, %v968
      %vm970 = vweird.f32 %v897
      %vm971 = vweird.f32 %v965
      %vm972 = vmor %vm970, %vm971
      %v973 = vsel %vm972, %v965, %v969
      %v974 = vand.u32 2147483647, %v897
      %vm975 = vcmp.eq.f32.partialorder %v974, 8.507059e+37
      %v976 = vand.u32 %v897, 2147483648
      %v977 = vor.u32 1.1754944e-38, %v976
      %v978 = vsel %vm975, %v977, %v973
      %v979 = vmul.f32 1.0, %v978
      %v980 = vrcp.pop %v898
      %v981 = vmul.f32 %v898, %v980
      %v982 = vsub.f32 1.0, %v981
      %v983 = vmul.f32 %v980, %v982
      %v984 = vadd.f32 %v980, %v983
      %vm985 = vweird.f32 %v898
      %vm986 = vweird.f32 %v980
      %vm987 = vmor %vm985, %vm986
      %v988 = vsel %vm987, %v980, %v984
      %v989 = vand.u32 2147483647, %v898
      %vm990 = vcmp.eq.f32.partialorder %v989, 8.507059e+37
      %v991 = vand.u32 %v898, 2147483648
      %v992 = vor.u32 1.1754944e-38, %v991
      %v993 = vsel %vm990, %v992, %v988
      %v994 = vmul.f32 1.0, %v993
      %v995 = vrcp.pop %v899
      %v996 = vmul.f32 %v899, %v995
      %v997 = vsub.f32 1.0, %v996
      %v998 = vmul.f32 %v995, %v997
      %v999 = vadd.f32 %v995, %v998
      %vm1000 = vweird.f32 %v899
      %vm1001 = vweird.f32 %v995
      %vm1002 = vmor %vm1000, %vm1001
      %v1003 = vsel %vm1002, %v995, %v999
      %v1004 = vand.u32 2147483647, %v899
      %vm1005 = vcmp.eq.f32.partialorder %v1004, 8.507059e+37
      %v1006 = vand.u32 %v899, 2147483648
      %v1007 = vor.u32 1.1754944e-38, %v1006
      %v1008 = vsel %vm1005, %v1007, %v1003
      %v1009 = vmul.f32 1.0, %v1008
      %v1010 = vrcp.pop %v900
      %v1011 = vmul.f32 %v900, %v1010
      %v1012 = vsub.f32 1.0, %v1011
      %v1013 = vmul.f32 %v1010, %v1012
      %v1014 = vadd.f32 %v1010, %v1013
      %vm1015 = vweird.f32 %v900
      %vm1016 = vweird.f32 %v1010
      %vm1017 = vmor %vm1015, %vm1016
      %v1018 = vsel %vm1017, %v1010, %v1014
      %v1019 = vand.u32 2147483647, %v900
      %vm1020 = vcmp.eq.f32.partialorder %v1019, 8.507059e+37
      %v1021 = vand.u32 %v900, 2147483648
      %v1022 = vor.u32 1.1754944e-38, %v1021
      %v1023 = vsel %vm1020, %v1022, %v1018
      %v1024 = vmul.f32 1.0, %v1023
      %v1025 = vrcp.pop %v901
      %v1026 = vmul.f32 %v901, %v1025
      %v1027 = vsub.f32 1.0, %v1026
      %v1028 = vmul.f32 %v1025, %v1027
      %v1029 = vadd.f32 %v1025, %v1028
      %vm1030 = vweird.f32 %v901
      %vm1031 = vweird.f32 %v1025
      %vm1032 = vmor %vm1030, %vm1031
      %v1033 = vsel %vm1032, %v1025, %v1029
      %v1034 = vand.u32 2147483647, %v901
      %vm1035 = vcmp.eq.f32.partialorder %v1034, 8.507059e+37
      %v1036 = vand.u32 %v901, 2147483648
      %v1037 = vor.u32 1.1754944e-38, %v1036
      %v1038 = vsel %vm1035, %v1037, %v1033
      %v1039 = vmul.f32 1.0, %v1038
      %v1040 = vrcp.pop %v902
      %v1041 = vmul.f32 %v902, %v1040
      %v1042 = vsub.f32 1.0, %v1041
      %v1043 = vmul.f32 %v1040, %v1042
      %v1044 = vadd.f32 %v1040, %v1043
      %vm1045 = vweird.f32 %v902
      %vm1046 = vweird.f32 %v1040
      %vm1047 = vmor %vm1045, %vm1046
      %v1048 = vsel %vm1047, %v1040, %v1044
      %v1049 = vand.u32 2147483647, %v902
      %vm1050 = vcmp.eq.f32.partialorder %v1049, 8.507059e+37
      %v1051 = vand.u32 %v902, 2147483648
      %v1052 = vor.u32 1.1754944e-38, %v1051
      %v1053 = vsel %vm1050, %v1052, %v1048
      %v1054 = vmul.f32 1.0, %v1053
      %v1055 = vrcp.pop %v903
      %v1056 = vmul.f32 %v903, %v1055
      %v1057 = vsub.f32 1.0, %v1056
      %v1058 = vmul.f32 %v1055, %v1057
      %v1059 = vadd.f32 %v1055, %v1058
      %vm1060 = vweird.f32 %v903
      %vm1061 = vweird.f32 %v1055
      %vm1062 = vmor %vm1060, %vm1061
      %v1063 = vsel %vm1062, %v1055, %v1059
      %v1064 = vand.u32 2147483647, %v903
      %vm1065 = vcmp.eq.f32.partialorder %v1064, 8.507059e+37
      %v1066 = vand.u32 %v903, 2147483648
      %v1067 = vor.u32 1.1754944e-38, %v1066
      %v1068 = vsel %vm1065, %v1067, %v1063
      %v1069 = vmul.f32 1.0, %v1068
      %v1070 = vrcp.pop %v904
      %v1071 = vmul.f32 %v904, %v1070
      %v1072 = vsub.f32 1.0, %v1071
      %v1073 = vmul.f32 %v1070, %v1072
      %v1074 = vadd.f32 %v1070, %v1073
      %vm1075 = vweird.f32 %v904
      %vm1076 = vweird.f32 %v1070
      %vm1077 = vmor %vm1075, %vm1076
      %v1078 = vsel %vm1077, %v1070, %v1074
      %v1079 = vand.u32 2147483647, %v904
      %vm1080 = vcmp.eq.f32.partialorder %v1079, 8.507059e+37
      %v1081 = vand.u32 %v904, 2147483648
      %v1082 = vor.u32 1.1754944e-38, %v1081
      %v1083 = vsel %vm1080, %v1082, %v1078
      %v1084 = vmul.f32 1.0, %v1083
      %v1085 = vmul.f32 %v783, %v919
      %v1086 = vmul.f32 %v801, %v934
      %v1087 = vmul.f32 %v819, %v949
      %v1088 = vmul.f32 %v837, %v964
      %v1089 = vmul.f32 %v785, %v979
      %v1090 = vmul.f32 %v803, %v994
      %v1091 = vmul.f32 %v821, %v1009
      %v1092 = vmul.f32 %v839, %v1024
      %v1093 = vmul.f32 %v788, %v1039
      %v1094 = vmul.f32 %v806, %v1054
      %v1095 = vmul.f32 %v824, %v1069
      %v1096 = vmul.f32 %v842, %v1084
      %v1097 = vpack.c.bf16 %v1086, %v1085
      %v1098 = vpack.c.bf16 %v1088, %v1087
      %v1099 = vpack.c.bf16 %v1090, %v1089
      %v1100 = vpack.c.bf16 %v1092, %v1091
      %v1101 = vpack.c.bf16 %v1094, %v1093
      %v1102 = vpack.c.bf16 %v1096, %v1095
      %1103 = vst [vmem:[%s372] sm:$0xff] %v1097
      %1104 = vst [vmem:[%s372 + $0x8] sm:$0xff] %v1098
      %1105 = vst [vmem:[%s372 + $0x10] sm:$0xff] %v1099
      %1106 = vst [vmem:[%s372 + $0x18] sm:$0xff] %v1100
      %1107 = vst [vmem:[%s372 + $0x20] sm:$0xff] %v1101
      %1108 = vst [vmem:[%s372 + $0x28] sm:$0xff] %v1102
      %s1109 = smul.u32 3, %s21
      %p1110 = scmp.lt.s32.totalorder %s1109, 5
      %s1111 = scalar_select %p1110, %s1109, 5
      %s1112 = smul.addr %s1111, 4
      %s1113 = scalar_lea.vmem %s8, %s1112
      %s1114 = smul.u32 3, %s21
      %p1115 = scmp.lt.s32.totalorder %s1114, 5
      %s1116 = scalar_select %p1115, %s1114, 5
      %s1117 = smul.addr %s1116, 4
      %s1118 = smul.addr %s1117, 4
      %s1119 = scalar_lea.vmem %s9, %s1118
      // Predicated region
      $region53: #{clip_vit_forward.15} parent=51 // pred_check
        %p1120 = pneg %p217
      $region54: #{clip_vit_forward.15} parent=51 // pred_check_branch
        %1122 = sbr.rel (%p1120) target = $region56
      $region55: #{clip_vit_forward.15} parent=51 // pred_region
        %s1123 = smul.u32 3, %s21
      $region56: #{clip_vit_forward.15} parent=51 // pred_fallthru
        _
      // Predicated region
      $region57: #{clip_vit_forward.15} parent=51 // pred_check
        %p1124 = pneg %p243
      $region58: #{clip_vit_forward.15} parent=51 // pred_check_branch
        %1126 = sbr.rel (%p1124) target = $region60
      $region59: #{clip_vit_forward.15} parent=51 // pred_region
        %s1127 = smul.u32 3, %s21
      $region60: #{clip_vit_forward.15} parent=51 // pred_fallthru
        _
    $region52: #{clip_vit_forward.15} parent=5 // pred_fallthru
      _
    %p1128 = scmp.le.s32.totalorder 2, %s16
    // Predicated region
    $region61: #{clip_vit_forward.15} parent=5 // pred_check
      %p1129 = pneg %p1128
    $region62: #{clip_vit_forward.15} parent=5 // pred_check_branch
      %1131 = sbr.rel (%p1129) target = $region64
    $region63: #{clip_vit_forward.15} parent=5 // pred_region
      %s1132 = ssub.s32 %s16, 2
      // Predicated region
      $region65: #{clip_vit_forward.15} parent=63 // pred_check
        %p1133 = pneg %p223
      $region66: #{clip_vit_forward.15} parent=63 // pred_check_branch
        %1135 = sbr.rel (%p1133) target = $region68
      $region67: #{clip_vit_forward.15} parent=63 // pred_region
        %s1136 = smul.u32 3, %s22
        %p1137 = scmp.lt.s32.totalorder %s1136, 5
        %s1138 = scalar_select %p1137, %s1136, 5
        %s1139 = smul.addr %s1138, 4
        %s1140 = scalar_lea.vmem %s8, %s1139
      $region68: #{clip_vit_forward.15} parent=63 // pred_fallthru
        _
      // Predicated region
      $region69: #{clip_vit_forward.15} parent=63 // pred_check
        %p1141 = pneg %p249
      $region70: #{clip_vit_forward.15} parent=63 // pred_check_branch
        %1143 = sbr.rel (%p1141) target = $region72
      $region71: #{clip_vit_forward.15} parent=63 // pred_region
        %s1144 = smul.u32 3, %s22
        %p1145 = scmp.lt.s32.totalorder %s1144, 5
        %s1146 = scalar_select %p1145, %s1144, 5
        %s1147 = smul.addr %s1146, 4
        %s1148 = smul.addr %s1147, 4
        %s1149 = scalar_lea.vmem %s9, %s1148
      $region72: #{clip_vit_forward.15} parent=63 // pred_fallthru
        _
    $region64: #{clip_vit_forward.15} parent=5 // pred_fallthru
      _
  $region6: #{clip_vit_forward.15} parent=0 // loop_footer
    %s20 = sadd.s32 1, %s16
  $region7: #{clip_vit_forward.15} parent=0 // loop_footer_branch
    %15 = sbr.rel target = $region3
  $region8: #{clip_vit_forward.15} parent=0 // loop_exit
    _

// kernel: clip_vit_forward.21
$region0: #{clip_vit_forward.21}
  #allocation0 [shape = 'u32[]', space=smem, size = 0x4, offset = 0x4, fixed_abs, tag = 'smem constant byte address 0x4 - core index']
  #allocation1 [shape = 'u32[72,128]{1,0:T(1,128)}', space=vmem, size = 0x9000, scoped, tag = 'internal scratch']
  %s0 = inlined_call_operand.vmem [shape: bf16[2,128], index: 0, kind: input, shape index: {}]
  %s1 = inlined_call_operand.vmem [shape: f32[1,128], index: 1, kind: input, shape index: {}]
  %s2 = inlined_call_operand.vmem [shape: f32[1,128], index: 2, kind: input, shape index: {}]
  %s3 = inlined_call_operand.vmem [shape: f32[128,128], index: 3, kind: input, shape index: {}]
  %s4 = inlined_call_operand.vmem [shape: f32[128,64], index: 4, kind: input, shape index: {}]
  %s5 = inlined_call_operand.vmem [shape: f32[1,64], index: 5, kind: input, shape index: {}]
  %s6 = inlined_call_operand.vmem [shape: f32[64,128], index: 6, kind: input, shape index: {}]
  %s7 = inlined_call_operand.hbm [shape: f32[2,128], index: 7, kind: output, shape index: {}]
  %s8 = sld [smem:[#allocation0]]
  $region38: #{clip_vit_forward.21} parent=0
    _
  %s10 = ssub.s32 1, %s8
  %s11 = scalar_select 0, %s10, %s8
  $region1: #{clip_vit_forward.21} parent=0
    #allocation2 [shape = 'u8[1024]{0}', space=vmem, size = 0x400, scoped, tag = 'output window, operand 0, single buffered']
    #allocation3 [shape = 's32[1]{0}', space=sflag, size = 0x4, scoped, tag = 'scoped memory for clip_vit_forward.21']
    %12 = vsyncpa [#allocation3], 0
    // Predicated region
    $region2: #{clip_vit_forward.21} parent=1 // pred_check
      _
    $region3: #{clip_vit_forward.21} parent=1 // pred_check_branch
      %14 = sbr.rel (0) target = $region5
    $region4: #{clip_vit_forward.21} parent=1 // pred_region
      _
    $region5: #{clip_vit_forward.21} parent=1 // pred_fallthru
      _
    // Predicated region
    $region6: #{clip_vit_forward.21} parent=1 // pred_check
      _
    $region7: #{clip_vit_forward.21} parent=1 // pred_check_branch
      %16 = sbr.rel (0) target = $region9
    $region8: #{clip_vit_forward.21} parent=1 // pred_region
      _
    $region9: #{clip_vit_forward.21} parent=1 // pred_fallthru
      _
    // Predicated region
    $region10: #{clip_vit_forward.21} parent=1 // pred_check
      _
    $region11: #{clip_vit_forward.21} parent=1 // pred_check_branch
      %18 = sbr.rel (0) target = $region13
    $region12: #{clip_vit_forward.21} parent=1 // pred_region
      _
    $region13: #{clip_vit_forward.21} parent=1 // pred_fallthru
      _
    // Predicated region
    $region14: #{clip_vit_forward.21} parent=1 // pred_check
      _
    $region15: #{clip_vit_forward.21} parent=1 // pred_check_branch
      %20 = sbr.rel (0) target = $region17
    $region16: #{clip_vit_forward.21} parent=1 // pred_region
      _
    $region17: #{clip_vit_forward.21} parent=1 // pred_fallthru
      _
    // Predicated region
    $region18: #{clip_vit_forward.21} parent=1 // pred_check
      _
    $region19: #{clip_vit_forward.21} parent=1 // pred_check_branch
      %22 = sbr.rel (0) target = $region21
    $region20: #{clip_vit_forward.21} parent=1 // pred_region
      _
    $region21: #{clip_vit_forward.21} parent=1 // pred_fallthru
      _
    // Predicated region
    $region22: #{clip_vit_forward.21} parent=1 // pred_check
      _
    $region23: #{clip_vit_forward.21} parent=1 // pred_check_branch
      %24 = sbr.rel (0) target = $region25
    $region24: #{clip_vit_forward.21} parent=1 // pred_region
      _
    $region25: #{clip_vit_forward.21} parent=1 // pred_fallthru
      _
    // Predicated region
    $region26: #{clip_vit_forward.21} parent=1 // pred_check
      _
    $region27: #{clip_vit_forward.21} parent=1 // pred_check_branch
      %26 = sbr.rel (0) target = $region29
    $region28: #{clip_vit_forward.21} parent=1 // pred_region
      _
    $region29: #{clip_vit_forward.21} parent=1 // pred_fallthru
      _
    %v27 = vld [vmem:[%s0] sm:$0x1]
    %v28 = vunpack.c.l.bf16 %v27
    %vm29 = vcmask 1041408
    %v30 = vsel %vm29, %v28, 0.0
    %31 = vadd.xlane.f32.xlu0 %v30
    %v32 = vpop.xlane.xlu0 %31
    %v33 = vrcp.pop 128.0
    %v34 = vmul.f32 128.0, %v33
    %v35 = vsub.f32 1.0, %v34
    %v36 = vmul.f32 %v33, %v35
    %v37 = vadd.f32 %v33, %v36
    %vm38 = vweird.f32 %v33
    %v39 = vsel %vm38, %v33, %v37
    %v40 = vmul.f32 %v32, %v39
    %v41 = vsub.f32 %v28, %v40
    %v42 = vmul.f32 %v41, %v41
    %v43 = vsel %vm29, %v42, 0.0
    %44 = vadd.xlane.f32.xlu0 %v43
    %v45 = vpop.xlane.xlu0 %44
    %v46 = vmul.f32 %v45, %v39
    %v47 = vadd.f32 %v46, 1e-05
    %v48 = vrsqrt.pop %v47
    %v49 = vmul.f32 %v48, %v47
    %v50 = vmul.f32 %v49, %v48
    %v51 = vmul.f32 0.5, %v50
    %v52 = vsub.f32 1.5, %v51
    %v53 = vmul.f32 %v48, %v52
    %vm54 = vweird.f32 %v47
    %vm55 = vweird.f32 %v48
    %vm56 = vmor %vm54, %vm55
    %v57 = vsel %vm56, %v48, %v53
    %v58 = vmul.f32 %v41, %v57
    %v59 = vld [vmem:[%s1] sm:$0x1]
    %v61 = vperm.slane %v59, 0
    %v63 = vmul.f32 %v58, %v61
    %v64 = vld [vmem:[%s2] sm:$0x1]
    %v66 = vperm.slane %v64, 0
    %v68 = vadd.f32 %v63, %v66
    %v69 = vld [vmem:[%s3] sm:$0xff]
    %v70 = vld [vmem:[%s3 + $0x8] sm:$0xff]
    %v71 = vld [vmem:[%s3 + $0x10] sm:$0xff]
    %v72 = vld [vmem:[%s3 + $0x18] sm:$0xff]
    %v73 = vld [vmem:[%s3 + $0x20] sm:$0xff]
    %v74 = vld [vmem:[%s3 + $0x28] sm:$0xff]
    %v75 = vld [vmem:[%s3 + $0x30] sm:$0xff]
    %v76 = vld [vmem:[%s3 + $0x38] sm:$0xff]
    %v77 = vld [vmem:[%s3 + $0x40] sm:$0xff]
    %v78 = vld [vmem:[%s3 + $0x48] sm:$0xff]
    %v79 = vld [vmem:[%s3 + $0x50] sm:$0xff]
    %v80 = vld [vmem:[%s3 + $0x58] sm:$0xff]
    %v81 = vld [vmem:[%s3 + $0x60] sm:$0xff]
    %v82 = vld [vmem:[%s3 + $0x68] sm:$0xff]
    %v83 = vld [vmem:[%s3 + $0x70] sm:$0xff]
    %v84 = vld [vmem:[%s3 + $0x78] sm:$0xff]
    %85 = vmatpush.msra.mxu0 %v84
    %86 = vmatpush.msra.mxu0 %v83
    %87 = vmatpush.msra.mxu0 %v82
    %88 = vmatpush.msra.mxu0 %v81
    %89 = vmatpush.msra.mxu0 %v80
    %90 = vmatpush.msra.mxu0 %v79
    %91 = vmatpush.msra.mxu0 %v78
    %92 = vmatpush.msra.mxu0 %v77
    %93 = vmatpush.msra.mxu0 %v76
    %94 = vmatpush.msra.mxu0 %v75
    %95 = vmatpush.msra.mxu0 %v74
    %96 = vmatpush.msra.mxu0 %v73
    %97 = vmatpush.msra.mxu0 %v72
    %98 = vmatpush.msra.mxu0 %v71
    %99 = vmatpush.msra.mxu0 %v70
    %100 = vmatpush.msra.mxu0 %v69
    %101 = vmatmul.f32.gmra.mxu0 %v68
    %v102 = vpop.f32.mrf.mxu0
    %v103 = vadd.f32 0.0, %v102
    %104 = vdwg.mxu0
    %v105 = vld [vmem:[%s4] sm:$0xff]
    %v106 = vld [vmem:[%s4 + $0x8] sm:$0xff]
    %v107 = vld [vmem:[%s4 + $0x10] sm:$0xff]
    %v108 = vld [vmem:[%s4 + $0x18] sm:$0xff]
    %v109 = vld [vmem:[%s4 + $0x20] sm:$0xff]
    %v110 = vld [vmem:[%s4 + $0x28] sm:$0xff]
    %v111 = vld [vmem:[%s4 + $0x30] sm:$0xff]
    %v112 = vld [vmem:[%s4 + $0x38] sm:$0xff]
    %v113 = vld [vmem:[%s4 + $0x40] sm:$0xff]
    %v114 = vld [vmem:[%s4 + $0x48] sm:$0xff]
    %v115 = vld [vmem:[%s4 + $0x50] sm:$0xff]
    %v116 = vld [vmem:[%s4 + $0x58] sm:$0xff]
    %v117 = vld [vmem:[%s4 + $0x60] sm:$0xff]
    %v118 = vld [vmem:[%s4 + $0x68] sm:$0xff]
    %v119 = vld [vmem:[%s4 + $0x70] sm:$0xff]
    %v120 = vld [vmem:[%s4 + $0x78] sm:$0xff]
    %v121 = vld [vmem:[%s5] sm:$0x1]
    %v123 = vperm.slane %v121, 0
    %125 = vmatpush.msra.mxu0 %v120
    %126 = vmatpush.msra.mxu0 %v119
    %127 = vmatpush.msra.mxu0 %v118
    %128 = vmatpush.msra.mxu0 %v117
    %129 = vmatpush.msra.mxu0 %v116
    %130 = vmatpush.msra.mxu0 %v115
    %131 = vmatpush.msra.mxu0 %v114
    %132 = vmatpush.msra.mxu0 %v113
    %133 = vmatpush.msra.mxu0 %v112
    %134 = vmatpush.msra.mxu0 %v111
    %135 = vmatpush.msra.mxu0 %v110
    %136 = vmatpush.msra.mxu0 %v109
    %137 = vmatpush.msra.mxu0 %v108
    %138 = vmatpush.msra.mxu0 %v107
    %139 = vmatpush.msra.mxu0 %v106
    %140 = vmatpush.msra.mxu0 %v105
    %141 = vmatmul.f32.gmra.mxu0 %v103
    %v142 = vpop.f32.mrf.mxu0
    %v143 = vadd.f32 %v123, %v142
    %144 = vdwg.mxu0
    %v145 = vmul.f32 %v143, %v143
    %vm146 = vcmask 517120
    %v147 = vsel %vm146, %v145, 0.0
    %148 = vadd.xlane.f32.xlu0 %v147
    %v149 = vpop.xlane.xlu0 %148
    %v150 = vmax.f32 %v149, 1e-24
    %v151 = vrsqrt.pop %v150
    %v152 = vmul.f32 %v151, %v150
    %v153 = vmul.f32 %v152, %v151
    %v154 = vmul.f32 0.5, %v153
    %v155 = vsub.f32 1.5, %v154
    %v156 = vmul.f32 %v151, %v155
    %vm157 = vweird.f32 %v150
    %vm158 = vweird.f32 %v151
    %vm159 = vmor %vm157, %vm158
    %v160 = vsel %vm159, %v151, %v156
    %v161 = vmul.f32 %v143, %v160
    %v162 = vld [vmem:[%s6] sm:$0xff]
    %v163 = vld [vmem:[%s6 + $0x8] sm:$0xff]
    %v164 = vld [vmem:[%s6 + $0x10] sm:$0xff]
    %v165 = vld [vmem:[%s6 + $0x18] sm:$0xff]
    %v166 = vld [vmem:[%s6 + $0x20] sm:$0xff]
    %v167 = vld [vmem:[%s6 + $0x28] sm:$0xff]
    %v168 = vld [vmem:[%s6 + $0x30] sm:$0xff]
    %v169 = vld [vmem:[%s6 + $0x38] sm:$0xff]
    %vm170 = vcmask 523264
    %v172 = vsel %vm170, %v161, 0
    %174 = vmatpush.msra.mxu0 0.0
    %175 = vmatpush.msra.mxu0 0.0
    %176 = vmatpush.msra.mxu0 0.0
    %177 = vmatpush.msra.mxu0 0.0
    %178 = vmatpush.msra.mxu0 0.0
    %179 = vmatpush.msra.mxu0 0.0
    %180 = vmatpush.msra.mxu0 0.0
    %181 = vmatpush.msra.mxu0 0.0
    %182 = vmatpush.msra.mxu0 %v169
    %183 = vmatpush.msra.mxu0 %v168
    %184 = vmatpush.msra.mxu0 %v167
    %185 = vmatpush.msra.mxu0 %v166
    %186 = vmatpush.msra.mxu0 %v165
    %187 = vmatpush.msra.mxu0 %v164
    %188 = vmatpush.msra.mxu0 %v163
    %189 = vmatpush.msra.mxu0 %v162
    %190 = vmatmul.f32.gmra.mxu0 %v172
    %v191 = vpop.f32.mrf.mxu0
    %v192 = vadd.f32 0.0, %v191
    %193 = vdwg.mxu0
    %194 = vst [vmem:[#allocation2] sm:$0x3] %v192
    // Predicated region
    $region30: #{clip_vit_forward.21} parent=1 // pred_check
      _
    $region31: #{clip_vit_forward.21} parent=1 // pred_check_branch
      %196 = sbr.rel (0) target = $region33
    $region32: #{clip_vit_forward.21} parent=1 // pred_region
      %198 = vsyncadd [#allocation3], 0
      %s200 = sshll.u32 [#allocation2], 4
      %s201 = int_to_ptr.vmem [resolvable:$true] %s200
      %s202 = sshll.u32 %s7, 4
      %s203 = int_to_ptr.hbm [resolvable:$true] %s202
      %205 = dma.vmem_to_hbm [thread:$0]  %s201, 32, %s203, [#allocation3]
    $region33: #{clip_vit_forward.21} parent=1 // pred_fallthru
      _
    // Predicated region
    $region34: #{clip_vit_forward.21} parent=1 // pred_check
      _
    $region35: #{clip_vit_forward.21} parent=1 // pred_check_branch
      %207 = sbr.rel (0) target = $region37
    $region36: #{clip_vit_forward.21} parent=1 // pred_region
      %209 = dma.done [#allocation3], 32
    $region37: #{clip_vit_forward.21} parent=1 // pred_fallthru
      _
    %210 = vsyncpa [#allocation3], 1

</llo_original>
